<compile_context>
chip_gen: v7x
topology: tpu7x:2x2x1
jax: 0.10.0
libtpu: 0.0.40
codegen_flags: <defaults>
</compile_context>

<pallas_src>
import functools

import numpy as np
import jax
import jax.numpy as jnp
from jax import lax
from jax.experimental import pallas as pl
from jax.experimental.pallas import tpu as pltpu


def _pick_batch_block(batch):
    """Largest divisor of `batch` that is <= 8, preferring >= 2 grid steps (v7x)."""
    divisors = [d for d in range(1, min(batch, 8) + 1) if batch % d == 0]
    two_step = [d for d in divisors if batch // d >= 2]
    return max(two_step) if two_step else max(divisors)


# ----------------------------------------------------------------------------
# Fused kernel: FPS + kNN grouping (one batch block per grid step)
# ----------------------------------------------------------------------------
def _make_group_kernel(num_group, group_size):
    G, M = num_group, group_size

    def kernel(x_ref, c_ref, nb_ref):
        # x_ref : (Bb, 3, N)     point clouds (batch block)
        # c_ref : (Bb, 3, G)     FPS centers, lane-dense on G
        # nb_ref: (Bb, 3, G, M)  re-centered neighbors (coordinate planes)
        Bb = x_ref.shape[0]
        N = x_ref.shape[2]

        # Hoisted per-coordinate planes: (Bb, N) -> batch on sublanes, points on lanes.
        x0 = x_ref[:, 0, :].astype(jnp.float32)
        x1 = x_ref[:, 1, :].astype(jnp.float32)
        x2 = x_ref[:, 2, :].astype(jnp.float32)

        # Small loop-invariant iotas (broadcast inside compares; never (G,N)-sized).
        niota = lax.broadcasted_iota(jnp.int32, (1, N), 1)        # (1, N)
        niota3 = lax.broadcasted_iota(jnp.int32, (1, 1, N), 2)    # (1, 1, N)
        giota = lax.broadcasted_iota(jnp.int32, (1, G), 1)        # (1, G)
        miota = lax.broadcasted_iota(jnp.int32, (1, 1, M), 2)     # (1, 1, M)
        n_i32 = jnp.int32(N)

        # ---------------- furthest point sampling (batched over Bb) ----------------
        l0 = x0[:, 0:1]                                           # (Bb, 1) start @ idx 0
        l1 = x1[:, 0:1]
        l2 = x2[:, 0:1]
        zero_g = jnp.zeros((Bb, G), jnp.float32)
        c0 = jnp.where(giota == 0, l0, zero_g)                    # (Bb, G)
        c1 = jnp.where(giota == 0, l1, zero_g)
        c2 = jnp.where(giota == 0, l2, zero_g)
        dist0 = jnp.full((Bb, N), 1e10, dtype=jnp.float32)

        def fps_body(g, carry):
            dist, l0, l1, l2, c0, c1, c2 = carry
            d0 = x0 - l0
            d1 = x1 - l1
            d2 = x2 - l2
            dist = jnp.minimum(dist, d0 * d0 + d1 * d1 + d2 * d2)     # (Bb, N)
            # argmax with lowest-index tie-break
            maxv = jnp.max(dist, axis=1, keepdims=True)               # (Bb, 1)
            idx = jnp.min(jnp.where(dist >= maxv, niota, n_i32),
                          axis=1, keepdims=True)                      # (Bb, 1)
            sel = niota == idx                                        # (Bb, N)
            # gather the selected point: mask-select + lane reduce (no MXU round-trip)
            l0 = jnp.sum(jnp.where(sel, x0, 0.0), axis=1, keepdims=True)
            l1 = jnp.sum(jnp.where(sel, x1, 0.0), axis=1, keepdims=True)
            l2 = jnp.sum(jnp.where(sel, x2, 0.0), axis=1, keepdims=True)
            gm = giota == g
            c0 = jnp.where(gm, l0, c0)
            c1 = jnp.where(gm, l1, c1)
            c2 = jnp.where(gm, l2, c2)
            return dist, l0, l1, l2, c0, c1, c2

        fps_unroll = True if G <= 32 else 4
        _, _, _, _, c0, c1, c2 = lax.fori_loop(
            1, G, fps_body, (dist0, l0, l1, l2, c0, c1, c2), unroll=fps_unroll)

        # lane-dense center writeback (once per grid step, G on lanes)
        c_ref[:, 0, :] = c0.astype(c_ref.dtype)
        c_ref[:, 1, :] = c1.astype(c_ref.dtype)
        c_ref[:, 2, :] = c2.astype(c_ref.dtype)

        # ------------------------- kNN grouping (batched) -------------------------
        x0b = x0[:, None, :]                                       # (Bb, 1, N)
        x1b = x1[:, None, :]
        x2b = x2[:, None, :]
        c0g = c0[:, :, None]                                       # (Bb, G, 1)
        c1g = c1[:, :, None]
        c2g = c2[:, :, None]
        e0 = x0b - c0g
        e1 = x1b - c1g
        e2 = x2b - c2g
        dist = e0 * e0 + e1 * e1 + e2 * e2                         # (Bb, G, N)
        BIG = jnp.float32(3e38)
        nb0 = jnp.zeros((Bb, G, M), jnp.float32)
        nb1 = jnp.zeros((Bb, G, M), jnp.float32)
        nb2 = jnp.zeros((Bb, G, M), jnp.float32)

        def knn_body(m, carry):
            dist, nb0, nb1, nb2 = carry
            # per-row argmin with lowest-index tie-break
            minv = jnp.min(dist, axis=2, keepdims=True)              # (Bb, G, 1)
            idx = jnp.min(jnp.where(dist <= minv, niota3, n_i32),
                          axis=2, keepdims=True)                     # (Bb, G, 1)
            onehot = niota3 == idx                                   # (Bb, G, N)
            # gather + re-center: mask-select + lane reduce (exact f32, no MXU)
            s0 = jnp.sum(jnp.where(onehot, x0b, 0.0), axis=2, keepdims=True) - c0g
            s1 = jnp.sum(jnp.where(onehot, x1b, 0.0), axis=2, keepdims=True) - c1g
            s2 = jnp.sum(jnp.where(onehot, x2b, 0.0), axis=2, keepdims=True) - c2g
            # accumulate into register/VMEM-resident planes (no in-loop stores)
            rm = miota == m                                          # (1, 1, M)
            nb0 = jnp.where(rm, s0, nb0)                             # (Bb, G, M)
            nb1 = jnp.where(rm, s1, nb1)
            nb2 = jnp.where(rm, s2, nb2)
            # knock the selected column out of the running (reuse onehot)
            dist = jnp.where(onehot, BIG, dist)
            return dist, nb0, nb1, nb2

        knn_unroll = True if M <= 16 else 2
        _, nb0, nb1, nb2 = lax.fori_loop(
            0, M, knn_body, (dist, nb0, nb1, nb2), unroll=knn_unroll)

        # single bulk writeback per grid step
        nb_ref[:, 0, :, :] = nb0.astype(nb_ref.dtype)
        nb_ref[:, 1, :, :] = nb1.astype(nb_ref.dtype)
        nb_ref[:, 2, :, :] = nb2.astype(nb_ref.dtype)

    return kernel


# ----------------------------------------------------------------------------
# Wrapper (layout plumbing + pallas_call)
# ----------------------------------------------------------------------------
@functools.partial(jax.jit, static_argnames=("num_group", "group_size"))
def group_forward(xyz, num_group, group_size):
    """xyz: (B, N, 3) -> (neighborhood (B, G, M, 3), center (B, G, 3)), float32."""
    B, N, _ = xyz.shape
    G, M = num_group, group_size
    Bb = _pick_batch_block(B)

    xT = jnp.transpose(xyz.astype(jnp.float32), (0, 2, 1))        # (B, 3, N)
    kernel = _make_group_kernel(G, M)

    center_t, nb_t = pl.pallas_call(
        kernel,
        out_shape=(
            jax.ShapeDtypeStruct((B, 3, G), jnp.float32),          # centers (G on lanes)
            jax.ShapeDtypeStruct((B, 3, G, M), jnp.float32),       # neighbors (coord planes)
        ),
        grid_spec=pltpu.PrefetchScalarGridSpec(
            num_scalar_prefetch=0,
            grid=(B // Bb,),
            in_specs=[pl.BlockSpec((Bb, 3, N), lambda b: (b, 0, 0))],
            out_specs=(
                pl.BlockSpec((Bb, 3, G), lambda b: (b, 0, 0)),
                pl.BlockSpec((Bb, 3, G, M), lambda b: (b, 0, 0, 0)),
            ),
        ),
        compiler_params=pltpu.CompilerParams(
            dimension_semantics=("parallel",)),
    )(xT)

    center = jnp.transpose(center_t, (0, 2, 1))                    # (B, G, 3)
    neighborhood = jnp.transpose(nb_t, (0, 2, 3, 1))               # (B, G, M, 3)
    return neighborhood, center


# ----------------------------------------------------------------------------
# Pure-JAX reference (mirrors the PyTorch module's semantics)
# ----------------------------------------------------------------------------
def group_forward_ref(xyz, num_group, group_size):
    xyz = xyz.astype(jnp.float32)
    B, N, _ = xyz.shape
    G, M = num_group, group_size

    def fps_one(pts):  # pts: (N, 3)
        def body(g, carry):
            dist, last, sel = carry
            d = jnp.sum((pts - last) ** 2, axis=-1)
            dist = jnp.minimum(dist, d)
            idx = jnp.argmax(dist)
            last = pts[idx]
            sel = sel.at[g].set(last)
            return dist, last, sel

        sel0 = jnp.zeros((G, 3), jnp.float32).at[0].set(pts[0])
        dist0 = jnp.full((N,), 1e10, jnp.float32)
        _, _, sel = lax.fori_loop(1, G, body, (dist0, pts[0], sel0))
        return sel

    centers = jax.vmap(fps_one)(xyz)                                      # (B, G, 3)
    d = jnp.sum((centers[:, :, None, :] - xyz[:, None, :, :]) ** 2, -1)   # (B, G, N)
    idx = jnp.argsort(d, axis=-1)[:, :, :M]                               # (B, G, M)
    nb = jnp.take_along_axis(
        jnp.broadcast_to(xyz[:, None, :, :], (B, G, N, 3)), idx[..., None], axis=2
    )                                                                     # (B, G, M, 3)
    nb = nb - centers[:, :, None, :]
    return nb, centers


if __name__ == "__main__":
    B, N = 2, 128
    NUM_GROUP, GROUP_SIZE = 8, 16

    key = jax.random.PRNGKey(0)
    xyz = jax.random.normal(key, (B, N, 3), dtype=jnp.float32)

    neighborhood, center = group_forward(xyz, NUM_GROUP, GROUP_SIZE)
    jax.block_until_ready((neighborhood, center))

    nb_ref, c_ref = group_forward_ref(xyz, NUM_GROUP, GROUP_SIZE)
    assert neighborhood.shape == (B, NUM_GROUP, GROUP_SIZE, 3)
    assert center.shape == (B, NUM_GROUP, 3)
    np.testing.assert_allclose(np.asarray(center), np.asarray(c_ref), atol=1e-5)
    np.testing.assert_allclose(np.asarray(neighborhood), np.asarray(nb_ref), atol=1e-5)

    print("KERNEL_OK")
</pallas_src>

<mosaic_0001>
module attributes {stable_mosaic.version = 11 : i64} {
  func.func @kernel(%arg0: i32, %arg1: memref<1x3x128xf32, #tpu.memory_space<vmem>>, %arg2: memref<1x3x8xf32, #tpu.memory_space<vmem>>, %arg3: memref<1x3x8x16xf32, #tpu.memory_space<vmem>>) attributes {dimension_semantics = [#tpu.dimension_semantics<parallel>], iteration_bounds = array<i64: 2>, scalar_prefetch = 0 : i64, scratch_operands = 0 : i64, tpu.core_type = #tpu.core_type<tc>, window_params = [{transform_indices = @transform_0, window_bounds = array<i64: 1, 3, 128>}, {transform_indices = @transform_1, window_bounds = array<i64: 1, 3, 8>}, {transform_indices = @transform_2, window_bounds = array<i64: 1, 3, 8, 16>}]} {
    %c0 = arith.constant 0 : index
    %c0_0 = arith.constant 0 : index
    %c0_1 = arith.constant 0 : index
    %0 = vector.load %arg1[%c0, %c0_0, %c0_1] : memref<1x3x128xf32, #tpu.memory_space<vmem>>, vector<1x1x128xf32>
    %1 = vector.shape_cast %0 : vector<1x1x128xf32> to vector<1x128xf32>
    %c0_2 = arith.constant 0 : index
    %c1 = arith.constant 1 : index
    %c0_3 = arith.constant 0 : index
    %2 = vector.load %arg1[%c0_2, %c1, %c0_3] : memref<1x3x128xf32, #tpu.memory_space<vmem>>, vector<1x1x128xf32>
    %3 = vector.shape_cast %2 : vector<1x1x128xf32> to vector<1x128xf32>
    %c0_4 = arith.constant 0 : index
    %c2 = arith.constant 2 : index
    %c0_5 = arith.constant 0 : index
    %4 = vector.load %arg1[%c0_4, %c2, %c0_5] : memref<1x3x128xf32, #tpu.memory_space<vmem>>, vector<1x1x128xf32>
    %5 = vector.shape_cast %4 : vector<1x1x128xf32> to vector<1x128xf32>
    %6 = tpu.iota {dimensions = array<i32: 1>} : vector<1x128xi32>
    %7 = tpu.iota {dimensions = array<i32: 2>} : vector<1x1x128xi32>
    %8 = tpu.iota {dimensions = array<i32: 1>} : vector<1x8xi32>
    %9 = tpu.iota {dimensions = array<i32: 2>} : vector<1x1x16xi32>
    %10 = vector.extract_strided_slice %1 {offsets = [0, 0], sizes = [1, 1], strides = [1, 1]} : vector<1x128xf32> to vector<1x1xf32>
    %11 = vector.extract_strided_slice %3 {offsets = [0, 0], sizes = [1, 1], strides = [1, 1]} : vector<1x128xf32> to vector<1x1xf32>
    %12 = vector.extract_strided_slice %5 {offsets = [0, 0], sizes = [1, 1], strides = [1, 1]} : vector<1x128xf32> to vector<1x1xf32>
    %cst = arith.constant 0.000000e+00 : f32
    %13 = vector.broadcast %cst : f32 to vector<1x8xf32>
    %c0_i32 = arith.constant 0 : i32
    %14 = vector.broadcast %c0_i32 : i32 to vector<1x8xi32>
    %15 = arith.cmpi eq, %8, %14 : vector<1x8xi32>
    %16 = vector.shape_cast %10 : vector<1x1xf32> to vector<1x1xf32>
    %17 = vector.broadcast %16 : vector<1x1xf32> to vector<1x8xf32>
    %18 = arith.select %15, %17, %13 : vector<1x8xi1>, vector<1x8xf32>
    %c0_i32_6 = arith.constant 0 : i32
    %19 = vector.broadcast %c0_i32_6 : i32 to vector<1x8xi32>
    %20 = arith.cmpi eq, %8, %19 : vector<1x8xi32>
    %21 = vector.shape_cast %11 : vector<1x1xf32> to vector<1x1xf32>
    %22 = vector.broadcast %21 : vector<1x1xf32> to vector<1x8xf32>
    %23 = arith.select %20, %22, %13 : vector<1x8xi1>, vector<1x8xf32>
    %c0_i32_7 = arith.constant 0 : i32
    %24 = vector.broadcast %c0_i32_7 : i32 to vector<1x8xi32>
    %25 = arith.cmpi eq, %8, %24 : vector<1x8xi32>
    %26 = vector.shape_cast %12 : vector<1x1xf32> to vector<1x1xf32>
    %27 = vector.broadcast %26 : vector<1x1xf32> to vector<1x8xf32>
    %28 = arith.select %25, %27, %13 : vector<1x8xi1>, vector<1x8xf32>
    %cst_8 = arith.constant 1.000000e+10 : f32
    %29 = vector.broadcast %cst_8 : f32 to vector<1x128xf32>
    %c128_i32 = arith.constant 128 : i32
    %c1_i32 = arith.constant 1 : i32
    %30 = vector.broadcast %10 : vector<1x1xf32> to vector<1x128xf32>
    %31 = arith.subf %1, %30 : vector<1x128xf32>
    %32 = vector.broadcast %11 : vector<1x1xf32> to vector<1x128xf32>
    %33 = arith.subf %3, %32 : vector<1x128xf32>
    %34 = vector.broadcast %12 : vector<1x1xf32> to vector<1x128xf32>
    %35 = arith.subf %5, %34 : vector<1x128xf32>
    %36 = arith.mulf %31, %31 : vector<1x128xf32>
    %37 = arith.mulf %33, %33 : vector<1x128xf32>
    %38 = arith.addf %36, %37 : vector<1x128xf32>
    %39 = arith.mulf %35, %35 : vector<1x128xf32>
    %40 = arith.addf %38, %39 : vector<1x128xf32>
    %41 = arith.minimumf %29, %40 : vector<1x128xf32>
    %cst_9 = arith.constant dense<0xFF800000> : vector<1xf32>
    %42 = vector.multi_reduction <maximumf>, %41, %cst_9 [1] : vector<1x128xf32> to vector<1xf32>
    %43 = vector.shape_cast %42 : vector<1xf32> to vector<1x1xf32>
    %44 = vector.broadcast %43 : vector<1x1xf32> to vector<1x128xf32>
    %45 = arith.cmpf oge, %41, %44 : vector<1x128xf32>
    %46 = vector.broadcast %c128_i32 : i32 to vector<1x128xi32>
    %47 = arith.select %45, %6, %46 : vector<1x128xi1>, vector<1x128xi32>
    %cst_10 = arith.constant dense<2147483647> : vector<1xi32>
    %48 = vector.multi_reduction <minsi>, %47, %cst_10 [1] : vector<1x128xi32> to vector<1xi32>
    %49 = vector.shape_cast %48 : vector<1xi32> to vector<1x1xi32>
    %50 = vector.broadcast %49 : vector<1x1xi32> to vector<1x128xi32>
    %51 = arith.cmpi eq, %6, %50 : vector<1x128xi32>
    %cst_11 = arith.constant 0.000000e+00 : f32
    %52 = vector.broadcast %cst_11 : f32 to vector<1x128xf32>
    %53 = arith.select %51, %1, %52 : vector<1x128xi1>, vector<1x128xf32>
    %cst_12 = arith.constant dense<0.000000e+00> : vector<1xf32>
    %54 = vector.multi_reduction <add>, %53, %cst_12 [1] : vector<1x128xf32> to vector<1xf32>
    %55 = vector.shape_cast %54 : vector<1xf32> to vector<1x1xf32>
    %cst_13 = arith.constant 0.000000e+00 : f32
    %56 = vector.broadcast %cst_13 : f32 to vector<1x128xf32>
    %57 = arith.select %51, %3, %56 : vector<1x128xi1>, vector<1x128xf32>
    %cst_14 = arith.constant dense<0.000000e+00> : vector<1xf32>
    %58 = vector.multi_reduction <add>, %57, %cst_14 [1] : vector<1x128xf32> to vector<1xf32>
    %59 = vector.shape_cast %58 : vector<1xf32> to vector<1x1xf32>
    %cst_15 = arith.constant 0.000000e+00 : f32
    %60 = vector.broadcast %cst_15 : f32 to vector<1x128xf32>
    %61 = arith.select %51, %5, %60 : vector<1x128xi1>, vector<1x128xf32>
    %cst_16 = arith.constant dense<0.000000e+00> : vector<1xf32>
    %62 = vector.multi_reduction <add>, %61, %cst_16 [1] : vector<1x128xf32> to vector<1xf32>
    %63 = vector.shape_cast %62 : vector<1xf32> to vector<1x1xf32>
    %64 = vector.broadcast %c1_i32 : i32 to vector<1x8xi32>
    %65 = arith.cmpi eq, %8, %64 : vector<1x8xi32>
    %66 = vector.shape_cast %55 : vector<1x1xf32> to vector<1x1xf32>
    %67 = vector.broadcast %66 : vector<1x1xf32> to vector<1x8xf32>
    %68 = arith.select %65, %67, %18 : vector<1x8xi1>, vector<1x8xf32>
    %69 = vector.shape_cast %59 : vector<1x1xf32> to vector<1x1xf32>
    %70 = vector.broadcast %69 : vector<1x1xf32> to vector<1x8xf32>
    %71 = arith.select %65, %70, %23 : vector<1x8xi1>, vector<1x8xf32>
    %72 = vector.shape_cast %63 : vector<1x1xf32> to vector<1x1xf32>
    %73 = vector.broadcast %72 : vector<1x1xf32> to vector<1x8xf32>
    %74 = arith.select %65, %73, %28 : vector<1x8xi1>, vector<1x8xf32>
    %c2_i32 = arith.constant 2 : i32
    %75 = vector.broadcast %55 : vector<1x1xf32> to vector<1x128xf32>
    %76 = arith.subf %1, %75 : vector<1x128xf32>
    %77 = vector.broadcast %59 : vector<1x1xf32> to vector<1x128xf32>
    %78 = arith.subf %3, %77 : vector<1x128xf32>
    %79 = vector.broadcast %63 : vector<1x1xf32> to vector<1x128xf32>
    %80 = arith.subf %5, %79 : vector<1x128xf32>
    %81 = arith.mulf %76, %76 : vector<1x128xf32>
    %82 = arith.mulf %78, %78 : vector<1x128xf32>
    %83 = arith.addf %81, %82 : vector<1x128xf32>
    %84 = arith.mulf %80, %80 : vector<1x128xf32>
    %85 = arith.addf %83, %84 : vector<1x128xf32>
    %86 = arith.minimumf %41, %85 : vector<1x128xf32>
    %cst_17 = arith.constant dense<0xFF800000> : vector<1xf32>
    %87 = vector.multi_reduction <maximumf>, %86, %cst_17 [1] : vector<1x128xf32> to vector<1xf32>
    %88 = vector.shape_cast %87 : vector<1xf32> to vector<1x1xf32>
    %89 = vector.broadcast %88 : vector<1x1xf32> to vector<1x128xf32>
    %90 = arith.cmpf oge, %86, %89 : vector<1x128xf32>
    %91 = vector.broadcast %c128_i32 : i32 to vector<1x128xi32>
    %92 = arith.select %90, %6, %91 : vector<1x128xi1>, vector<1x128xi32>
    %cst_18 = arith.constant dense<2147483647> : vector<1xi32>
    %93 = vector.multi_reduction <minsi>, %92, %cst_18 [1] : vector<1x128xi32> to vector<1xi32>
    %94 = vector.shape_cast %93 : vector<1xi32> to vector<1x1xi32>
    %95 = vector.broadcast %94 : vector<1x1xi32> to vector<1x128xi32>
    %96 = arith.cmpi eq, %6, %95 : vector<1x128xi32>
    %cst_19 = arith.constant 0.000000e+00 : f32
    %97 = vector.broadcast %cst_19 : f32 to vector<1x128xf32>
    %98 = arith.select %96, %1, %97 : vector<1x128xi1>, vector<1x128xf32>
    %cst_20 = arith.constant dense<0.000000e+00> : vector<1xf32>
    %99 = vector.multi_reduction <add>, %98, %cst_20 [1] : vector<1x128xf32> to vector<1xf32>
    %100 = vector.shape_cast %99 : vector<1xf32> to vector<1x1xf32>
    %cst_21 = arith.constant 0.000000e+00 : f32
    %101 = vector.broadcast %cst_21 : f32 to vector<1x128xf32>
    %102 = arith.select %96, %3, %101 : vector<1x128xi1>, vector<1x128xf32>
    %cst_22 = arith.constant dense<0.000000e+00> : vector<1xf32>
    %103 = vector.multi_reduction <add>, %102, %cst_22 [1] : vector<1x128xf32> to vector<1xf32>
    %104 = vector.shape_cast %103 : vector<1xf32> to vector<1x1xf32>
    %cst_23 = arith.constant 0.000000e+00 : f32
    %105 = vector.broadcast %cst_23 : f32 to vector<1x128xf32>
    %106 = arith.select %96, %5, %105 : vector<1x128xi1>, vector<1x128xf32>
    %cst_24 = arith.constant dense<0.000000e+00> : vector<1xf32>
    %107 = vector.multi_reduction <add>, %106, %cst_24 [1] : vector<1x128xf32> to vector<1xf32>
    %108 = vector.shape_cast %107 : vector<1xf32> to vector<1x1xf32>
    %109 = vector.broadcast %c2_i32 : i32 to vector<1x8xi32>
    %110 = arith.cmpi eq, %8, %109 : vector<1x8xi32>
    %111 = vector.shape_cast %100 : vector<1x1xf32> to vector<1x1xf32>
    %112 = vector.broadcast %111 : vector<1x1xf32> to vector<1x8xf32>
    %113 = arith.select %110, %112, %68 : vector<1x8xi1>, vector<1x8xf32>
    %114 = vector.shape_cast %104 : vector<1x1xf32> to vector<1x1xf32>
    %115 = vector.broadcast %114 : vector<1x1xf32> to vector<1x8xf32>
    %116 = arith.select %110, %115, %71 : vector<1x8xi1>, vector<1x8xf32>
    %117 = vector.shape_cast %108 : vector<1x1xf32> to vector<1x1xf32>
    %118 = vector.broadcast %117 : vector<1x1xf32> to vector<1x8xf32>
    %119 = arith.select %110, %118, %74 : vector<1x8xi1>, vector<1x8xf32>
    %c3_i32 = arith.constant 3 : i32
    %120 = vector.broadcast %100 : vector<1x1xf32> to vector<1x128xf32>
    %121 = arith.subf %1, %120 : vector<1x128xf32>
    %122 = vector.broadcast %104 : vector<1x1xf32> to vector<1x128xf32>
    %123 = arith.subf %3, %122 : vector<1x128xf32>
    %124 = vector.broadcast %108 : vector<1x1xf32> to vector<1x128xf32>
    %125 = arith.subf %5, %124 : vector<1x128xf32>
    %126 = arith.mulf %121, %121 : vector<1x128xf32>
    %127 = arith.mulf %123, %123 : vector<1x128xf32>
    %128 = arith.addf %126, %127 : vector<1x128xf32>
    %129 = arith.mulf %125, %125 : vector<1x128xf32>
    %130 = arith.addf %128, %129 : vector<1x128xf32>
    %131 = arith.minimumf %86, %130 : vector<1x128xf32>
    %cst_25 = arith.constant dense<0xFF800000> : vector<1xf32>
    %132 = vector.multi_reduction <maximumf>, %131, %cst_25 [1] : vector<1x128xf32> to vector<1xf32>
    %133 = vector.shape_cast %132 : vector<1xf32> to vector<1x1xf32>
    %134 = vector.broadcast %133 : vector<1x1xf32> to vector<1x128xf32>
    %135 = arith.cmpf oge, %131, %134 : vector<1x128xf32>
    %136 = vector.broadcast %c128_i32 : i32 to vector<1x128xi32>
    %137 = arith.select %135, %6, %136 : vector<1x128xi1>, vector<1x128xi32>
    %cst_26 = arith.constant dense<2147483647> : vector<1xi32>
    %138 = vector.multi_reduction <minsi>, %137, %cst_26 [1] : vector<1x128xi32> to vector<1xi32>
    %139 = vector.shape_cast %138 : vector<1xi32> to vector<1x1xi32>
    %140 = vector.broadcast %139 : vector<1x1xi32> to vector<1x128xi32>
    %141 = arith.cmpi eq, %6, %140 : vector<1x128xi32>
    %cst_27 = arith.constant 0.000000e+00 : f32
    %142 = vector.broadcast %cst_27 : f32 to vector<1x128xf32>
    %143 = arith.select %141, %1, %142 : vector<1x128xi1>, vector<1x128xf32>
    %cst_28 = arith.constant dense<0.000000e+00> : vector<1xf32>
    %144 = vector.multi_reduction <add>, %143, %cst_28 [1] : vector<1x128xf32> to vector<1xf32>
    %145 = vector.shape_cast %144 : vector<1xf32> to vector<1x1xf32>
    %cst_29 = arith.constant 0.000000e+00 : f32
    %146 = vector.broadcast %cst_29 : f32 to vector<1x128xf32>
    %147 = arith.select %141, %3, %146 : vector<1x128xi1>, vector<1x128xf32>
    %cst_30 = arith.constant dense<0.000000e+00> : vector<1xf32>
    %148 = vector.multi_reduction <add>, %147, %cst_30 [1] : vector<1x128xf32> to vector<1xf32>
    %149 = vector.shape_cast %148 : vector<1xf32> to vector<1x1xf32>
    %cst_31 = arith.constant 0.000000e+00 : f32
    %150 = vector.broadcast %cst_31 : f32 to vector<1x128xf32>
    %151 = arith.select %141, %5, %150 : vector<1x128xi1>, vector<1x128xf32>
    %cst_32 = arith.constant dense<0.000000e+00> : vector<1xf32>
    %152 = vector.multi_reduction <add>, %151, %cst_32 [1] : vector<1x128xf32> to vector<1xf32>
    %153 = vector.shape_cast %152 : vector<1xf32> to vector<1x1xf32>
    %154 = vector.broadcast %c3_i32 : i32 to vector<1x8xi32>
    %155 = arith.cmpi eq, %8, %154 : vector<1x8xi32>
    %156 = vector.shape_cast %145 : vector<1x1xf32> to vector<1x1xf32>
    %157 = vector.broadcast %156 : vector<1x1xf32> to vector<1x8xf32>
    %158 = arith.select %155, %157, %113 : vector<1x8xi1>, vector<1x8xf32>
    %159 = vector.shape_cast %149 : vector<1x1xf32> to vector<1x1xf32>
    %160 = vector.broadcast %159 : vector<1x1xf32> to vector<1x8xf32>
    %161 = arith.select %155, %160, %116 : vector<1x8xi1>, vector<1x8xf32>
    %162 = vector.shape_cast %153 : vector<1x1xf32> to vector<1x1xf32>
    %163 = vector.broadcast %162 : vector<1x1xf32> to vector<1x8xf32>
    %164 = arith.select %155, %163, %119 : vector<1x8xi1>, vector<1x8xf32>
    %c4_i32 = arith.constant 4 : i32
    %165 = vector.broadcast %145 : vector<1x1xf32> to vector<1x128xf32>
    %166 = arith.subf %1, %165 : vector<1x128xf32>
    %167 = vector.broadcast %149 : vector<1x1xf32> to vector<1x128xf32>
    %168 = arith.subf %3, %167 : vector<1x128xf32>
    %169 = vector.broadcast %153 : vector<1x1xf32> to vector<1x128xf32>
    %170 = arith.subf %5, %169 : vector<1x128xf32>
    %171 = arith.mulf %166, %166 : vector<1x128xf32>
    %172 = arith.mulf %168, %168 : vector<1x128xf32>
    %173 = arith.addf %171, %172 : vector<1x128xf32>
    %174 = arith.mulf %170, %170 : vector<1x128xf32>
    %175 = arith.addf %173, %174 : vector<1x128xf32>
    %176 = arith.minimumf %131, %175 : vector<1x128xf32>
    %cst_33 = arith.constant dense<0xFF800000> : vector<1xf32>
    %177 = vector.multi_reduction <maximumf>, %176, %cst_33 [1] : vector<1x128xf32> to vector<1xf32>
    %178 = vector.shape_cast %177 : vector<1xf32> to vector<1x1xf32>
    %179 = vector.broadcast %178 : vector<1x1xf32> to vector<1x128xf32>
    %180 = arith.cmpf oge, %176, %179 : vector<1x128xf32>
    %181 = vector.broadcast %c128_i32 : i32 to vector<1x128xi32>
    %182 = arith.select %180, %6, %181 : vector<1x128xi1>, vector<1x128xi32>
    %cst_34 = arith.constant dense<2147483647> : vector<1xi32>
    %183 = vector.multi_reduction <minsi>, %182, %cst_34 [1] : vector<1x128xi32> to vector<1xi32>
    %184 = vector.shape_cast %183 : vector<1xi32> to vector<1x1xi32>
    %185 = vector.broadcast %184 : vector<1x1xi32> to vector<1x128xi32>
    %186 = arith.cmpi eq, %6, %185 : vector<1x128xi32>
    %cst_35 = arith.constant 0.000000e+00 : f32
    %187 = vector.broadcast %cst_35 : f32 to vector<1x128xf32>
    %188 = arith.select %186, %1, %187 : vector<1x128xi1>, vector<1x128xf32>
    %cst_36 = arith.constant dense<0.000000e+00> : vector<1xf32>
    %189 = vector.multi_reduction <add>, %188, %cst_36 [1] : vector<1x128xf32> to vector<1xf32>
    %190 = vector.shape_cast %189 : vector<1xf32> to vector<1x1xf32>
    %cst_37 = arith.constant 0.000000e+00 : f32
    %191 = vector.broadcast %cst_37 : f32 to vector<1x128xf32>
    %192 = arith.select %186, %3, %191 : vector<1x128xi1>, vector<1x128xf32>
    %cst_38 = arith.constant dense<0.000000e+00> : vector<1xf32>
    %193 = vector.multi_reduction <add>, %192, %cst_38 [1] : vector<1x128xf32> to vector<1xf32>
    %194 = vector.shape_cast %193 : vector<1xf32> to vector<1x1xf32>
    %cst_39 = arith.constant 0.000000e+00 : f32
    %195 = vector.broadcast %cst_39 : f32 to vector<1x128xf32>
    %196 = arith.select %186, %5, %195 : vector<1x128xi1>, vector<1x128xf32>
    %cst_40 = arith.constant dense<0.000000e+00> : vector<1xf32>
    %197 = vector.multi_reduction <add>, %196, %cst_40 [1] : vector<1x128xf32> to vector<1xf32>
    %198 = vector.shape_cast %197 : vector<1xf32> to vector<1x1xf32>
    %199 = vector.broadcast %c4_i32 : i32 to vector<1x8xi32>
    %200 = arith.cmpi eq, %8, %199 : vector<1x8xi32>
    %201 = vector.shape_cast %190 : vector<1x1xf32> to vector<1x1xf32>
    %202 = vector.broadcast %201 : vector<1x1xf32> to vector<1x8xf32>
    %203 = arith.select %200, %202, %158 : vector<1x8xi1>, vector<1x8xf32>
    %204 = vector.shape_cast %194 : vector<1x1xf32> to vector<1x1xf32>
    %205 = vector.broadcast %204 : vector<1x1xf32> to vector<1x8xf32>
    %206 = arith.select %200, %205, %161 : vector<1x8xi1>, vector<1x8xf32>
    %207 = vector.shape_cast %198 : vector<1x1xf32> to vector<1x1xf32>
    %208 = vector.broadcast %207 : vector<1x1xf32> to vector<1x8xf32>
    %209 = arith.select %200, %208, %164 : vector<1x8xi1>, vector<1x8xf32>
    %c5_i32 = arith.constant 5 : i32
    %210 = vector.broadcast %190 : vector<1x1xf32> to vector<1x128xf32>
    %211 = arith.subf %1, %210 : vector<1x128xf32>
    %212 = vector.broadcast %194 : vector<1x1xf32> to vector<1x128xf32>
    %213 = arith.subf %3, %212 : vector<1x128xf32>
    %214 = vector.broadcast %198 : vector<1x1xf32> to vector<1x128xf32>
    %215 = arith.subf %5, %214 : vector<1x128xf32>
    %216 = arith.mulf %211, %211 : vector<1x128xf32>
    %217 = arith.mulf %213, %213 : vector<1x128xf32>
    %218 = arith.addf %216, %217 : vector<1x128xf32>
    %219 = arith.mulf %215, %215 : vector<1x128xf32>
    %220 = arith.addf %218, %219 : vector<1x128xf32>
    %221 = arith.minimumf %176, %220 : vector<1x128xf32>
    %cst_41 = arith.constant dense<0xFF800000> : vector<1xf32>
    %222 = vector.multi_reduction <maximumf>, %221, %cst_41 [1] : vector<1x128xf32> to vector<1xf32>
    %223 = vector.shape_cast %222 : vector<1xf32> to vector<1x1xf32>
    %224 = vector.broadcast %223 : vector<1x1xf32> to vector<1x128xf32>
    %225 = arith.cmpf oge, %221, %224 : vector<1x128xf32>
    %226 = vector.broadcast %c128_i32 : i32 to vector<1x128xi32>
    %227 = arith.select %225, %6, %226 : vector<1x128xi1>, vector<1x128xi32>
    %cst_42 = arith.constant dense<2147483647> : vector<1xi32>
    %228 = vector.multi_reduction <minsi>, %227, %cst_42 [1] : vector<1x128xi32> to vector<1xi32>
    %229 = vector.shape_cast %228 : vector<1xi32> to vector<1x1xi32>
    %230 = vector.broadcast %229 : vector<1x1xi32> to vector<1x128xi32>
    %231 = arith.cmpi eq, %6, %230 : vector<1x128xi32>
    %cst_43 = arith.constant 0.000000e+00 : f32
    %232 = vector.broadcast %cst_43 : f32 to vector<1x128xf32>
    %233 = arith.select %231, %1, %232 : vector<1x128xi1>, vector<1x128xf32>
    %cst_44 = arith.constant dense<0.000000e+00> : vector<1xf32>
    %234 = vector.multi_reduction <add>, %233, %cst_44 [1] : vector<1x128xf32> to vector<1xf32>
    %235 = vector.shape_cast %234 : vector<1xf32> to vector<1x1xf32>
    %cst_45 = arith.constant 0.000000e+00 : f32
    %236 = vector.broadcast %cst_45 : f32 to vector<1x128xf32>
    %237 = arith.select %231, %3, %236 : vector<1x128xi1>, vector<1x128xf32>
    %cst_46 = arith.constant dense<0.000000e+00> : vector<1xf32>
    %238 = vector.multi_reduction <add>, %237, %cst_46 [1] : vector<1x128xf32> to vector<1xf32>
    %239 = vector.shape_cast %238 : vector<1xf32> to vector<1x1xf32>
    %cst_47 = arith.constant 0.000000e+00 : f32
    %240 = vector.broadcast %cst_47 : f32 to vector<1x128xf32>
    %241 = arith.select %231, %5, %240 : vector<1x128xi1>, vector<1x128xf32>
    %cst_48 = arith.constant dense<0.000000e+00> : vector<1xf32>
    %242 = vector.multi_reduction <add>, %241, %cst_48 [1] : vector<1x128xf32> to vector<1xf32>
    %243 = vector.shape_cast %242 : vector<1xf32> to vector<1x1xf32>
    %244 = vector.broadcast %c5_i32 : i32 to vector<1x8xi32>
    %245 = arith.cmpi eq, %8, %244 : vector<1x8xi32>
    %246 = vector.shape_cast %235 : vector<1x1xf32> to vector<1x1xf32>
    %247 = vector.broadcast %246 : vector<1x1xf32> to vector<1x8xf32>
    %248 = arith.select %245, %247, %203 : vector<1x8xi1>, vector<1x8xf32>
    %249 = vector.shape_cast %239 : vector<1x1xf32> to vector<1x1xf32>
    %250 = vector.broadcast %249 : vector<1x1xf32> to vector<1x8xf32>
    %251 = arith.select %245, %250, %206 : vector<1x8xi1>, vector<1x8xf32>
    %252 = vector.shape_cast %243 : vector<1x1xf32> to vector<1x1xf32>
    %253 = vector.broadcast %252 : vector<1x1xf32> to vector<1x8xf32>
    %254 = arith.select %245, %253, %209 : vector<1x8xi1>, vector<1x8xf32>
    %c6_i32 = arith.constant 6 : i32
    %255 = vector.broadcast %235 : vector<1x1xf32> to vector<1x128xf32>
    %256 = arith.subf %1, %255 : vector<1x128xf32>
    %257 = vector.broadcast %239 : vector<1x1xf32> to vector<1x128xf32>
    %258 = arith.subf %3, %257 : vector<1x128xf32>
    %259 = vector.broadcast %243 : vector<1x1xf32> to vector<1x128xf32>
    %260 = arith.subf %5, %259 : vector<1x128xf32>
    %261 = arith.mulf %256, %256 : vector<1x128xf32>
    %262 = arith.mulf %258, %258 : vector<1x128xf32>
    %263 = arith.addf %261, %262 : vector<1x128xf32>
    %264 = arith.mulf %260, %260 : vector<1x128xf32>
    %265 = arith.addf %263, %264 : vector<1x128xf32>
    %266 = arith.minimumf %221, %265 : vector<1x128xf32>
    %cst_49 = arith.constant dense<0xFF800000> : vector<1xf32>
    %267 = vector.multi_reduction <maximumf>, %266, %cst_49 [1] : vector<1x128xf32> to vector<1xf32>
    %268 = vector.shape_cast %267 : vector<1xf32> to vector<1x1xf32>
    %269 = vector.broadcast %268 : vector<1x1xf32> to vector<1x128xf32>
    %270 = arith.cmpf oge, %266, %269 : vector<1x128xf32>
    %271 = vector.broadcast %c128_i32 : i32 to vector<1x128xi32>
    %272 = arith.select %270, %6, %271 : vector<1x128xi1>, vector<1x128xi32>
    %cst_50 = arith.constant dense<2147483647> : vector<1xi32>
    %273 = vector.multi_reduction <minsi>, %272, %cst_50 [1] : vector<1x128xi32> to vector<1xi32>
    %274 = vector.shape_cast %273 : vector<1xi32> to vector<1x1xi32>
    %275 = vector.broadcast %274 : vector<1x1xi32> to vector<1x128xi32>
    %276 = arith.cmpi eq, %6, %275 : vector<1x128xi32>
    %cst_51 = arith.constant 0.000000e+00 : f32
    %277 = vector.broadcast %cst_51 : f32 to vector<1x128xf32>
    %278 = arith.select %276, %1, %277 : vector<1x128xi1>, vector<1x128xf32>
    %cst_52 = arith.constant dense<0.000000e+00> : vector<1xf32>
    %279 = vector.multi_reduction <add>, %278, %cst_52 [1] : vector<1x128xf32> to vector<1xf32>
    %280 = vector.shape_cast %279 : vector<1xf32> to vector<1x1xf32>
    %cst_53 = arith.constant 0.000000e+00 : f32
    %281 = vector.broadcast %cst_53 : f32 to vector<1x128xf32>
    %282 = arith.select %276, %3, %281 : vector<1x128xi1>, vector<1x128xf32>
    %cst_54 = arith.constant dense<0.000000e+00> : vector<1xf32>
    %283 = vector.multi_reduction <add>, %282, %cst_54 [1] : vector<1x128xf32> to vector<1xf32>
    %284 = vector.shape_cast %283 : vector<1xf32> to vector<1x1xf32>
    %cst_55 = arith.constant 0.000000e+00 : f32
    %285 = vector.broadcast %cst_55 : f32 to vector<1x128xf32>
    %286 = arith.select %276, %5, %285 : vector<1x128xi1>, vector<1x128xf32>
    %cst_56 = arith.constant dense<0.000000e+00> : vector<1xf32>
    %287 = vector.multi_reduction <add>, %286, %cst_56 [1] : vector<1x128xf32> to vector<1xf32>
    %288 = vector.shape_cast %287 : vector<1xf32> to vector<1x1xf32>
    %289 = vector.broadcast %c6_i32 : i32 to vector<1x8xi32>
    %290 = arith.cmpi eq, %8, %289 : vector<1x8xi32>
    %291 = vector.shape_cast %280 : vector<1x1xf32> to vector<1x1xf32>
    %292 = vector.broadcast %291 : vector<1x1xf32> to vector<1x8xf32>
    %293 = arith.select %290, %292, %248 : vector<1x8xi1>, vector<1x8xf32>
    %294 = vector.shape_cast %284 : vector<1x1xf32> to vector<1x1xf32>
    %295 = vector.broadcast %294 : vector<1x1xf32> to vector<1x8xf32>
    %296 = arith.select %290, %295, %251 : vector<1x8xi1>, vector<1x8xf32>
    %297 = vector.shape_cast %288 : vector<1x1xf32> to vector<1x1xf32>
    %298 = vector.broadcast %297 : vector<1x1xf32> to vector<1x8xf32>
    %299 = arith.select %290, %298, %254 : vector<1x8xi1>, vector<1x8xf32>
    %c7_i32 = arith.constant 7 : i32
    %300 = vector.broadcast %280 : vector<1x1xf32> to vector<1x128xf32>
    %301 = arith.subf %1, %300 : vector<1x128xf32>
    %302 = vector.broadcast %284 : vector<1x1xf32> to vector<1x128xf32>
    %303 = arith.subf %3, %302 : vector<1x128xf32>
    %304 = vector.broadcast %288 : vector<1x1xf32> to vector<1x128xf32>
    %305 = arith.subf %5, %304 : vector<1x128xf32>
    %306 = arith.mulf %301, %301 : vector<1x128xf32>
    %307 = arith.mulf %303, %303 : vector<1x128xf32>
    %308 = arith.addf %306, %307 : vector<1x128xf32>
    %309 = arith.mulf %305, %305 : vector<1x128xf32>
    %310 = arith.addf %308, %309 : vector<1x128xf32>
    %311 = arith.minimumf %266, %310 : vector<1x128xf32>
    %cst_57 = arith.constant dense<0xFF800000> : vector<1xf32>
    %312 = vector.multi_reduction <maximumf>, %311, %cst_57 [1] : vector<1x128xf32> to vector<1xf32>
    %313 = vector.shape_cast %312 : vector<1xf32> to vector<1x1xf32>
    %314 = vector.broadcast %313 : vector<1x1xf32> to vector<1x128xf32>
    %315 = arith.cmpf oge, %311, %314 : vector<1x128xf32>
    %316 = vector.broadcast %c128_i32 : i32 to vector<1x128xi32>
    %317 = arith.select %315, %6, %316 : vector<1x128xi1>, vector<1x128xi32>
    %cst_58 = arith.constant dense<2147483647> : vector<1xi32>
    %318 = vector.multi_reduction <minsi>, %317, %cst_58 [1] : vector<1x128xi32> to vector<1xi32>
    %319 = vector.shape_cast %318 : vector<1xi32> to vector<1x1xi32>
    %320 = vector.broadcast %319 : vector<1x1xi32> to vector<1x128xi32>
    %321 = arith.cmpi eq, %6, %320 : vector<1x128xi32>
    %cst_59 = arith.constant 0.000000e+00 : f32
    %322 = vector.broadcast %cst_59 : f32 to vector<1x128xf32>
    %323 = arith.select %321, %1, %322 : vector<1x128xi1>, vector<1x128xf32>
    %cst_60 = arith.constant dense<0.000000e+00> : vector<1xf32>
    %324 = vector.multi_reduction <add>, %323, %cst_60 [1] : vector<1x128xf32> to vector<1xf32>
    %325 = vector.shape_cast %324 : vector<1xf32> to vector<1x1xf32>
    %cst_61 = arith.constant 0.000000e+00 : f32
    %326 = vector.broadcast %cst_61 : f32 to vector<1x128xf32>
    %327 = arith.select %321, %3, %326 : vector<1x128xi1>, vector<1x128xf32>
    %cst_62 = arith.constant dense<0.000000e+00> : vector<1xf32>
    %328 = vector.multi_reduction <add>, %327, %cst_62 [1] : vector<1x128xf32> to vector<1xf32>
    %329 = vector.shape_cast %328 : vector<1xf32> to vector<1x1xf32>
    %cst_63 = arith.constant 0.000000e+00 : f32
    %330 = vector.broadcast %cst_63 : f32 to vector<1x128xf32>
    %331 = arith.select %321, %5, %330 : vector<1x128xi1>, vector<1x128xf32>
    %cst_64 = arith.constant dense<0.000000e+00> : vector<1xf32>
    %332 = vector.multi_reduction <add>, %331, %cst_64 [1] : vector<1x128xf32> to vector<1xf32>
    %333 = vector.shape_cast %332 : vector<1xf32> to vector<1x1xf32>
    %334 = vector.broadcast %c7_i32 : i32 to vector<1x8xi32>
    %335 = arith.cmpi eq, %8, %334 : vector<1x8xi32>
    %336 = vector.shape_cast %325 : vector<1x1xf32> to vector<1x1xf32>
    %337 = vector.broadcast %336 : vector<1x1xf32> to vector<1x8xf32>
    %338 = arith.select %335, %337, %293 : vector<1x8xi1>, vector<1x8xf32>
    %339 = vector.shape_cast %329 : vector<1x1xf32> to vector<1x1xf32>
    %340 = vector.broadcast %339 : vector<1x1xf32> to vector<1x8xf32>
    %341 = arith.select %335, %340, %296 : vector<1x8xi1>, vector<1x8xf32>
    %342 = vector.shape_cast %333 : vector<1x1xf32> to vector<1x1xf32>
    %343 = vector.broadcast %342 : vector<1x1xf32> to vector<1x8xf32>
    %344 = arith.select %335, %343, %299 : vector<1x8xi1>, vector<1x8xf32>
    %c7_i32_65 = arith.constant 7 : i32
    %c0_66 = arith.constant 0 : index
    %c0_67 = arith.constant 0 : index
    %c0_68 = arith.constant 0 : index
    %345 = vector.load %arg2[%c0_66, %c0_67, %c0_68] : memref<1x3x8xf32, #tpu.memory_space<vmem>>, vector<1x1x8xf32>
    %346 = vector.shape_cast %345 : vector<1x1x8xf32> to vector<1x8xf32>
    %347 = vector.shape_cast %338 : vector<1x8xf32> to vector<1x1x8xf32>
    tpu.vector_store %arg2[%c0_66, %c0_67, %c0_68], %347 {strides = array<i32>} : memref<1x3x8xf32, #tpu.memory_space<vmem>>, vector<1x1x8xf32>,
    %c0_69 = arith.constant 0 : index
    %c1_70 = arith.constant 1 : index
    %c0_71 = arith.constant 0 : index
    %348 = vector.load %arg2[%c0_69, %c1_70, %c0_71] : memref<1x3x8xf32, #tpu.memory_space<vmem>>, vector<1x1x8xf32>
    %349 = vector.shape_cast %348 : vector<1x1x8xf32> to vector<1x8xf32>
    %350 = vector.shape_cast %341 : vector<1x8xf32> to vector<1x1x8xf32>
    tpu.vector_store %arg2[%c0_69, %c1_70, %c0_71], %350 {strides = array<i32>} : memref<1x3x8xf32, #tpu.memory_space<vmem>>, vector<1x1x8xf32>,
    %c0_72 = arith.constant 0 : index
    %c2_73 = arith.constant 2 : index
    %c0_74 = arith.constant 0 : index
    %351 = vector.load %arg2[%c0_72, %c2_73, %c0_74] : memref<1x3x8xf32, #tpu.memory_space<vmem>>, vector<1x1x8xf32>
    %352 = vector.shape_cast %351 : vector<1x1x8xf32> to vector<1x8xf32>
    %353 = vector.shape_cast %344 : vector<1x8xf32> to vector<1x1x8xf32>
    tpu.vector_store %arg2[%c0_72, %c2_73, %c0_74], %353 {strides = array<i32>} : memref<1x3x8xf32, #tpu.memory_space<vmem>>, vector<1x1x8xf32>,
    %354 = vector.shape_cast %1 : vector<1x128xf32> to vector<1x1x128xf32>
    %355 = vector.shape_cast %3 : vector<1x128xf32> to vector<1x1x128xf32>
    %356 = vector.shape_cast %5 : vector<1x128xf32> to vector<1x1x128xf32>
    %357 = vector.shape_cast %338 : vector<1x8xf32> to vector<1x8x1xf32>
    %358 = vector.shape_cast %341 : vector<1x8xf32> to vector<1x8x1xf32>
    %359 = vector.shape_cast %344 : vector<1x8xf32> to vector<1x8x1xf32>
    %360 = vector.broadcast %354 : vector<1x1x128xf32> to vector<1x8x128xf32>
    %361 = vector.broadcast %357 : vector<1x8x1xf32> to vector<1x8x128xf32>
    %362 = arith.subf %360, %361 : vector<1x8x128xf32>
    %363 = vector.broadcast %355 : vector<1x1x128xf32> to vector<1x8x128xf32>
    %364 = vector.broadcast %358 : vector<1x8x1xf32> to vector<1x8x128xf32>
    %365 = arith.subf %363, %364 : vector<1x8x128xf32>
    %366 = vector.broadcast %356 : vector<1x1x128xf32> to vector<1x8x128xf32>
    %367 = vector.broadcast %359 : vector<1x8x1xf32> to vector<1x8x128xf32>
    %368 = arith.subf %366, %367 : vector<1x8x128xf32>
    %369 = arith.mulf %362, %362 : vector<1x8x128xf32>
    %370 = arith.mulf %365, %365 : vector<1x8x128xf32>
    %371 = arith.addf %369, %370 : vector<1x8x128xf32>
    %372 = arith.mulf %368, %368 : vector<1x8x128xf32>
    %373 = arith.addf %371, %372 : vector<1x8x128xf32>
    %cst_75 = arith.constant 0.000000e+00 : f32
    %374 = vector.broadcast %cst_75 : f32 to vector<1x8x16xf32>
    %cst_76 = arith.constant 0.000000e+00 : f32
    %375 = vector.broadcast %cst_76 : f32 to vector<1x8x16xf32>
    %cst_77 = arith.constant 0.000000e+00 : f32
    %376 = vector.broadcast %cst_77 : f32 to vector<1x8x16xf32>
    %c128_i32_78 = arith.constant 128 : i32
    %cst_79 = arith.constant 3.000000e+38 : f32
    %c0_i32_80 = arith.constant 0 : i32
    %cst_81 = arith.constant dense<0x7F800000> : vector<1x8xf32>
    %377 = vector.multi_reduction <minimumf>, %373, %cst_81 [2] : vector<1x8x128xf32> to vector<1x8xf32>
    %378 = vector.shape_cast %377 : vector<1x8xf32> to vector<1x8x1xf32>
    %379 = vector.broadcast %378 : vector<1x8x1xf32> to vector<1x8x128xf32>
    %380 = arith.cmpf ole, %373, %379 : vector<1x8x128xf32>
    %381 = vector.shape_cast %7 : vector<1x1x128xi32> to vector<1x1x128xi32>
    %382 = vector.broadcast %381 : vector<1x1x128xi32> to vector<1x8x128xi32>
    %383 = vector.broadcast %c128_i32_78 : i32 to vector<1x8x128xi32>
    %384 = arith.select %380, %382, %383 : vector<1x8x128xi1>, vector<1x8x128xi32>
    %cst_82 = arith.constant dense<2147483647> : vector<1x8xi32>
    %385 = vector.multi_reduction <minsi>, %384, %cst_82 [2] : vector<1x8x128xi32> to vector<1x8xi32>
    %386 = vector.shape_cast %385 : vector<1x8xi32> to vector<1x8x1xi32>
    %387 = vector.broadcast %7 : vector<1x1x128xi32> to vector<1x8x128xi32>
    %388 = vector.broadcast %386 : vector<1x8x1xi32> to vector<1x8x128xi32>
    %389 = arith.cmpi eq, %387, %388 : vector<1x8x128xi32>
    %cst_83 = arith.constant 0.000000e+00 : f32
    %390 = vector.shape_cast %354 : vector<1x1x128xf32> to vector<1x1x128xf32>
    %391 = vector.broadcast %390 : vector<1x1x128xf32> to vector<1x8x128xf32>
    %392 = vector.broadcast %cst_83 : f32 to vector<1x8x128xf32>
    %393 = arith.select %389, %391, %392 : vector<1x8x128xi1>, vector<1x8x128xf32>
    %cst_84 = arith.constant dense<0.000000e+00> : vector<1x8xf32>
    %394 = vector.multi_reduction <add>, %393, %cst_84 [2] : vector<1x8x128xf32> to vector<1x8xf32>
    %395 = vector.shape_cast %394 : vector<1x8xf32> to vector<1x8x1xf32>
    %396 = arith.subf %395, %357 : vector<1x8x1xf32>
    %cst_85 = arith.constant 0.000000e+00 : f32
    %397 = vector.shape_cast %355 : vector<1x1x128xf32> to vector<1x1x128xf32>
    %398 = vector.broadcast %397 : vector<1x1x128xf32> to vector<1x8x128xf32>
    %399 = vector.broadcast %cst_85 : f32 to vector<1x8x128xf32>
    %400 = arith.select %389, %398, %399 : vector<1x8x128xi1>, vector<1x8x128xf32>
    %cst_86 = arith.constant dense<0.000000e+00> : vector<1x8xf32>
    %401 = vector.multi_reduction <add>, %400, %cst_86 [2] : vector<1x8x128xf32> to vector<1x8xf32>
    %402 = vector.shape_cast %401 : vector<1x8xf32> to vector<1x8x1xf32>
    %403 = arith.subf %402, %358 : vector<1x8x1xf32>
    %cst_87 = arith.constant 0.000000e+00 : f32
    %404 = vector.shape_cast %356 : vector<1x1x128xf32> to vector<1x1x128xf32>
    %405 = vector.broadcast %404 : vector<1x1x128xf32> to vector<1x8x128xf32>
    %406 = vector.broadcast %cst_87 : f32 to vector<1x8x128xf32>
    %407 = arith.select %389, %405, %406 : vector<1x8x128xi1>, vector<1x8x128xf32>
    %cst_88 = arith.constant dense<0.000000e+00> : vector<1x8xf32>
    %408 = vector.multi_reduction <add>, %407, %cst_88 [2] : vector<1x8x128xf32> to vector<1x8xf32>
    %409 = vector.shape_cast %408 : vector<1x8xf32> to vector<1x8x1xf32>
    %410 = arith.subf %409, %359 : vector<1x8x1xf32>
    %411 = vector.broadcast %c0_i32_80 : i32 to vector<1x1x16xi32>
    %412 = arith.cmpi eq, %9, %411 : vector<1x1x16xi32>
    %413 = vector.shape_cast %412 : vector<1x1x16xi1> to vector<1x1x16xi1>
    %414 = vector.broadcast %413 : vector<1x1x16xi1> to vector<1x8x16xi1>
    %415 = vector.shape_cast %396 : vector<1x8x1xf32> to vector<1x8x1xf32>
    %416 = vector.broadcast %415 : vector<1x8x1xf32> to vector<1x8x16xf32>
    %417 = arith.select %414, %416, %374 : vector<1x8x16xi1>, vector<1x8x16xf32>
    %418 = vector.shape_cast %412 : vector<1x1x16xi1> to vector<1x1x16xi1>
    %419 = vector.broadcast %418 : vector<1x1x16xi1> to vector<1x8x16xi1>
    %420 = vector.shape_cast %403 : vector<1x8x1xf32> to vector<1x8x1xf32>
    %421 = vector.broadcast %420 : vector<1x8x1xf32> to vector<1x8x16xf32>
    %422 = arith.select %419, %421, %375 : vector<1x8x16xi1>, vector<1x8x16xf32>
    %423 = vector.shape_cast %412 : vector<1x1x16xi1> to vector<1x1x16xi1>
    %424 = vector.broadcast %423 : vector<1x1x16xi1> to vector<1x8x16xi1>
    %425 = vector.shape_cast %410 : vector<1x8x1xf32> to vector<1x8x1xf32>
    %426 = vector.broadcast %425 : vector<1x8x1xf32> to vector<1x8x16xf32>
    %427 = arith.select %424, %426, %376 : vector<1x8x16xi1>, vector<1x8x16xf32>
    %428 = vector.broadcast %cst_79 : f32 to vector<1x8x128xf32>
    %429 = arith.select %389, %428, %373 : vector<1x8x128xi1>, vector<1x8x128xf32>
    %c1_i32_89 = arith.constant 1 : i32
    %cst_90 = arith.constant dense<0x7F800000> : vector<1x8xf32>
    %430 = vector.multi_reduction <minimumf>, %429, %cst_90 [2] : vector<1x8x128xf32> to vector<1x8xf32>
    %431 = vector.shape_cast %430 : vector<1x8xf32> to vector<1x8x1xf32>
    %432 = vector.broadcast %431 : vector<1x8x1xf32> to vector<1x8x128xf32>
    %433 = arith.cmpf ole, %429, %432 : vector<1x8x128xf32>
    %434 = vector.shape_cast %7 : vector<1x1x128xi32> to vector<1x1x128xi32>
    %435 = vector.broadcast %434 : vector<1x1x128xi32> to vector<1x8x128xi32>
    %436 = vector.broadcast %c128_i32_78 : i32 to vector<1x8x128xi32>
    %437 = arith.select %433, %435, %436 : vector<1x8x128xi1>, vector<1x8x128xi32>
    %cst_91 = arith.constant dense<2147483647> : vector<1x8xi32>
    %438 = vector.multi_reduction <minsi>, %437, %cst_91 [2] : vector<1x8x128xi32> to vector<1x8xi32>
    %439 = vector.shape_cast %438 : vector<1x8xi32> to vector<1x8x1xi32>
    %440 = vector.broadcast %7 : vector<1x1x128xi32> to vector<1x8x128xi32>
    %441 = vector.broadcast %439 : vector<1x8x1xi32> to vector<1x8x128xi32>
    %442 = arith.cmpi eq, %440, %441 : vector<1x8x128xi32>
    %cst_92 = arith.constant 0.000000e+00 : f32
    %443 = vector.shape_cast %354 : vector<1x1x128xf32> to vector<1x1x128xf32>
    %444 = vector.broadcast %443 : vector<1x1x128xf32> to vector<1x8x128xf32>
    %445 = vector.broadcast %cst_92 : f32 to vector<1x8x128xf32>
    %446 = arith.select %442, %444, %445 : vector<1x8x128xi1>, vector<1x8x128xf32>
    %cst_93 = arith.constant dense<0.000000e+00> : vector<1x8xf32>
    %447 = vector.multi_reduction <add>, %446, %cst_93 [2] : vector<1x8x128xf32> to vector<1x8xf32>
    %448 = vector.shape_cast %447 : vector<1x8xf32> to vector<1x8x1xf32>
    %449 = arith.subf %448, %357 : vector<1x8x1xf32>
    %cst_94 = arith.constant 0.000000e+00 : f32
    %450 = vector.shape_cast %355 : vector<1x1x128xf32> to vector<1x1x128xf32>
    %451 = vector.broadcast %450 : vector<1x1x128xf32> to vector<1x8x128xf32>
    %452 = vector.broadcast %cst_94 : f32 to vector<1x8x128xf32>
    %453 = arith.select %442, %451, %452 : vector<1x8x128xi1>, vector<1x8x128xf32>
    %cst_95 = arith.constant dense<0.000000e+00> : vector<1x8xf32>
    %454 = vector.multi_reduction <add>, %453, %cst_95 [2] : vector<1x8x128xf32> to vector<1x8xf32>
    %455 = vector.shape_cast %454 : vector<1x8xf32> to vector<1x8x1xf32>
    %456 = arith.subf %455, %358 : vector<1x8x1xf32>
    %cst_96 = arith.constant 0.000000e+00 : f32
    %457 = vector.shape_cast %356 : vector<1x1x128xf32> to vector<1x1x128xf32>
    %458 = vector.broadcast %457 : vector<1x1x128xf32> to vector<1x8x128xf32>
    %459 = vector.broadcast %cst_96 : f32 to vector<1x8x128xf32>
    %460 = arith.select %442, %458, %459 : vector<1x8x128xi1>, vector<1x8x128xf32>
    %cst_97 = arith.constant dense<0.000000e+00> : vector<1x8xf32>
    %461 = vector.multi_reduction <add>, %460, %cst_97 [2] : vector<1x8x128xf32> to vector<1x8xf32>
    %462 = vector.shape_cast %461 : vector<1x8xf32> to vector<1x8x1xf32>
    %463 = arith.subf %462, %359 : vector<1x8x1xf32>
    %464 = vector.broadcast %c1_i32_89 : i32 to vector<1x1x16xi32>
    %465 = arith.cmpi eq, %9, %464 : vector<1x1x16xi32>
    %466 = vector.shape_cast %465 : vector<1x1x16xi1> to vector<1x1x16xi1>
    %467 = vector.broadcast %466 : vector<1x1x16xi1> to vector<1x8x16xi1>
    %468 = vector.shape_cast %449 : vector<1x8x1xf32> to vector<1x8x1xf32>
    %469 = vector.broadcast %468 : vector<1x8x1xf32> to vector<1x8x16xf32>
    %470 = arith.select %467, %469, %417 : vector<1x8x16xi1>, vector<1x8x16xf32>
    %471 = vector.shape_cast %465 : vector<1x1x16xi1> to vector<1x1x16xi1>
    %472 = vector.broadcast %471 : vector<1x1x16xi1> to vector<1x8x16xi1>
    %473 = vector.shape_cast %456 : vector<1x8x1xf32> to vector<1x8x1xf32>
    %474 = vector.broadcast %473 : vector<1x8x1xf32> to vector<1x8x16xf32>
    %475 = arith.select %472, %474, %422 : vector<1x8x16xi1>, vector<1x8x16xf32>
    %476 = vector.shape_cast %465 : vector<1x1x16xi1> to vector<1x1x16xi1>
    %477 = vector.broadcast %476 : vector<1x1x16xi1> to vector<1x8x16xi1>
    %478 = vector.shape_cast %463 : vector<1x8x1xf32> to vector<1x8x1xf32>
    %479 = vector.broadcast %478 : vector<1x8x1xf32> to vector<1x8x16xf32>
    %480 = arith.select %477, %479, %427 : vector<1x8x16xi1>, vector<1x8x16xf32>
    %481 = vector.broadcast %cst_79 : f32 to vector<1x8x128xf32>
    %482 = arith.select %442, %481, %429 : vector<1x8x128xi1>, vector<1x8x128xf32>
    %c2_i32_98 = arith.constant 2 : i32
    %cst_99 = arith.constant dense<0x7F800000> : vector<1x8xf32>
    %483 = vector.multi_reduction <minimumf>, %482, %cst_99 [2] : vector<1x8x128xf32> to vector<1x8xf32>
    %484 = vector.shape_cast %483 : vector<1x8xf32> to vector<1x8x1xf32>
    %485 = vector.broadcast %484 : vector<1x8x1xf32> to vector<1x8x128xf32>
    %486 = arith.cmpf ole, %482, %485 : vector<1x8x128xf32>
    %487 = vector.shape_cast %7 : vector<1x1x128xi32> to vector<1x1x128xi32>
    %488 = vector.broadcast %487 : vector<1x1x128xi32> to vector<1x8x128xi32>
    %489 = vector.broadcast %c128_i32_78 : i32 to vector<1x8x128xi32>
    %490 = arith.select %486, %488, %489 : vector<1x8x128xi1>, vector<1x8x128xi32>
    %cst_100 = arith.constant dense<2147483647> : vector<1x8xi32>
    %491 = vector.multi_reduction <minsi>, %490, %cst_100 [2] : vector<1x8x128xi32> to vector<1x8xi32>
    %492 = vector.shape_cast %491 : vector<1x8xi32> to vector<1x8x1xi32>
    %493 = vector.broadcast %7 : vector<1x1x128xi32> to vector<1x8x128xi32>
    %494 = vector.broadcast %492 : vector<1x8x1xi32> to vector<1x8x128xi32>
    %495 = arith.cmpi eq, %493, %494 : vector<1x8x128xi32>
    %cst_101 = arith.constant 0.000000e+00 : f32
    %496 = vector.shape_cast %354 : vector<1x1x128xf32> to vector<1x1x128xf32>
    %497 = vector.broadcast %496 : vector<1x1x128xf32> to vector<1x8x128xf32>
    %498 = vector.broadcast %cst_101 : f32 to vector<1x8x128xf32>
    %499 = arith.select %495, %497, %498 : vector<1x8x128xi1>, vector<1x8x128xf32>
    %cst_102 = arith.constant dense<0.000000e+00> : vector<1x8xf32>
    %500 = vector.multi_reduction <add>, %499, %cst_102 [2] : vector<1x8x128xf32> to vector<1x8xf32>
    %501 = vector.shape_cast %500 : vector<1x8xf32> to vector<1x8x1xf32>
    %502 = arith.subf %501, %357 : vector<1x8x1xf32>
    %cst_103 = arith.constant 0.000000e+00 : f32
    %503 = vector.shape_cast %355 : vector<1x1x128xf32> to vector<1x1x128xf32>
    %504 = vector.broadcast %503 : vector<1x1x128xf32> to vector<1x8x128xf32>
    %505 = vector.broadcast %cst_103 : f32 to vector<1x8x128xf32>
    %506 = arith.select %495, %504, %505 : vector<1x8x128xi1>, vector<1x8x128xf32>
    %cst_104 = arith.constant dense<0.000000e+00> : vector<1x8xf32>
    %507 = vector.multi_reduction <add>, %506, %cst_104 [2] : vector<1x8x128xf32> to vector<1x8xf32>
    %508 = vector.shape_cast %507 : vector<1x8xf32> to vector<1x8x1xf32>
    %509 = arith.subf %508, %358 : vector<1x8x1xf32>
    %cst_105 = arith.constant 0.000000e+00 : f32
    %510 = vector.shape_cast %356 : vector<1x1x128xf32> to vector<1x1x128xf32>
    %511 = vector.broadcast %510 : vector<1x1x128xf32> to vector<1x8x128xf32>
    %512 = vector.broadcast %cst_105 : f32 to vector<1x8x128xf32>
    %513 = arith.select %495, %511, %512 : vector<1x8x128xi1>, vector<1x8x128xf32>
    %cst_106 = arith.constant dense<0.000000e+00> : vector<1x8xf32>
    %514 = vector.multi_reduction <add>, %513, %cst_106 [2] : vector<1x8x128xf32> to vector<1x8xf32>
    %515 = vector.shape_cast %514 : vector<1x8xf32> to vector<1x8x1xf32>
    %516 = arith.subf %515, %359 : vector<1x8x1xf32>
    %517 = vector.broadcast %c2_i32_98 : i32 to vector<1x1x16xi32>
    %518 = arith.cmpi eq, %9, %517 : vector<1x1x16xi32>
    %519 = vector.shape_cast %518 : vector<1x1x16xi1> to vector<1x1x16xi1>
    %520 = vector.broadcast %519 : vector<1x1x16xi1> to vector<1x8x16xi1>
    %521 = vector.shape_cast %502 : vector<1x8x1xf32> to vector<1x8x1xf32>
    %522 = vector.broadcast %521 : vector<1x8x1xf32> to vector<1x8x16xf32>
    %523 = arith.select %520, %522, %470 : vector<1x8x16xi1>, vector<1x8x16xf32>
    %524 = vector.shape_cast %518 : vector<1x1x16xi1> to vector<1x1x16xi1>
    %525 = vector.broadcast %524 : vector<1x1x16xi1> to vector<1x8x16xi1>
    %526 = vector.shape_cast %509 : vector<1x8x1xf32> to vector<1x8x1xf32>
    %527 = vector.broadcast %526 : vector<1x8x1xf32> to vector<1x8x16xf32>
    %528 = arith.select %525, %527, %475 : vector<1x8x16xi1>, vector<1x8x16xf32>
    %529 = vector.shape_cast %518 : vector<1x1x16xi1> to vector<1x1x16xi1>
    %530 = vector.broadcast %529 : vector<1x1x16xi1> to vector<1x8x16xi1>
    %531 = vector.shape_cast %516 : vector<1x8x1xf32> to vector<1x8x1xf32>
    %532 = vector.broadcast %531 : vector<1x8x1xf32> to vector<1x8x16xf32>
    %533 = arith.select %530, %532, %480 : vector<1x8x16xi1>, vector<1x8x16xf32>
    %534 = vector.broadcast %cst_79 : f32 to vector<1x8x128xf32>
    %535 = arith.select %495, %534, %482 : vector<1x8x128xi1>, vector<1x8x128xf32>
    %c3_i32_107 = arith.constant 3 : i32
    %cst_108 = arith.constant dense<0x7F800000> : vector<1x8xf32>
    %536 = vector.multi_reduction <minimumf>, %535, %cst_108 [2] : vector<1x8x128xf32> to vector<1x8xf32>
    %537 = vector.shape_cast %536 : vector<1x8xf32> to vector<1x8x1xf32>
    %538 = vector.broadcast %537 : vector<1x8x1xf32> to vector<1x8x128xf32>
    %539 = arith.cmpf ole, %535, %538 : vector<1x8x128xf32>
    %540 = vector.shape_cast %7 : vector<1x1x128xi32> to vector<1x1x128xi32>
    %541 = vector.broadcast %540 : vector<1x1x128xi32> to vector<1x8x128xi32>
    %542 = vector.broadcast %c128_i32_78 : i32 to vector<1x8x128xi32>
    %543 = arith.select %539, %541, %542 : vector<1x8x128xi1>, vector<1x8x128xi32>
    %cst_109 = arith.constant dense<2147483647> : vector<1x8xi32>
    %544 = vector.multi_reduction <minsi>, %543, %cst_109 [2] : vector<1x8x128xi32> to vector<1x8xi32>
    %545 = vector.shape_cast %544 : vector<1x8xi32> to vector<1x8x1xi32>
    %546 = vector.broadcast %7 : vector<1x1x128xi32> to vector<1x8x128xi32>
    %547 = vector.broadcast %545 : vector<1x8x1xi32> to vector<1x8x128xi32>
    %548 = arith.cmpi eq, %546, %547 : vector<1x8x128xi32>
    %cst_110 = arith.constant 0.000000e+00 : f32
    %549 = vector.shape_cast %354 : vector<1x1x128xf32> to vector<1x1x128xf32>
    %550 = vector.broadcast %549 : vector<1x1x128xf32> to vector<1x8x128xf32>
    %551 = vector.broadcast %cst_110 : f32 to vector<1x8x128xf32>
    %552 = arith.select %548, %550, %551 : vector<1x8x128xi1>, vector<1x8x128xf32>
    %cst_111 = arith.constant dense<0.000000e+00> : vector<1x8xf32>
    %553 = vector.multi_reduction <add>, %552, %cst_111 [2] : vector<1x8x128xf32> to vector<1x8xf32>
    %554 = vector.shape_cast %553 : vector<1x8xf32> to vector<1x8x1xf32>
    %555 = arith.subf %554, %357 : vector<1x8x1xf32>
    %cst_112 = arith.constant 0.000000e+00 : f32
    %556 = vector.shape_cast %355 : vector<1x1x128xf32> to vector<1x1x128xf32>
    %557 = vector.broadcast %556 : vector<1x1x128xf32> to vector<1x8x128xf32>
    %558 = vector.broadcast %cst_112 : f32 to vector<1x8x128xf32>
    %559 = arith.select %548, %557, %558 : vector<1x8x128xi1>, vector<1x8x128xf32>
    %cst_113 = arith.constant dense<0.000000e+00> : vector<1x8xf32>
    %560 = vector.multi_reduction <add>, %559, %cst_113 [2] : vector<1x8x128xf32> to vector<1x8xf32>
    %561 = vector.shape_cast %560 : vector<1x8xf32> to vector<1x8x1xf32>
    %562 = arith.subf %561, %358 : vector<1x8x1xf32>
    %cst_114 = arith.constant 0.000000e+00 : f32
    %563 = vector.shape_cast %356 : vector<1x1x128xf32> to vector<1x1x128xf32>
    %564 = vector.broadcast %563 : vector<1x1x128xf32> to vector<1x8x128xf32>
    %565 = vector.broadcast %cst_114 : f32 to vector<1x8x128xf32>
    %566 = arith.select %548, %564, %565 : vector<1x8x128xi1>, vector<1x8x128xf32>
    %cst_115 = arith.constant dense<0.000000e+00> : vector<1x8xf32>
    %567 = vector.multi_reduction <add>, %566, %cst_115 [2] : vector<1x8x128xf32> to vector<1x8xf32>
    %568 = vector.shape_cast %567 : vector<1x8xf32> to vector<1x8x1xf32>
    %569 = arith.subf %568, %359 : vector<1x8x1xf32>
    %570 = vector.broadcast %c3_i32_107 : i32 to vector<1x1x16xi32>
    %571 = arith.cmpi eq, %9, %570 : vector<1x1x16xi32>
    %572 = vector.shape_cast %571 : vector<1x1x16xi1> to vector<1x1x16xi1>
    %573 = vector.broadcast %572 : vector<1x1x16xi1> to vector<1x8x16xi1>
    %574 = vector.shape_cast %555 : vector<1x8x1xf32> to vector<1x8x1xf32>
    %575 = vector.broadcast %574 : vector<1x8x1xf32> to vector<1x8x16xf32>
    %576 = arith.select %573, %575, %523 : vector<1x8x16xi1>, vector<1x8x16xf32>
    %577 = vector.shape_cast %571 : vector<1x1x16xi1> to vector<1x1x16xi1>
    %578 = vector.broadcast %577 : vector<1x1x16xi1> to vector<1x8x16xi1>
    %579 = vector.shape_cast %562 : vector<1x8x1xf32> to vector<1x8x1xf32>
    %580 = vector.broadcast %579 : vector<1x8x1xf32> to vector<1x8x16xf32>
    %581 = arith.select %578, %580, %528 : vector<1x8x16xi1>, vector<1x8x16xf32>
    %582 = vector.shape_cast %571 : vector<1x1x16xi1> to vector<1x1x16xi1>
    %583 = vector.broadcast %582 : vector<1x1x16xi1> to vector<1x8x16xi1>
    %584 = vector.shape_cast %569 : vector<1x8x1xf32> to vector<1x8x1xf32>
    %585 = vector.broadcast %584 : vector<1x8x1xf32> to vector<1x8x16xf32>
    %586 = arith.select %583, %585, %533 : vector<1x8x16xi1>, vector<1x8x16xf32>
    %587 = vector.broadcast %cst_79 : f32 to vector<1x8x128xf32>
    %588 = arith.select %548, %587, %535 : vector<1x8x128xi1>, vector<1x8x128xf32>
    %c4_i32_116 = arith.constant 4 : i32
    %cst_117 = arith.constant dense<0x7F800000> : vector<1x8xf32>
    %589 = vector.multi_reduction <minimumf>, %588, %cst_117 [2] : vector<1x8x128xf32> to vector<1x8xf32>
    %590 = vector.shape_cast %589 : vector<1x8xf32> to vector<1x8x1xf32>
    %591 = vector.broadcast %590 : vector<1x8x1xf32> to vector<1x8x128xf32>
    %592 = arith.cmpf ole, %588, %591 : vector<1x8x128xf32>
    %593 = vector.shape_cast %7 : vector<1x1x128xi32> to vector<1x1x128xi32>
    %594 = vector.broadcast %593 : vector<1x1x128xi32> to vector<1x8x128xi32>
    %595 = vector.broadcast %c128_i32_78 : i32 to vector<1x8x128xi32>
    %596 = arith.select %592, %594, %595 : vector<1x8x128xi1>, vector<1x8x128xi32>
    %cst_118 = arith.constant dense<2147483647> : vector<1x8xi32>
    %597 = vector.multi_reduction <minsi>, %596, %cst_118 [2] : vector<1x8x128xi32> to vector<1x8xi32>
    %598 = vector.shape_cast %597 : vector<1x8xi32> to vector<1x8x1xi32>
    %599 = vector.broadcast %7 : vector<1x1x128xi32> to vector<1x8x128xi32>
    %600 = vector.broadcast %598 : vector<1x8x1xi32> to vector<1x8x128xi32>
    %601 = arith.cmpi eq, %599, %600 : vector<1x8x128xi32>
    %cst_119 = arith.constant 0.000000e+00 : f32
    %602 = vector.shape_cast %354 : vector<1x1x128xf32> to vector<1x1x128xf32>
    %603 = vector.broadcast %602 : vector<1x1x128xf32> to vector<1x8x128xf32>
    %604 = vector.broadcast %cst_119 : f32 to vector<1x8x128xf32>
    %605 = arith.select %601, %603, %604 : vector<1x8x128xi1>, vector<1x8x128xf32>
    %cst_120 = arith.constant dense<0.000000e+00> : vector<1x8xf32>
    %606 = vector.multi_reduction <add>, %605, %cst_120 [2] : vector<1x8x128xf32> to vector<1x8xf32>
    %607 = vector.shape_cast %606 : vector<1x8xf32> to vector<1x8x1xf32>
    %608 = arith.subf %607, %357 : vector<1x8x1xf32>
    %cst_121 = arith.constant 0.000000e+00 : f32
    %609 = vector.shape_cast %355 : vector<1x1x128xf32> to vector<1x1x128xf32>
    %610 = vector.broadcast %609 : vector<1x1x128xf32> to vector<1x8x128xf32>
    %611 = vector.broadcast %cst_121 : f32 to vector<1x8x128xf32>
    %612 = arith.select %601, %610, %611 : vector<1x8x128xi1>, vector<1x8x128xf32>
    %cst_122 = arith.constant dense<0.000000e+00> : vector<1x8xf32>
    %613 = vector.multi_reduction <add>, %612, %cst_122 [2] : vector<1x8x128xf32> to vector<1x8xf32>
    %614 = vector.shape_cast %613 : vector<1x8xf32> to vector<1x8x1xf32>
    %615 = arith.subf %614, %358 : vector<1x8x1xf32>
    %cst_123 = arith.constant 0.000000e+00 : f32
    %616 = vector.shape_cast %356 : vector<1x1x128xf32> to vector<1x1x128xf32>
    %617 = vector.broadcast %616 : vector<1x1x128xf32> to vector<1x8x128xf32>
    %618 = vector.broadcast %cst_123 : f32 to vector<1x8x128xf32>
    %619 = arith.select %601, %617, %618 : vector<1x8x128xi1>, vector<1x8x128xf32>
    %cst_124 = arith.constant dense<0.000000e+00> : vector<1x8xf32>
    %620 = vector.multi_reduction <add>, %619, %cst_124 [2] : vector<1x8x128xf32> to vector<1x8xf32>
    %621 = vector.shape_cast %620 : vector<1x8xf32> to vector<1x8x1xf32>
    %622 = arith.subf %621, %359 : vector<1x8x1xf32>
    %623 = vector.broadcast %c4_i32_116 : i32 to vector<1x1x16xi32>
    %624 = arith.cmpi eq, %9, %623 : vector<1x1x16xi32>
    %625 = vector.shape_cast %624 : vector<1x1x16xi1> to vector<1x1x16xi1>
    %626 = vector.broadcast %625 : vector<1x1x16xi1> to vector<1x8x16xi1>
    %627 = vector.shape_cast %608 : vector<1x8x1xf32> to vector<1x8x1xf32>
    %628 = vector.broadcast %627 : vector<1x8x1xf32> to vector<1x8x16xf32>
    %629 = arith.select %626, %628, %576 : vector<1x8x16xi1>, vector<1x8x16xf32>
    %630 = vector.shape_cast %624 : vector<1x1x16xi1> to vector<1x1x16xi1>
    %631 = vector.broadcast %630 : vector<1x1x16xi1> to vector<1x8x16xi1>
    %632 = vector.shape_cast %615 : vector<1x8x1xf32> to vector<1x8x1xf32>
    %633 = vector.broadcast %632 : vector<1x8x1xf32> to vector<1x8x16xf32>
    %634 = arith.select %631, %633, %581 : vector<1x8x16xi1>, vector<1x8x16xf32>
    %635 = vector.shape_cast %624 : vector<1x1x16xi1> to vector<1x1x16xi1>
    %636 = vector.broadcast %635 : vector<1x1x16xi1> to vector<1x8x16xi1>
    %637 = vector.shape_cast %622 : vector<1x8x1xf32> to vector<1x8x1xf32>
    %638 = vector.broadcast %637 : vector<1x8x1xf32> to vector<1x8x16xf32>
    %639 = arith.select %636, %638, %586 : vector<1x8x16xi1>, vector<1x8x16xf32>
    %640 = vector.broadcast %cst_79 : f32 to vector<1x8x128xf32>
    %641 = arith.select %601, %640, %588 : vector<1x8x128xi1>, vector<1x8x128xf32>
    %c5_i32_125 = arith.constant 5 : i32
    %cst_126 = arith.constant dense<0x7F800000> : vector<1x8xf32>
    %642 = vector.multi_reduction <minimumf>, %641, %cst_126 [2] : vector<1x8x128xf32> to vector<1x8xf32>
    %643 = vector.shape_cast %642 : vector<1x8xf32> to vector<1x8x1xf32>
    %644 = vector.broadcast %643 : vector<1x8x1xf32> to vector<1x8x128xf32>
    %645 = arith.cmpf ole, %641, %644 : vector<1x8x128xf32>
    %646 = vector.shape_cast %7 : vector<1x1x128xi32> to vector<1x1x128xi32>
    %647 = vector.broadcast %646 : vector<1x1x128xi32> to vector<1x8x128xi32>
    %648 = vector.broadcast %c128_i32_78 : i32 to vector<1x8x128xi32>
    %649 = arith.select %645, %647, %648 : vector<1x8x128xi1>, vector<1x8x128xi32>
    %cst_127 = arith.constant dense<2147483647> : vector<1x8xi32>
    %650 = vector.multi_reduction <minsi>, %649, %cst_127 [2] : vector<1x8x128xi32> to vector<1x8xi32>
    %651 = vector.shape_cast %650 : vector<1x8xi32> to vector<1x8x1xi32>
    %652 = vector.broadcast %7 : vector<1x1x128xi32> to vector<1x8x128xi32>
    %653 = vector.broadcast %651 : vector<1x8x1xi32> to vector<1x8x128xi32>
    %654 = arith.cmpi eq, %652, %653 : vector<1x8x128xi32>
    %cst_128 = arith.constant 0.000000e+00 : f32
    %655 = vector.shape_cast %354 : vector<1x1x128xf32> to vector<1x1x128xf32>
    %656 = vector.broadcast %655 : vector<1x1x128xf32> to vector<1x8x128xf32>
    %657 = vector.broadcast %cst_128 : f32 to vector<1x8x128xf32>
    %658 = arith.select %654, %656, %657 : vector<1x8x128xi1>, vector<1x8x128xf32>
    %cst_129 = arith.constant dense<0.000000e+00> : vector<1x8xf32>
    %659 = vector.multi_reduction <add>, %658, %cst_129 [2] : vector<1x8x128xf32> to vector<1x8xf32>
    %660 = vector.shape_cast %659 : vector<1x8xf32> to vector<1x8x1xf32>
    %661 = arith.subf %660, %357 : vector<1x8x1xf32>
    %cst_130 = arith.constant 0.000000e+00 : f32
    %662 = vector.shape_cast %355 : vector<1x1x128xf32> to vector<1x1x128xf32>
    %663 = vector.broadcast %662 : vector<1x1x128xf32> to vector<1x8x128xf32>
    %664 = vector.broadcast %cst_130 : f32 to vector<1x8x128xf32>
    %665 = arith.select %654, %663, %664 : vector<1x8x128xi1>, vector<1x8x128xf32>
    %cst_131 = arith.constant dense<0.000000e+00> : vector<1x8xf32>
    %666 = vector.multi_reduction <add>, %665, %cst_131 [2] : vector<1x8x128xf32> to vector<1x8xf32>
    %667 = vector.shape_cast %666 : vector<1x8xf32> to vector<1x8x1xf32>
    %668 = arith.subf %667, %358 : vector<1x8x1xf32>
    %cst_132 = arith.constant 0.000000e+00 : f32
    %669 = vector.shape_cast %356 : vector<1x1x128xf32> to vector<1x1x128xf32>
    %670 = vector.broadcast %669 : vector<1x1x128xf32> to vector<1x8x128xf32>
    %671 = vector.broadcast %cst_132 : f32 to vector<1x8x128xf32>
    %672 = arith.select %654, %670, %671 : vector<1x8x128xi1>, vector<1x8x128xf32>
    %cst_133 = arith.constant dense<0.000000e+00> : vector<1x8xf32>
    %673 = vector.multi_reduction <add>, %672, %cst_133 [2] : vector<1x8x128xf32> to vector<1x8xf32>
    %674 = vector.shape_cast %673 : vector<1x8xf32> to vector<1x8x1xf32>
    %675 = arith.subf %674, %359 : vector<1x8x1xf32>
    %676 = vector.broadcast %c5_i32_125 : i32 to vector<1x1x16xi32>
    %677 = arith.cmpi eq, %9, %676 : vector<1x1x16xi32>
    %678 = vector.shape_cast %677 : vector<1x1x16xi1> to vector<1x1x16xi1>
    %679 = vector.broadcast %678 : vector<1x1x16xi1> to vector<1x8x16xi1>
    %680 = vector.shape_cast %661 : vector<1x8x1xf32> to vector<1x8x1xf32>
    %681 = vector.broadcast %680 : vector<1x8x1xf32> to vector<1x8x16xf32>
    %682 = arith.select %679, %681, %629 : vector<1x8x16xi1>, vector<1x8x16xf32>
    %683 = vector.shape_cast %677 : vector<1x1x16xi1> to vector<1x1x16xi1>
    %684 = vector.broadcast %683 : vector<1x1x16xi1> to vector<1x8x16xi1>
    %685 = vector.shape_cast %668 : vector<1x8x1xf32> to vector<1x8x1xf32>
    %686 = vector.broadcast %685 : vector<1x8x1xf32> to vector<1x8x16xf32>
    %687 = arith.select %684, %686, %634 : vector<1x8x16xi1>, vector<1x8x16xf32>
    %688 = vector.shape_cast %677 : vector<1x1x16xi1> to vector<1x1x16xi1>
    %689 = vector.broadcast %688 : vector<1x1x16xi1> to vector<1x8x16xi1>
    %690 = vector.shape_cast %675 : vector<1x8x1xf32> to vector<1x8x1xf32>
    %691 = vector.broadcast %690 : vector<1x8x1xf32> to vector<1x8x16xf32>
    %692 = arith.select %689, %691, %639 : vector<1x8x16xi1>, vector<1x8x16xf32>
    %693 = vector.broadcast %cst_79 : f32 to vector<1x8x128xf32>
    %694 = arith.select %654, %693, %641 : vector<1x8x128xi1>, vector<1x8x128xf32>
    %c6_i32_134 = arith.constant 6 : i32
    %cst_135 = arith.constant dense<0x7F800000> : vector<1x8xf32>
    %695 = vector.multi_reduction <minimumf>, %694, %cst_135 [2] : vector<1x8x128xf32> to vector<1x8xf32>
    %696 = vector.shape_cast %695 : vector<1x8xf32> to vector<1x8x1xf32>
    %697 = vector.broadcast %696 : vector<1x8x1xf32> to vector<1x8x128xf32>
    %698 = arith.cmpf ole, %694, %697 : vector<1x8x128xf32>
    %699 = vector.shape_cast %7 : vector<1x1x128xi32> to vector<1x1x128xi32>
    %700 = vector.broadcast %699 : vector<1x1x128xi32> to vector<1x8x128xi32>
    %701 = vector.broadcast %c128_i32_78 : i32 to vector<1x8x128xi32>
    %702 = arith.select %698, %700, %701 : vector<1x8x128xi1>, vector<1x8x128xi32>
    %cst_136 = arith.constant dense<2147483647> : vector<1x8xi32>
    %703 = vector.multi_reduction <minsi>, %702, %cst_136 [2] : vector<1x8x128xi32> to vector<1x8xi32>
    %704 = vector.shape_cast %703 : vector<1x8xi32> to vector<1x8x1xi32>
    %705 = vector.broadcast %7 : vector<1x1x128xi32> to vector<1x8x128xi32>
    %706 = vector.broadcast %704 : vector<1x8x1xi32> to vector<1x8x128xi32>
    %707 = arith.cmpi eq, %705, %706 : vector<1x8x128xi32>
    %cst_137 = arith.constant 0.000000e+00 : f32
    %708 = vector.shape_cast %354 : vector<1x1x128xf32> to vector<1x1x128xf32>
    %709 = vector.broadcast %708 : vector<1x1x128xf32> to vector<1x8x128xf32>
    %710 = vector.broadcast %cst_137 : f32 to vector<1x8x128xf32>
    %711 = arith.select %707, %709, %710 : vector<1x8x128xi1>, vector<1x8x128xf32>
    %cst_138 = arith.constant dense<0.000000e+00> : vector<1x8xf32>
    %712 = vector.multi_reduction <add>, %711, %cst_138 [2] : vector<1x8x128xf32> to vector<1x8xf32>
    %713 = vector.shape_cast %712 : vector<1x8xf32> to vector<1x8x1xf32>
    %714 = arith.subf %713, %357 : vector<1x8x1xf32>
    %cst_139 = arith.constant 0.000000e+00 : f32
    %715 = vector.shape_cast %355 : vector<1x1x128xf32> to vector<1x1x128xf32>
    %716 = vector.broadcast %715 : vector<1x1x128xf32> to vector<1x8x128xf32>
    %717 = vector.broadcast %cst_139 : f32 to vector<1x8x128xf32>
    %718 = arith.select %707, %716, %717 : vector<1x8x128xi1>, vector<1x8x128xf32>
    %cst_140 = arith.constant dense<0.000000e+00> : vector<1x8xf32>
    %719 = vector.multi_reduction <add>, %718, %cst_140 [2] : vector<1x8x128xf32> to vector<1x8xf32>
    %720 = vector.shape_cast %719 : vector<1x8xf32> to vector<1x8x1xf32>
    %721 = arith.subf %720, %358 : vector<1x8x1xf32>
    %cst_141 = arith.constant 0.000000e+00 : f32
    %722 = vector.shape_cast %356 : vector<1x1x128xf32> to vector<1x1x128xf32>
    %723 = vector.broadcast %722 : vector<1x1x128xf32> to vector<1x8x128xf32>
    %724 = vector.broadcast %cst_141 : f32 to vector<1x8x128xf32>
    %725 = arith.select %707, %723, %724 : vector<1x8x128xi1>, vector<1x8x128xf32>
    %cst_142 = arith.constant dense<0.000000e+00> : vector<1x8xf32>
    %726 = vector.multi_reduction <add>, %725, %cst_142 [2] : vector<1x8x128xf32> to vector<1x8xf32>
    %727 = vector.shape_cast %726 : vector<1x8xf32> to vector<1x8x1xf32>
    %728 = arith.subf %727, %359 : vector<1x8x1xf32>
    %729 = vector.broadcast %c6_i32_134 : i32 to vector<1x1x16xi32>
    %730 = arith.cmpi eq, %9, %729 : vector<1x1x16xi32>
    %731 = vector.shape_cast %730 : vector<1x1x16xi1> to vector<1x1x16xi1>
    %732 = vector.broadcast %731 : vector<1x1x16xi1> to vector<1x8x16xi1>
    %733 = vector.shape_cast %714 : vector<1x8x1xf32> to vector<1x8x1xf32>
    %734 = vector.broadcast %733 : vector<1x8x1xf32> to vector<1x8x16xf32>
    %735 = arith.select %732, %734, %682 : vector<1x8x16xi1>, vector<1x8x16xf32>
    %736 = vector.shape_cast %730 : vector<1x1x16xi1> to vector<1x1x16xi1>
    %737 = vector.broadcast %736 : vector<1x1x16xi1> to vector<1x8x16xi1>
    %738 = vector.shape_cast %721 : vector<1x8x1xf32> to vector<1x8x1xf32>
    %739 = vector.broadcast %738 : vector<1x8x1xf32> to vector<1x8x16xf32>
    %740 = arith.select %737, %739, %687 : vector<1x8x16xi1>, vector<1x8x16xf32>
    %741 = vector.shape_cast %730 : vector<1x1x16xi1> to vector<1x1x16xi1>
    %742 = vector.broadcast %741 : vector<1x1x16xi1> to vector<1x8x16xi1>
    %743 = vector.shape_cast %728 : vector<1x8x1xf32> to vector<1x8x1xf32>
    %744 = vector.broadcast %743 : vector<1x8x1xf32> to vector<1x8x16xf32>
    %745 = arith.select %742, %744, %692 : vector<1x8x16xi1>, vector<1x8x16xf32>
    %746 = vector.broadcast %cst_79 : f32 to vector<1x8x128xf32>
    %747 = arith.select %707, %746, %694 : vector<1x8x128xi1>, vector<1x8x128xf32>
    %c7_i32_143 = arith.constant 7 : i32
    %cst_144 = arith.constant dense<0x7F800000> : vector<1x8xf32>
    %748 = vector.multi_reduction <minimumf>, %747, %cst_144 [2] : vector<1x8x128xf32> to vector<1x8xf32>
    %749 = vector.shape_cast %748 : vector<1x8xf32> to vector<1x8x1xf32>
    %750 = vector.broadcast %749 : vector<1x8x1xf32> to vector<1x8x128xf32>
    %751 = arith.cmpf ole, %747, %750 : vector<1x8x128xf32>
    %752 = vector.shape_cast %7 : vector<1x1x128xi32> to vector<1x1x128xi32>
    %753 = vector.broadcast %752 : vector<1x1x128xi32> to vector<1x8x128xi32>
    %754 = vector.broadcast %c128_i32_78 : i32 to vector<1x8x128xi32>
    %755 = arith.select %751, %753, %754 : vector<1x8x128xi1>, vector<1x8x128xi32>
    %cst_145 = arith.constant dense<2147483647> : vector<1x8xi32>
    %756 = vector.multi_reduction <minsi>, %755, %cst_145 [2] : vector<1x8x128xi32> to vector<1x8xi32>
    %757 = vector.shape_cast %756 : vector<1x8xi32> to vector<1x8x1xi32>
    %758 = vector.broadcast %7 : vector<1x1x128xi32> to vector<1x8x128xi32>
    %759 = vector.broadcast %757 : vector<1x8x1xi32> to vector<1x8x128xi32>
    %760 = arith.cmpi eq, %758, %759 : vector<1x8x128xi32>
    %cst_146 = arith.constant 0.000000e+00 : f32
    %761 = vector.shape_cast %354 : vector<1x1x128xf32> to vector<1x1x128xf32>
    %762 = vector.broadcast %761 : vector<1x1x128xf32> to vector<1x8x128xf32>
    %763 = vector.broadcast %cst_146 : f32 to vector<1x8x128xf32>
    %764 = arith.select %760, %762, %763 : vector<1x8x128xi1>, vector<1x8x128xf32>
    %cst_147 = arith.constant dense<0.000000e+00> : vector<1x8xf32>
    %765 = vector.multi_reduction <add>, %764, %cst_147 [2] : vector<1x8x128xf32> to vector<1x8xf32>
    %766 = vector.shape_cast %765 : vector<1x8xf32> to vector<1x8x1xf32>
    %767 = arith.subf %766, %357 : vector<1x8x1xf32>
    %cst_148 = arith.constant 0.000000e+00 : f32
    %768 = vector.shape_cast %355 : vector<1x1x128xf32> to vector<1x1x128xf32>
    %769 = vector.broadcast %768 : vector<1x1x128xf32> to vector<1x8x128xf32>
    %770 = vector.broadcast %cst_148 : f32 to vector<1x8x128xf32>
    %771 = arith.select %760, %769, %770 : vector<1x8x128xi1>, vector<1x8x128xf32>
    %cst_149 = arith.constant dense<0.000000e+00> : vector<1x8xf32>
    %772 = vector.multi_reduction <add>, %771, %cst_149 [2] : vector<1x8x128xf32> to vector<1x8xf32>
    %773 = vector.shape_cast %772 : vector<1x8xf32> to vector<1x8x1xf32>
    %774 = arith.subf %773, %358 : vector<1x8x1xf32>
    %cst_150 = arith.constant 0.000000e+00 : f32
    %775 = vector.shape_cast %356 : vector<1x1x128xf32> to vector<1x1x128xf32>
    %776 = vector.broadcast %775 : vector<1x1x128xf32> to vector<1x8x128xf32>
    %777 = vector.broadcast %cst_150 : f32 to vector<1x8x128xf32>
    %778 = arith.select %760, %776, %777 : vector<1x8x128xi1>, vector<1x8x128xf32>
    %cst_151 = arith.constant dense<0.000000e+00> : vector<1x8xf32>
    %779 = vector.multi_reduction <add>, %778, %cst_151 [2] : vector<1x8x128xf32> to vector<1x8xf32>
    %780 = vector.shape_cast %779 : vector<1x8xf32> to vector<1x8x1xf32>
    %781 = arith.subf %780, %359 : vector<1x8x1xf32>
    %782 = vector.broadcast %c7_i32_143 : i32 to vector<1x1x16xi32>
    %783 = arith.cmpi eq, %9, %782 : vector<1x1x16xi32>
    %784 = vector.shape_cast %783 : vector<1x1x16xi1> to vector<1x1x16xi1>
    %785 = vector.broadcast %784 : vector<1x1x16xi1> to vector<1x8x16xi1>
    %786 = vector.shape_cast %767 : vector<1x8x1xf32> to vector<1x8x1xf32>
    %787 = vector.broadcast %786 : vector<1x8x1xf32> to vector<1x8x16xf32>
    %788 = arith.select %785, %787, %735 : vector<1x8x16xi1>, vector<1x8x16xf32>
    %789 = vector.shape_cast %783 : vector<1x1x16xi1> to vector<1x1x16xi1>
    %790 = vector.broadcast %789 : vector<1x1x16xi1> to vector<1x8x16xi1>
    %791 = vector.shape_cast %774 : vector<1x8x1xf32> to vector<1x8x1xf32>
    %792 = vector.broadcast %791 : vector<1x8x1xf32> to vector<1x8x16xf32>
    %793 = arith.select %790, %792, %740 : vector<1x8x16xi1>, vector<1x8x16xf32>
    %794 = vector.shape_cast %783 : vector<1x1x16xi1> to vector<1x1x16xi1>
    %795 = vector.broadcast %794 : vector<1x1x16xi1> to vector<1x8x16xi1>
    %796 = vector.shape_cast %781 : vector<1x8x1xf32> to vector<1x8x1xf32>
    %797 = vector.broadcast %796 : vector<1x8x1xf32> to vector<1x8x16xf32>
    %798 = arith.select %795, %797, %745 : vector<1x8x16xi1>, vector<1x8x16xf32>
    %799 = vector.broadcast %cst_79 : f32 to vector<1x8x128xf32>
    %800 = arith.select %760, %799, %747 : vector<1x8x128xi1>, vector<1x8x128xf32>
    %c8_i32 = arith.constant 8 : i32
    %cst_152 = arith.constant dense<0x7F800000> : vector<1x8xf32>
    %801 = vector.multi_reduction <minimumf>, %800, %cst_152 [2] : vector<1x8x128xf32> to vector<1x8xf32>
    %802 = vector.shape_cast %801 : vector<1x8xf32> to vector<1x8x1xf32>
    %803 = vector.broadcast %802 : vector<1x8x1xf32> to vector<1x8x128xf32>
    %804 = arith.cmpf ole, %800, %803 : vector<1x8x128xf32>
    %805 = vector.shape_cast %7 : vector<1x1x128xi32> to vector<1x1x128xi32>
    %806 = vector.broadcast %805 : vector<1x1x128xi32> to vector<1x8x128xi32>
    %807 = vector.broadcast %c128_i32_78 : i32 to vector<1x8x128xi32>
    %808 = arith.select %804, %806, %807 : vector<1x8x128xi1>, vector<1x8x128xi32>
    %cst_153 = arith.constant dense<2147483647> : vector<1x8xi32>
    %809 = vector.multi_reduction <minsi>, %808, %cst_153 [2] : vector<1x8x128xi32> to vector<1x8xi32>
    %810 = vector.shape_cast %809 : vector<1x8xi32> to vector<1x8x1xi32>
    %811 = vector.broadcast %7 : vector<1x1x128xi32> to vector<1x8x128xi32>
    %812 = vector.broadcast %810 : vector<1x8x1xi32> to vector<1x8x128xi32>
    %813 = arith.cmpi eq, %811, %812 : vector<1x8x128xi32>
    %cst_154 = arith.constant 0.000000e+00 : f32
    %814 = vector.shape_cast %354 : vector<1x1x128xf32> to vector<1x1x128xf32>
    %815 = vector.broadcast %814 : vector<1x1x128xf32> to vector<1x8x128xf32>
    %816 = vector.broadcast %cst_154 : f32 to vector<1x8x128xf32>
    %817 = arith.select %813, %815, %816 : vector<1x8x128xi1>, vector<1x8x128xf32>
    %cst_155 = arith.constant dense<0.000000e+00> : vector<1x8xf32>
    %818 = vector.multi_reduction <add>, %817, %cst_155 [2] : vector<1x8x128xf32> to vector<1x8xf32>
    %819 = vector.shape_cast %818 : vector<1x8xf32> to vector<1x8x1xf32>
    %820 = arith.subf %819, %357 : vector<1x8x1xf32>
    %cst_156 = arith.constant 0.000000e+00 : f32
    %821 = vector.shape_cast %355 : vector<1x1x128xf32> to vector<1x1x128xf32>
    %822 = vector.broadcast %821 : vector<1x1x128xf32> to vector<1x8x128xf32>
    %823 = vector.broadcast %cst_156 : f32 to vector<1x8x128xf32>
    %824 = arith.select %813, %822, %823 : vector<1x8x128xi1>, vector<1x8x128xf32>
    %cst_157 = arith.constant dense<0.000000e+00> : vector<1x8xf32>
    %825 = vector.multi_reduction <add>, %824, %cst_157 [2] : vector<1x8x128xf32> to vector<1x8xf32>
    %826 = vector.shape_cast %825 : vector<1x8xf32> to vector<1x8x1xf32>
    %827 = arith.subf %826, %358 : vector<1x8x1xf32>
    %cst_158 = arith.constant 0.000000e+00 : f32
    %828 = vector.shape_cast %356 : vector<1x1x128xf32> to vector<1x1x128xf32>
    %829 = vector.broadcast %828 : vector<1x1x128xf32> to vector<1x8x128xf32>
    %830 = vector.broadcast %cst_158 : f32 to vector<1x8x128xf32>
    %831 = arith.select %813, %829, %830 : vector<1x8x128xi1>, vector<1x8x128xf32>
    %cst_159 = arith.constant dense<0.000000e+00> : vector<1x8xf32>
    %832 = vector.multi_reduction <add>, %831, %cst_159 [2] : vector<1x8x128xf32> to vector<1x8xf32>
    %833 = vector.shape_cast %832 : vector<1x8xf32> to vector<1x8x1xf32>
    %834 = arith.subf %833, %359 : vector<1x8x1xf32>
    %835 = vector.broadcast %c8_i32 : i32 to vector<1x1x16xi32>
    %836 = arith.cmpi eq, %9, %835 : vector<1x1x16xi32>
    %837 = vector.shape_cast %836 : vector<1x1x16xi1> to vector<1x1x16xi1>
    %838 = vector.broadcast %837 : vector<1x1x16xi1> to vector<1x8x16xi1>
    %839 = vector.shape_cast %820 : vector<1x8x1xf32> to vector<1x8x1xf32>
    %840 = vector.broadcast %839 : vector<1x8x1xf32> to vector<1x8x16xf32>
    %841 = arith.select %838, %840, %788 : vector<1x8x16xi1>, vector<1x8x16xf32>
    %842 = vector.shape_cast %836 : vector<1x1x16xi1> to vector<1x1x16xi1>
    %843 = vector.broadcast %842 : vector<1x1x16xi1> to vector<1x8x16xi1>
    %844 = vector.shape_cast %827 : vector<1x8x1xf32> to vector<1x8x1xf32>
    %845 = vector.broadcast %844 : vector<1x8x1xf32> to vector<1x8x16xf32>
    %846 = arith.select %843, %845, %793 : vector<1x8x16xi1>, vector<1x8x16xf32>
    %847 = vector.shape_cast %836 : vector<1x1x16xi1> to vector<1x1x16xi1>
    %848 = vector.broadcast %847 : vector<1x1x16xi1> to vector<1x8x16xi1>
    %849 = vector.shape_cast %834 : vector<1x8x1xf32> to vector<1x8x1xf32>
    %850 = vector.broadcast %849 : vector<1x8x1xf32> to vector<1x8x16xf32>
    %851 = arith.select %848, %850, %798 : vector<1x8x16xi1>, vector<1x8x16xf32>
    %852 = vector.broadcast %cst_79 : f32 to vector<1x8x128xf32>
    %853 = arith.select %813, %852, %800 : vector<1x8x128xi1>, vector<1x8x128xf32>
    %c9_i32 = arith.constant 9 : i32
    %cst_160 = arith.constant dense<0x7F800000> : vector<1x8xf32>
    %854 = vector.multi_reduction <minimumf>, %853, %cst_160 [2] : vector<1x8x128xf32> to vector<1x8xf32>
    %855 = vector.shape_cast %854 : vector<1x8xf32> to vector<1x8x1xf32>
    %856 = vector.broadcast %855 : vector<1x8x1xf32> to vector<1x8x128xf32>
    %857 = arith.cmpf ole, %853, %856 : vector<1x8x128xf32>
    %858 = vector.shape_cast %7 : vector<1x1x128xi32> to vector<1x1x128xi32>
    %859 = vector.broadcast %858 : vector<1x1x128xi32> to vector<1x8x128xi32>
    %860 = vector.broadcast %c128_i32_78 : i32 to vector<1x8x128xi32>
    %861 = arith.select %857, %859, %860 : vector<1x8x128xi1>, vector<1x8x128xi32>
    %cst_161 = arith.constant dense<2147483647> : vector<1x8xi32>
    %862 = vector.multi_reduction <minsi>, %861, %cst_161 [2] : vector<1x8x128xi32> to vector<1x8xi32>
    %863 = vector.shape_cast %862 : vector<1x8xi32> to vector<1x8x1xi32>
    %864 = vector.broadcast %7 : vector<1x1x128xi32> to vector<1x8x128xi32>
    %865 = vector.broadcast %863 : vector<1x8x1xi32> to vector<1x8x128xi32>
    %866 = arith.cmpi eq, %864, %865 : vector<1x8x128xi32>
    %cst_162 = arith.constant 0.000000e+00 : f32
    %867 = vector.shape_cast %354 : vector<1x1x128xf32> to vector<1x1x128xf32>
    %868 = vector.broadcast %867 : vector<1x1x128xf32> to vector<1x8x128xf32>
    %869 = vector.broadcast %cst_162 : f32 to vector<1x8x128xf32>
    %870 = arith.select %866, %868, %869 : vector<1x8x128xi1>, vector<1x8x128xf32>
    %cst_163 = arith.constant dense<0.000000e+00> : vector<1x8xf32>
    %871 = vector.multi_reduction <add>, %870, %cst_163 [2] : vector<1x8x128xf32> to vector<1x8xf32>
    %872 = vector.shape_cast %871 : vector<1x8xf32> to vector<1x8x1xf32>
    %873 = arith.subf %872, %357 : vector<1x8x1xf32>
    %cst_164 = arith.constant 0.000000e+00 : f32
    %874 = vector.shape_cast %355 : vector<1x1x128xf32> to vector<1x1x128xf32>
    %875 = vector.broadcast %874 : vector<1x1x128xf32> to vector<1x8x128xf32>
    %876 = vector.broadcast %cst_164 : f32 to vector<1x8x128xf32>
    %877 = arith.select %866, %875, %876 : vector<1x8x128xi1>, vector<1x8x128xf32>
    %cst_165 = arith.constant dense<0.000000e+00> : vector<1x8xf32>
    %878 = vector.multi_reduction <add>, %877, %cst_165 [2] : vector<1x8x128xf32> to vector<1x8xf32>
    %879 = vector.shape_cast %878 : vector<1x8xf32> to vector<1x8x1xf32>
    %880 = arith.subf %879, %358 : vector<1x8x1xf32>
    %cst_166 = arith.constant 0.000000e+00 : f32
    %881 = vector.shape_cast %356 : vector<1x1x128xf32> to vector<1x1x128xf32>
    %882 = vector.broadcast %881 : vector<1x1x128xf32> to vector<1x8x128xf32>
    %883 = vector.broadcast %cst_166 : f32 to vector<1x8x128xf32>
    %884 = arith.select %866, %882, %883 : vector<1x8x128xi1>, vector<1x8x128xf32>
    %cst_167 = arith.constant dense<0.000000e+00> : vector<1x8xf32>
    %885 = vector.multi_reduction <add>, %884, %cst_167 [2] : vector<1x8x128xf32> to vector<1x8xf32>
    %886 = vector.shape_cast %885 : vector<1x8xf32> to vector<1x8x1xf32>
    %887 = arith.subf %886, %359 : vector<1x8x1xf32>
    %888 = vector.broadcast %c9_i32 : i32 to vector<1x1x16xi32>
    %889 = arith.cmpi eq, %9, %888 : vector<1x1x16xi32>
    %890 = vector.shape_cast %889 : vector<1x1x16xi1> to vector<1x1x16xi1>
    %891 = vector.broadcast %890 : vector<1x1x16xi1> to vector<1x8x16xi1>
    %892 = vector.shape_cast %873 : vector<1x8x1xf32> to vector<1x8x1xf32>
    %893 = vector.broadcast %892 : vector<1x8x1xf32> to vector<1x8x16xf32>
    %894 = arith.select %891, %893, %841 : vector<1x8x16xi1>, vector<1x8x16xf32>
    %895 = vector.shape_cast %889 : vector<1x1x16xi1> to vector<1x1x16xi1>
    %896 = vector.broadcast %895 : vector<1x1x16xi1> to vector<1x8x16xi1>
    %897 = vector.shape_cast %880 : vector<1x8x1xf32> to vector<1x8x1xf32>
    %898 = vector.broadcast %897 : vector<1x8x1xf32> to vector<1x8x16xf32>
    %899 = arith.select %896, %898, %846 : vector<1x8x16xi1>, vector<1x8x16xf32>
    %900 = vector.shape_cast %889 : vector<1x1x16xi1> to vector<1x1x16xi1>
    %901 = vector.broadcast %900 : vector<1x1x16xi1> to vector<1x8x16xi1>
    %902 = vector.shape_cast %887 : vector<1x8x1xf32> to vector<1x8x1xf32>
    %903 = vector.broadcast %902 : vector<1x8x1xf32> to vector<1x8x16xf32>
    %904 = arith.select %901, %903, %851 : vector<1x8x16xi1>, vector<1x8x16xf32>
    %905 = vector.broadcast %cst_79 : f32 to vector<1x8x128xf32>
    %906 = arith.select %866, %905, %853 : vector<1x8x128xi1>, vector<1x8x128xf32>
    %c10_i32 = arith.constant 10 : i32
    %cst_168 = arith.constant dense<0x7F800000> : vector<1x8xf32>
    %907 = vector.multi_reduction <minimumf>, %906, %cst_168 [2] : vector<1x8x128xf32> to vector<1x8xf32>
    %908 = vector.shape_cast %907 : vector<1x8xf32> to vector<1x8x1xf32>
    %909 = vector.broadcast %908 : vector<1x8x1xf32> to vector<1x8x128xf32>
    %910 = arith.cmpf ole, %906, %909 : vector<1x8x128xf32>
    %911 = vector.shape_cast %7 : vector<1x1x128xi32> to vector<1x1x128xi32>
    %912 = vector.broadcast %911 : vector<1x1x128xi32> to vector<1x8x128xi32>
    %913 = vector.broadcast %c128_i32_78 : i32 to vector<1x8x128xi32>
    %914 = arith.select %910, %912, %913 : vector<1x8x128xi1>, vector<1x8x128xi32>
    %cst_169 = arith.constant dense<2147483647> : vector<1x8xi32>
    %915 = vector.multi_reduction <minsi>, %914, %cst_169 [2] : vector<1x8x128xi32> to vector<1x8xi32>
    %916 = vector.shape_cast %915 : vector<1x8xi32> to vector<1x8x1xi32>
    %917 = vector.broadcast %7 : vector<1x1x128xi32> to vector<1x8x128xi32>
    %918 = vector.broadcast %916 : vector<1x8x1xi32> to vector<1x8x128xi32>
    %919 = arith.cmpi eq, %917, %918 : vector<1x8x128xi32>
    %cst_170 = arith.constant 0.000000e+00 : f32
    %920 = vector.shape_cast %354 : vector<1x1x128xf32> to vector<1x1x128xf32>
    %921 = vector.broadcast %920 : vector<1x1x128xf32> to vector<1x8x128xf32>
    %922 = vector.broadcast %cst_170 : f32 to vector<1x8x128xf32>
    %923 = arith.select %919, %921, %922 : vector<1x8x128xi1>, vector<1x8x128xf32>
    %cst_171 = arith.constant dense<0.000000e+00> : vector<1x8xf32>
    %924 = vector.multi_reduction <add>, %923, %cst_171 [2] : vector<1x8x128xf32> to vector<1x8xf32>
    %925 = vector.shape_cast %924 : vector<1x8xf32> to vector<1x8x1xf32>
    %926 = arith.subf %925, %357 : vector<1x8x1xf32>
    %cst_172 = arith.constant 0.000000e+00 : f32
    %927 = vector.shape_cast %355 : vector<1x1x128xf32> to vector<1x1x128xf32>
    %928 = vector.broadcast %927 : vector<1x1x128xf32> to vector<1x8x128xf32>
    %929 = vector.broadcast %cst_172 : f32 to vector<1x8x128xf32>
    %930 = arith.select %919, %928, %929 : vector<1x8x128xi1>, vector<1x8x128xf32>
    %cst_173 = arith.constant dense<0.000000e+00> : vector<1x8xf32>
    %931 = vector.multi_reduction <add>, %930, %cst_173 [2] : vector<1x8x128xf32> to vector<1x8xf32>
    %932 = vector.shape_cast %931 : vector<1x8xf32> to vector<1x8x1xf32>
    %933 = arith.subf %932, %358 : vector<1x8x1xf32>
    %cst_174 = arith.constant 0.000000e+00 : f32
    %934 = vector.shape_cast %356 : vector<1x1x128xf32> to vector<1x1x128xf32>
    %935 = vector.broadcast %934 : vector<1x1x128xf32> to vector<1x8x128xf32>
    %936 = vector.broadcast %cst_174 : f32 to vector<1x8x128xf32>
    %937 = arith.select %919, %935, %936 : vector<1x8x128xi1>, vector<1x8x128xf32>
    %cst_175 = arith.constant dense<0.000000e+00> : vector<1x8xf32>
    %938 = vector.multi_reduction <add>, %937, %cst_175 [2] : vector<1x8x128xf32> to vector<1x8xf32>
    %939 = vector.shape_cast %938 : vector<1x8xf32> to vector<1x8x1xf32>
    %940 = arith.subf %939, %359 : vector<1x8x1xf32>
    %941 = vector.broadcast %c10_i32 : i32 to vector<1x1x16xi32>
    %942 = arith.cmpi eq, %9, %941 : vector<1x1x16xi32>
    %943 = vector.shape_cast %942 : vector<1x1x16xi1> to vector<1x1x16xi1>
    %944 = vector.broadcast %943 : vector<1x1x16xi1> to vector<1x8x16xi1>
    %945 = vector.shape_cast %926 : vector<1x8x1xf32> to vector<1x8x1xf32>
    %946 = vector.broadcast %945 : vector<1x8x1xf32> to vector<1x8x16xf32>
    %947 = arith.select %944, %946, %894 : vector<1x8x16xi1>, vector<1x8x16xf32>
    %948 = vector.shape_cast %942 : vector<1x1x16xi1> to vector<1x1x16xi1>
    %949 = vector.broadcast %948 : vector<1x1x16xi1> to vector<1x8x16xi1>
    %950 = vector.shape_cast %933 : vector<1x8x1xf32> to vector<1x8x1xf32>
    %951 = vector.broadcast %950 : vector<1x8x1xf32> to vector<1x8x16xf32>
    %952 = arith.select %949, %951, %899 : vector<1x8x16xi1>, vector<1x8x16xf32>
    %953 = vector.shape_cast %942 : vector<1x1x16xi1> to vector<1x1x16xi1>
    %954 = vector.broadcast %953 : vector<1x1x16xi1> to vector<1x8x16xi1>
    %955 = vector.shape_cast %940 : vector<1x8x1xf32> to vector<1x8x1xf32>
    %956 = vector.broadcast %955 : vector<1x8x1xf32> to vector<1x8x16xf32>
    %957 = arith.select %954, %956, %904 : vector<1x8x16xi1>, vector<1x8x16xf32>
    %958 = vector.broadcast %cst_79 : f32 to vector<1x8x128xf32>
    %959 = arith.select %919, %958, %906 : vector<1x8x128xi1>, vector<1x8x128xf32>
    %c11_i32 = arith.constant 11 : i32
    %cst_176 = arith.constant dense<0x7F800000> : vector<1x8xf32>
    %960 = vector.multi_reduction <minimumf>, %959, %cst_176 [2] : vector<1x8x128xf32> to vector<1x8xf32>
    %961 = vector.shape_cast %960 : vector<1x8xf32> to vector<1x8x1xf32>
    %962 = vector.broadcast %961 : vector<1x8x1xf32> to vector<1x8x128xf32>
    %963 = arith.cmpf ole, %959, %962 : vector<1x8x128xf32>
    %964 = vector.shape_cast %7 : vector<1x1x128xi32> to vector<1x1x128xi32>
    %965 = vector.broadcast %964 : vector<1x1x128xi32> to vector<1x8x128xi32>
    %966 = vector.broadcast %c128_i32_78 : i32 to vector<1x8x128xi32>
    %967 = arith.select %963, %965, %966 : vector<1x8x128xi1>, vector<1x8x128xi32>
    %cst_177 = arith.constant dense<2147483647> : vector<1x8xi32>
    %968 = vector.multi_reduction <minsi>, %967, %cst_177 [2] : vector<1x8x128xi32> to vector<1x8xi32>
    %969 = vector.shape_cast %968 : vector<1x8xi32> to vector<1x8x1xi32>
    %970 = vector.broadcast %7 : vector<1x1x128xi32> to vector<1x8x128xi32>
    %971 = vector.broadcast %969 : vector<1x8x1xi32> to vector<1x8x128xi32>
    %972 = arith.cmpi eq, %970, %971 : vector<1x8x128xi32>
    %cst_178 = arith.constant 0.000000e+00 : f32
    %973 = vector.shape_cast %354 : vector<1x1x128xf32> to vector<1x1x128xf32>
    %974 = vector.broadcast %973 : vector<1x1x128xf32> to vector<1x8x128xf32>
    %975 = vector.broadcast %cst_178 : f32 to vector<1x8x128xf32>
    %976 = arith.select %972, %974, %975 : vector<1x8x128xi1>, vector<1x8x128xf32>
    %cst_179 = arith.constant dense<0.000000e+00> : vector<1x8xf32>
    %977 = vector.multi_reduction <add>, %976, %cst_179 [2] : vector<1x8x128xf32> to vector<1x8xf32>
    %978 = vector.shape_cast %977 : vector<1x8xf32> to vector<1x8x1xf32>
    %979 = arith.subf %978, %357 : vector<1x8x1xf32>
    %cst_180 = arith.constant 0.000000e+00 : f32
    %980 = vector.shape_cast %355 : vector<1x1x128xf32> to vector<1x1x128xf32>
    %981 = vector.broadcast %980 : vector<1x1x128xf32> to vector<1x8x128xf32>
    %982 = vector.broadcast %cst_180 : f32 to vector<1x8x128xf32>
    %983 = arith.select %972, %981, %982 : vector<1x8x128xi1>, vector<1x8x128xf32>
    %cst_181 = arith.constant dense<0.000000e+00> : vector<1x8xf32>
    %984 = vector.multi_reduction <add>, %983, %cst_181 [2] : vector<1x8x128xf32> to vector<1x8xf32>
    %985 = vector.shape_cast %984 : vector<1x8xf32> to vector<1x8x1xf32>
    %986 = arith.subf %985, %358 : vector<1x8x1xf32>
    %cst_182 = arith.constant 0.000000e+00 : f32
    %987 = vector.shape_cast %356 : vector<1x1x128xf32> to vector<1x1x128xf32>
    %988 = vector.broadcast %987 : vector<1x1x128xf32> to vector<1x8x128xf32>
    %989 = vector.broadcast %cst_182 : f32 to vector<1x8x128xf32>
    %990 = arith.select %972, %988, %989 : vector<1x8x128xi1>, vector<1x8x128xf32>
    %cst_183 = arith.constant dense<0.000000e+00> : vector<1x8xf32>
    %991 = vector.multi_reduction <add>, %990, %cst_183 [2] : vector<1x8x128xf32> to vector<1x8xf32>
    %992 = vector.shape_cast %991 : vector<1x8xf32> to vector<1x8x1xf32>
    %993 = arith.subf %992, %359 : vector<1x8x1xf32>
    %994 = vector.broadcast %c11_i32 : i32 to vector<1x1x16xi32>
    %995 = arith.cmpi eq, %9, %994 : vector<1x1x16xi32>
    %996 = vector.shape_cast %995 : vector<1x1x16xi1> to vector<1x1x16xi1>
    %997 = vector.broadcast %996 : vector<1x1x16xi1> to vector<1x8x16xi1>
    %998 = vector.shape_cast %979 : vector<1x8x1xf32> to vector<1x8x1xf32>
    %999 = vector.broadcast %998 : vector<1x8x1xf32> to vector<1x8x16xf32>
    %1000 = arith.select %997, %999, %947 : vector<1x8x16xi1>, vector<1x8x16xf32>
    %1001 = vector.shape_cast %995 : vector<1x1x16xi1> to vector<1x1x16xi1>
    %1002 = vector.broadcast %1001 : vector<1x1x16xi1> to vector<1x8x16xi1>
    %1003 = vector.shape_cast %986 : vector<1x8x1xf32> to vector<1x8x1xf32>
    %1004 = vector.broadcast %1003 : vector<1x8x1xf32> to vector<1x8x16xf32>
    %1005 = arith.select %1002, %1004, %952 : vector<1x8x16xi1>, vector<1x8x16xf32>
    %1006 = vector.shape_cast %995 : vector<1x1x16xi1> to vector<1x1x16xi1>
    %1007 = vector.broadcast %1006 : vector<1x1x16xi1> to vector<1x8x16xi1>
    %1008 = vector.shape_cast %993 : vector<1x8x1xf32> to vector<1x8x1xf32>
    %1009 = vector.broadcast %1008 : vector<1x8x1xf32> to vector<1x8x16xf32>
    %1010 = arith.select %1007, %1009, %957 : vector<1x8x16xi1>, vector<1x8x16xf32>
    %1011 = vector.broadcast %cst_79 : f32 to vector<1x8x128xf32>
    %1012 = arith.select %972, %1011, %959 : vector<1x8x128xi1>, vector<1x8x128xf32>
    %c12_i32 = arith.constant 12 : i32
    %cst_184 = arith.constant dense<0x7F800000> : vector<1x8xf32>
    %1013 = vector.multi_reduction <minimumf>, %1012, %cst_184 [2] : vector<1x8x128xf32> to vector<1x8xf32>
    %1014 = vector.shape_cast %1013 : vector<1x8xf32> to vector<1x8x1xf32>
    %1015 = vector.broadcast %1014 : vector<1x8x1xf32> to vector<1x8x128xf32>
    %1016 = arith.cmpf ole, %1012, %1015 : vector<1x8x128xf32>
    %1017 = vector.shape_cast %7 : vector<1x1x128xi32> to vector<1x1x128xi32>
    %1018 = vector.broadcast %1017 : vector<1x1x128xi32> to vector<1x8x128xi32>
    %1019 = vector.broadcast %c128_i32_78 : i32 to vector<1x8x128xi32>
    %1020 = arith.select %1016, %1018, %1019 : vector<1x8x128xi1>, vector<1x8x128xi32>
    %cst_185 = arith.constant dense<2147483647> : vector<1x8xi32>
    %1021 = vector.multi_reduction <minsi>, %1020, %cst_185 [2] : vector<1x8x128xi32> to vector<1x8xi32>
    %1022 = vector.shape_cast %1021 : vector<1x8xi32> to vector<1x8x1xi32>
    %1023 = vector.broadcast %7 : vector<1x1x128xi32> to vector<1x8x128xi32>
    %1024 = vector.broadcast %1022 : vector<1x8x1xi32> to vector<1x8x128xi32>
    %1025 = arith.cmpi eq, %1023, %1024 : vector<1x8x128xi32>
    %cst_186 = arith.constant 0.000000e+00 : f32
    %1026 = vector.shape_cast %354 : vector<1x1x128xf32> to vector<1x1x128xf32>
    %1027 = vector.broadcast %1026 : vector<1x1x128xf32> to vector<1x8x128xf32>
    %1028 = vector.broadcast %cst_186 : f32 to vector<1x8x128xf32>
    %1029 = arith.select %1025, %1027, %1028 : vector<1x8x128xi1>, vector<1x8x128xf32>
    %cst_187 = arith.constant dense<0.000000e+00> : vector<1x8xf32>
    %1030 = vector.multi_reduction <add>, %1029, %cst_187 [2] : vector<1x8x128xf32> to vector<1x8xf32>
    %1031 = vector.shape_cast %1030 : vector<1x8xf32> to vector<1x8x1xf32>
    %1032 = arith.subf %1031, %357 : vector<1x8x1xf32>
    %cst_188 = arith.constant 0.000000e+00 : f32
    %1033 = vector.shape_cast %355 : vector<1x1x128xf32> to vector<1x1x128xf32>
    %1034 = vector.broadcast %1033 : vector<1x1x128xf32> to vector<1x8x128xf32>
    %1035 = vector.broadcast %cst_188 : f32 to vector<1x8x128xf32>
    %1036 = arith.select %1025, %1034, %1035 : vector<1x8x128xi1>, vector<1x8x128xf32>
    %cst_189 = arith.constant dense<0.000000e+00> : vector<1x8xf32>
    %1037 = vector.multi_reduction <add>, %1036, %cst_189 [2] : vector<1x8x128xf32> to vector<1x8xf32>
    %1038 = vector.shape_cast %1037 : vector<1x8xf32> to vector<1x8x1xf32>
    %1039 = arith.subf %1038, %358 : vector<1x8x1xf32>
    %cst_190 = arith.constant 0.000000e+00 : f32
    %1040 = vector.shape_cast %356 : vector<1x1x128xf32> to vector<1x1x128xf32>
    %1041 = vector.broadcast %1040 : vector<1x1x128xf32> to vector<1x8x128xf32>
    %1042 = vector.broadcast %cst_190 : f32 to vector<1x8x128xf32>
    %1043 = arith.select %1025, %1041, %1042 : vector<1x8x128xi1>, vector<1x8x128xf32>
    %cst_191 = arith.constant dense<0.000000e+00> : vector<1x8xf32>
    %1044 = vector.multi_reduction <add>, %1043, %cst_191 [2] : vector<1x8x128xf32> to vector<1x8xf32>
    %1045 = vector.shape_cast %1044 : vector<1x8xf32> to vector<1x8x1xf32>
    %1046 = arith.subf %1045, %359 : vector<1x8x1xf32>
    %1047 = vector.broadcast %c12_i32 : i32 to vector<1x1x16xi32>
    %1048 = arith.cmpi eq, %9, %1047 : vector<1x1x16xi32>
    %1049 = vector.shape_cast %1048 : vector<1x1x16xi1> to vector<1x1x16xi1>
    %1050 = vector.broadcast %1049 : vector<1x1x16xi1> to vector<1x8x16xi1>
    %1051 = vector.shape_cast %1032 : vector<1x8x1xf32> to vector<1x8x1xf32>
    %1052 = vector.broadcast %1051 : vector<1x8x1xf32> to vector<1x8x16xf32>
    %1053 = arith.select %1050, %1052, %1000 : vector<1x8x16xi1>, vector<1x8x16xf32>
    %1054 = vector.shape_cast %1048 : vector<1x1x16xi1> to vector<1x1x16xi1>
    %1055 = vector.broadcast %1054 : vector<1x1x16xi1> to vector<1x8x16xi1>
    %1056 = vector.shape_cast %1039 : vector<1x8x1xf32> to vector<1x8x1xf32>
    %1057 = vector.broadcast %1056 : vector<1x8x1xf32> to vector<1x8x16xf32>
    %1058 = arith.select %1055, %1057, %1005 : vector<1x8x16xi1>, vector<1x8x16xf32>
    %1059 = vector.shape_cast %1048 : vector<1x1x16xi1> to vector<1x1x16xi1>
    %1060 = vector.broadcast %1059 : vector<1x1x16xi1> to vector<1x8x16xi1>
    %1061 = vector.shape_cast %1046 : vector<1x8x1xf32> to vector<1x8x1xf32>
    %1062 = vector.broadcast %1061 : vector<1x8x1xf32> to vector<1x8x16xf32>
    %1063 = arith.select %1060, %1062, %1010 : vector<1x8x16xi1>, vector<1x8x16xf32>
    %1064 = vector.broadcast %cst_79 : f32 to vector<1x8x128xf32>
    %1065 = arith.select %1025, %1064, %1012 : vector<1x8x128xi1>, vector<1x8x128xf32>
    %c13_i32 = arith.constant 13 : i32
    %cst_192 = arith.constant dense<0x7F800000> : vector<1x8xf32>
    %1066 = vector.multi_reduction <minimumf>, %1065, %cst_192 [2] : vector<1x8x128xf32> to vector<1x8xf32>
    %1067 = vector.shape_cast %1066 : vector<1x8xf32> to vector<1x8x1xf32>
    %1068 = vector.broadcast %1067 : vector<1x8x1xf32> to vector<1x8x128xf32>
    %1069 = arith.cmpf ole, %1065, %1068 : vector<1x8x128xf32>
    %1070 = vector.shape_cast %7 : vector<1x1x128xi32> to vector<1x1x128xi32>
    %1071 = vector.broadcast %1070 : vector<1x1x128xi32> to vector<1x8x128xi32>
    %1072 = vector.broadcast %c128_i32_78 : i32 to vector<1x8x128xi32>
    %1073 = arith.select %1069, %1071, %1072 : vector<1x8x128xi1>, vector<1x8x128xi32>
    %cst_193 = arith.constant dense<2147483647> : vector<1x8xi32>
    %1074 = vector.multi_reduction <minsi>, %1073, %cst_193 [2] : vector<1x8x128xi32> to vector<1x8xi32>
    %1075 = vector.shape_cast %1074 : vector<1x8xi32> to vector<1x8x1xi32>
    %1076 = vector.broadcast %7 : vector<1x1x128xi32> to vector<1x8x128xi32>
    %1077 = vector.broadcast %1075 : vector<1x8x1xi32> to vector<1x8x128xi32>
    %1078 = arith.cmpi eq, %1076, %1077 : vector<1x8x128xi32>
    %cst_194 = arith.constant 0.000000e+00 : f32
    %1079 = vector.shape_cast %354 : vector<1x1x128xf32> to vector<1x1x128xf32>
    %1080 = vector.broadcast %1079 : vector<1x1x128xf32> to vector<1x8x128xf32>
    %1081 = vector.broadcast %cst_194 : f32 to vector<1x8x128xf32>
    %1082 = arith.select %1078, %1080, %1081 : vector<1x8x128xi1>, vector<1x8x128xf32>
    %cst_195 = arith.constant dense<0.000000e+00> : vector<1x8xf32>
    %1083 = vector.multi_reduction <add>, %1082, %cst_195 [2] : vector<1x8x128xf32> to vector<1x8xf32>
    %1084 = vector.shape_cast %1083 : vector<1x8xf32> to vector<1x8x1xf32>
    %1085 = arith.subf %1084, %357 : vector<1x8x1xf32>
    %cst_196 = arith.constant 0.000000e+00 : f32
    %1086 = vector.shape_cast %355 : vector<1x1x128xf32> to vector<1x1x128xf32>
    %1087 = vector.broadcast %1086 : vector<1x1x128xf32> to vector<1x8x128xf32>
    %1088 = vector.broadcast %cst_196 : f32 to vector<1x8x128xf32>
    %1089 = arith.select %1078, %1087, %1088 : vector<1x8x128xi1>, vector<1x8x128xf32>
    %cst_197 = arith.constant dense<0.000000e+00> : vector<1x8xf32>
    %1090 = vector.multi_reduction <add>, %1089, %cst_197 [2] : vector<1x8x128xf32> to vector<1x8xf32>
    %1091 = vector.shape_cast %1090 : vector<1x8xf32> to vector<1x8x1xf32>
    %1092 = arith.subf %1091, %358 : vector<1x8x1xf32>
    %cst_198 = arith.constant 0.000000e+00 : f32
    %1093 = vector.shape_cast %356 : vector<1x1x128xf32> to vector<1x1x128xf32>
    %1094 = vector.broadcast %1093 : vector<1x1x128xf32> to vector<1x8x128xf32>
    %1095 = vector.broadcast %cst_198 : f32 to vector<1x8x128xf32>
    %1096 = arith.select %1078, %1094, %1095 : vector<1x8x128xi1>, vector<1x8x128xf32>
    %cst_199 = arith.constant dense<0.000000e+00> : vector<1x8xf32>
    %1097 = vector.multi_reduction <add>, %1096, %cst_199 [2] : vector<1x8x128xf32> to vector<1x8xf32>
    %1098 = vector.shape_cast %1097 : vector<1x8xf32> to vector<1x8x1xf32>
    %1099 = arith.subf %1098, %359 : vector<1x8x1xf32>
    %1100 = vector.broadcast %c13_i32 : i32 to vector<1x1x16xi32>
    %1101 = arith.cmpi eq, %9, %1100 : vector<1x1x16xi32>
    %1102 = vector.shape_cast %1101 : vector<1x1x16xi1> to vector<1x1x16xi1>
    %1103 = vector.broadcast %1102 : vector<1x1x16xi1> to vector<1x8x16xi1>
    %1104 = vector.shape_cast %1085 : vector<1x8x1xf32> to vector<1x8x1xf32>
    %1105 = vector.broadcast %1104 : vector<1x8x1xf32> to vector<1x8x16xf32>
    %1106 = arith.select %1103, %1105, %1053 : vector<1x8x16xi1>, vector<1x8x16xf32>
    %1107 = vector.shape_cast %1101 : vector<1x1x16xi1> to vector<1x1x16xi1>
    %1108 = vector.broadcast %1107 : vector<1x1x16xi1> to vector<1x8x16xi1>
    %1109 = vector.shape_cast %1092 : vector<1x8x1xf32> to vector<1x8x1xf32>
    %1110 = vector.broadcast %1109 : vector<1x8x1xf32> to vector<1x8x16xf32>
    %1111 = arith.select %1108, %1110, %1058 : vector<1x8x16xi1>, vector<1x8x16xf32>
    %1112 = vector.shape_cast %1101 : vector<1x1x16xi1> to vector<1x1x16xi1>
    %1113 = vector.broadcast %1112 : vector<1x1x16xi1> to vector<1x8x16xi1>
    %1114 = vector.shape_cast %1099 : vector<1x8x1xf32> to vector<1x8x1xf32>
    %1115 = vector.broadcast %1114 : vector<1x8x1xf32> to vector<1x8x16xf32>
    %1116 = arith.select %1113, %1115, %1063 : vector<1x8x16xi1>, vector<1x8x16xf32>
    %1117 = vector.broadcast %cst_79 : f32 to vector<1x8x128xf32>
    %1118 = arith.select %1078, %1117, %1065 : vector<1x8x128xi1>, vector<1x8x128xf32>
    %c14_i32 = arith.constant 14 : i32
    %cst_200 = arith.constant dense<0x7F800000> : vector<1x8xf32>
    %1119 = vector.multi_reduction <minimumf>, %1118, %cst_200 [2] : vector<1x8x128xf32> to vector<1x8xf32>
    %1120 = vector.shape_cast %1119 : vector<1x8xf32> to vector<1x8x1xf32>
    %1121 = vector.broadcast %1120 : vector<1x8x1xf32> to vector<1x8x128xf32>
    %1122 = arith.cmpf ole, %1118, %1121 : vector<1x8x128xf32>
    %1123 = vector.shape_cast %7 : vector<1x1x128xi32> to vector<1x1x128xi32>
    %1124 = vector.broadcast %1123 : vector<1x1x128xi32> to vector<1x8x128xi32>
    %1125 = vector.broadcast %c128_i32_78 : i32 to vector<1x8x128xi32>
    %1126 = arith.select %1122, %1124, %1125 : vector<1x8x128xi1>, vector<1x8x128xi32>
    %cst_201 = arith.constant dense<2147483647> : vector<1x8xi32>
    %1127 = vector.multi_reduction <minsi>, %1126, %cst_201 [2] : vector<1x8x128xi32> to vector<1x8xi32>
    %1128 = vector.shape_cast %1127 : vector<1x8xi32> to vector<1x8x1xi32>
    %1129 = vector.broadcast %7 : vector<1x1x128xi32> to vector<1x8x128xi32>
    %1130 = vector.broadcast %1128 : vector<1x8x1xi32> to vector<1x8x128xi32>
    %1131 = arith.cmpi eq, %1129, %1130 : vector<1x8x128xi32>
    %cst_202 = arith.constant 0.000000e+00 : f32
    %1132 = vector.shape_cast %354 : vector<1x1x128xf32> to vector<1x1x128xf32>
    %1133 = vector.broadcast %1132 : vector<1x1x128xf32> to vector<1x8x128xf32>
    %1134 = vector.broadcast %cst_202 : f32 to vector<1x8x128xf32>
    %1135 = arith.select %1131, %1133, %1134 : vector<1x8x128xi1>, vector<1x8x128xf32>
    %cst_203 = arith.constant dense<0.000000e+00> : vector<1x8xf32>
    %1136 = vector.multi_reduction <add>, %1135, %cst_203 [2] : vector<1x8x128xf32> to vector<1x8xf32>
    %1137 = vector.shape_cast %1136 : vector<1x8xf32> to vector<1x8x1xf32>
    %1138 = arith.subf %1137, %357 : vector<1x8x1xf32>
    %cst_204 = arith.constant 0.000000e+00 : f32
    %1139 = vector.shape_cast %355 : vector<1x1x128xf32> to vector<1x1x128xf32>
    %1140 = vector.broadcast %1139 : vector<1x1x128xf32> to vector<1x8x128xf32>
    %1141 = vector.broadcast %cst_204 : f32 to vector<1x8x128xf32>
    %1142 = arith.select %1131, %1140, %1141 : vector<1x8x128xi1>, vector<1x8x128xf32>
    %cst_205 = arith.constant dense<0.000000e+00> : vector<1x8xf32>
    %1143 = vector.multi_reduction <add>, %1142, %cst_205 [2] : vector<1x8x128xf32> to vector<1x8xf32>
    %1144 = vector.shape_cast %1143 : vector<1x8xf32> to vector<1x8x1xf32>
    %1145 = arith.subf %1144, %358 : vector<1x8x1xf32>
    %cst_206 = arith.constant 0.000000e+00 : f32
    %1146 = vector.shape_cast %356 : vector<1x1x128xf32> to vector<1x1x128xf32>
    %1147 = vector.broadcast %1146 : vector<1x1x128xf32> to vector<1x8x128xf32>
    %1148 = vector.broadcast %cst_206 : f32 to vector<1x8x128xf32>
    %1149 = arith.select %1131, %1147, %1148 : vector<1x8x128xi1>, vector<1x8x128xf32>
    %cst_207 = arith.constant dense<0.000000e+00> : vector<1x8xf32>
    %1150 = vector.multi_reduction <add>, %1149, %cst_207 [2] : vector<1x8x128xf32> to vector<1x8xf32>
    %1151 = vector.shape_cast %1150 : vector<1x8xf32> to vector<1x8x1xf32>
    %1152 = arith.subf %1151, %359 : vector<1x8x1xf32>
    %1153 = vector.broadcast %c14_i32 : i32 to vector<1x1x16xi32>
    %1154 = arith.cmpi eq, %9, %1153 : vector<1x1x16xi32>
    %1155 = vector.shape_cast %1154 : vector<1x1x16xi1> to vector<1x1x16xi1>
    %1156 = vector.broadcast %1155 : vector<1x1x16xi1> to vector<1x8x16xi1>
    %1157 = vector.shape_cast %1138 : vector<1x8x1xf32> to vector<1x8x1xf32>
    %1158 = vector.broadcast %1157 : vector<1x8x1xf32> to vector<1x8x16xf32>
    %1159 = arith.select %1156, %1158, %1106 : vector<1x8x16xi1>, vector<1x8x16xf32>
    %1160 = vector.shape_cast %1154 : vector<1x1x16xi1> to vector<1x1x16xi1>
    %1161 = vector.broadcast %1160 : vector<1x1x16xi1> to vector<1x8x16xi1>
    %1162 = vector.shape_cast %1145 : vector<1x8x1xf32> to vector<1x8x1xf32>
    %1163 = vector.broadcast %1162 : vector<1x8x1xf32> to vector<1x8x16xf32>
    %1164 = arith.select %1161, %1163, %1111 : vector<1x8x16xi1>, vector<1x8x16xf32>
    %1165 = vector.shape_cast %1154 : vector<1x1x16xi1> to vector<1x1x16xi1>
    %1166 = vector.broadcast %1165 : vector<1x1x16xi1> to vector<1x8x16xi1>
    %1167 = vector.shape_cast %1152 : vector<1x8x1xf32> to vector<1x8x1xf32>
    %1168 = vector.broadcast %1167 : vector<1x8x1xf32> to vector<1x8x16xf32>
    %1169 = arith.select %1166, %1168, %1116 : vector<1x8x16xi1>, vector<1x8x16xf32>
    %1170 = vector.broadcast %cst_79 : f32 to vector<1x8x128xf32>
    %1171 = arith.select %1131, %1170, %1118 : vector<1x8x128xi1>, vector<1x8x128xf32>
    %c15_i32 = arith.constant 15 : i32
    %cst_208 = arith.constant dense<0x7F800000> : vector<1x8xf32>
    %1172 = vector.multi_reduction <minimumf>, %1171, %cst_208 [2] : vector<1x8x128xf32> to vector<1x8xf32>
    %1173 = vector.shape_cast %1172 : vector<1x8xf32> to vector<1x8x1xf32>
    %1174 = vector.broadcast %1173 : vector<1x8x1xf32> to vector<1x8x128xf32>
    %1175 = arith.cmpf ole, %1171, %1174 : vector<1x8x128xf32>
    %1176 = vector.shape_cast %7 : vector<1x1x128xi32> to vector<1x1x128xi32>
    %1177 = vector.broadcast %1176 : vector<1x1x128xi32> to vector<1x8x128xi32>
    %1178 = vector.broadcast %c128_i32_78 : i32 to vector<1x8x128xi32>
    %1179 = arith.select %1175, %1177, %1178 : vector<1x8x128xi1>, vector<1x8x128xi32>
    %cst_209 = arith.constant dense<2147483647> : vector<1x8xi32>
    %1180 = vector.multi_reduction <minsi>, %1179, %cst_209 [2] : vector<1x8x128xi32> to vector<1x8xi32>
    %1181 = vector.shape_cast %1180 : vector<1x8xi32> to vector<1x8x1xi32>
    %1182 = vector.broadcast %7 : vector<1x1x128xi32> to vector<1x8x128xi32>
    %1183 = vector.broadcast %1181 : vector<1x8x1xi32> to vector<1x8x128xi32>
    %1184 = arith.cmpi eq, %1182, %1183 : vector<1x8x128xi32>
    %cst_210 = arith.constant 0.000000e+00 : f32
    %1185 = vector.shape_cast %354 : vector<1x1x128xf32> to vector<1x1x128xf32>
    %1186 = vector.broadcast %1185 : vector<1x1x128xf32> to vector<1x8x128xf32>
    %1187 = vector.broadcast %cst_210 : f32 to vector<1x8x128xf32>
    %1188 = arith.select %1184, %1186, %1187 : vector<1x8x128xi1>, vector<1x8x128xf32>
    %cst_211 = arith.constant dense<0.000000e+00> : vector<1x8xf32>
    %1189 = vector.multi_reduction <add>, %1188, %cst_211 [2] : vector<1x8x128xf32> to vector<1x8xf32>
    %1190 = vector.shape_cast %1189 : vector<1x8xf32> to vector<1x8x1xf32>
    %1191 = arith.subf %1190, %357 : vector<1x8x1xf32>
    %cst_212 = arith.constant 0.000000e+00 : f32
    %1192 = vector.shape_cast %355 : vector<1x1x128xf32> to vector<1x1x128xf32>
    %1193 = vector.broadcast %1192 : vector<1x1x128xf32> to vector<1x8x128xf32>
    %1194 = vector.broadcast %cst_212 : f32 to vector<1x8x128xf32>
    %1195 = arith.select %1184, %1193, %1194 : vector<1x8x128xi1>, vector<1x8x128xf32>
    %cst_213 = arith.constant dense<0.000000e+00> : vector<1x8xf32>
    %1196 = vector.multi_reduction <add>, %1195, %cst_213 [2] : vector<1x8x128xf32> to vector<1x8xf32>
    %1197 = vector.shape_cast %1196 : vector<1x8xf32> to vector<1x8x1xf32>
    %1198 = arith.subf %1197, %358 : vector<1x8x1xf32>
    %cst_214 = arith.constant 0.000000e+00 : f32
    %1199 = vector.shape_cast %356 : vector<1x1x128xf32> to vector<1x1x128xf32>
    %1200 = vector.broadcast %1199 : vector<1x1x128xf32> to vector<1x8x128xf32>
    %1201 = vector.broadcast %cst_214 : f32 to vector<1x8x128xf32>
    %1202 = arith.select %1184, %1200, %1201 : vector<1x8x128xi1>, vector<1x8x128xf32>
    %cst_215 = arith.constant dense<0.000000e+00> : vector<1x8xf32>
    %1203 = vector.multi_reduction <add>, %1202, %cst_215 [2] : vector<1x8x128xf32> to vector<1x8xf32>
    %1204 = vector.shape_cast %1203 : vector<1x8xf32> to vector<1x8x1xf32>
    %1205 = arith.subf %1204, %359 : vector<1x8x1xf32>
    %1206 = vector.broadcast %c15_i32 : i32 to vector<1x1x16xi32>
    %1207 = arith.cmpi eq, %9, %1206 : vector<1x1x16xi32>
    %1208 = vector.shape_cast %1207 : vector<1x1x16xi1> to vector<1x1x16xi1>
    %1209 = vector.broadcast %1208 : vector<1x1x16xi1> to vector<1x8x16xi1>
    %1210 = vector.shape_cast %1191 : vector<1x8x1xf32> to vector<1x8x1xf32>
    %1211 = vector.broadcast %1210 : vector<1x8x1xf32> to vector<1x8x16xf32>
    %1212 = arith.select %1209, %1211, %1159 : vector<1x8x16xi1>, vector<1x8x16xf32>
    %1213 = vector.shape_cast %1207 : vector<1x1x16xi1> to vector<1x1x16xi1>
    %1214 = vector.broadcast %1213 : vector<1x1x16xi1> to vector<1x8x16xi1>
    %1215 = vector.shape_cast %1198 : vector<1x8x1xf32> to vector<1x8x1xf32>
    %1216 = vector.broadcast %1215 : vector<1x8x1xf32> to vector<1x8x16xf32>
    %1217 = arith.select %1214, %1216, %1164 : vector<1x8x16xi1>, vector<1x8x16xf32>
    %1218 = vector.shape_cast %1207 : vector<1x1x16xi1> to vector<1x1x16xi1>
    %1219 = vector.broadcast %1218 : vector<1x1x16xi1> to vector<1x8x16xi1>
    %1220 = vector.shape_cast %1205 : vector<1x8x1xf32> to vector<1x8x1xf32>
    %1221 = vector.broadcast %1220 : vector<1x8x1xf32> to vector<1x8x16xf32>
    %1222 = arith.select %1219, %1221, %1169 : vector<1x8x16xi1>, vector<1x8x16xf32>
    %1223 = vector.broadcast %cst_79 : f32 to vector<1x8x128xf32>
    %1224 = arith.select %1184, %1223, %1171 : vector<1x8x128xi1>, vector<1x8x128xf32>
    %c16_i32 = arith.constant 16 : i32
    %c0_216 = arith.constant 0 : index
    %c0_217 = arith.constant 0 : index
    %c0_218 = arith.constant 0 : index
    %c0_219 = arith.constant 0 : index
    %1225 = vector.load %arg3[%c0_216, %c0_217, %c0_218, %c0_219] : memref<1x3x8x16xf32, #tpu.memory_space<vmem>>, vector<1x1x8x16xf32>
    %1226 = vector.shape_cast %1225 : vector<1x1x8x16xf32> to vector<1x8x16xf32>
    %1227 = vector.shape_cast %1212 : vector<1x8x16xf32> to vector<1x1x8x16xf32>
    tpu.vector_store %arg3[%c0_216, %c0_217, %c0_218, %c0_219], %1227 {strides = array<i32>} : memref<1x3x8x16xf32, #tpu.memory_space<vmem>>, vector<1x1x8x16xf32>,
    %c0_220 = arith.constant 0 : index
    %c1_221 = arith.constant 1 : index
    %c0_222 = arith.constant 0 : index
    %c0_223 = arith.constant 0 : index
    %1228 = vector.load %arg3[%c0_220, %c1_221, %c0_222, %c0_223] : memref<1x3x8x16xf32, #tpu.memory_space<vmem>>, vector<1x1x8x16xf32>
    %1229 = vector.shape_cast %1228 : vector<1x1x8x16xf32> to vector<1x8x16xf32>
    %1230 = vector.shape_cast %1217 : vector<1x8x16xf32> to vector<1x1x8x16xf32>
    tpu.vector_store %arg3[%c0_220, %c1_221, %c0_222, %c0_223], %1230 {strides = array<i32>} : memref<1x3x8x16xf32, #tpu.memory_space<vmem>>, vector<1x1x8x16xf32>,
    %c0_224 = arith.constant 0 : index
    %c2_225 = arith.constant 2 : index
    %c0_226 = arith.constant 0 : index
    %c0_227 = arith.constant 0 : index
    %1231 = vector.load %arg3[%c0_224, %c2_225, %c0_226, %c0_227] : memref<1x3x8x16xf32, #tpu.memory_space<vmem>>, vector<1x1x8x16xf32>
    %1232 = vector.shape_cast %1231 : vector<1x1x8x16xf32> to vector<1x8x16xf32>
    %1233 = vector.shape_cast %1222 : vector<1x8x16xf32> to vector<1x1x8x16xf32>
    tpu.vector_store %arg3[%c0_224, %c2_225, %c0_226, %c0_227], %1233 {strides = array<i32>} : memref<1x3x8x16xf32, #tpu.memory_space<vmem>>, vector<1x1x8x16xf32>,
    return
  }
  func.func @transform_0(%arg0: i32) -> (i32, i32, i32) {
    %c0_i32 = arith.constant 0 : i32
    %c0_i32_0 = arith.constant 0 : i32
    %c0_i32_1 = arith.constant 0 : i32
    return %arg0, %c0_i32, %c0_i32_0 : i32, i32, i32
  }
  func.func @transform_1(%arg0: i32) -> (i32, i32, i32) {
    %c0_i32 = arith.constant 0 : i32
    %c0_i32_0 = arith.constant 0 : i32
    %c0_i32_1 = arith.constant 0 : i32
    return %arg0, %c0_i32, %c0_i32_0 : i32, i32, i32
  }
  func.func @transform_2(%arg0: i32) -> (i32, i32, i32, i32) {
    %c0_i32 = arith.constant 0 : i32
    %c0_i32_0 = arith.constant 0 : i32
    %c0_i32_1 = arith.constant 0 : i32
    %c0_i32_2 = arith.constant 0 : i32
    return %arg0, %c0_i32, %c0_i32_0, %c0_i32_1 : i32, i32, i32, i32
  }
}

</mosaic_0001>

<llo_original>
// kernel: group_forward.1
$region0: #{group_forward.1}
  #allocation0 [shape = 'u32[]', space=smem, size = 0x4, offset = 0x4, fixed_abs, tag = 'smem constant byte address 0x4 - core index']
  #allocation1 [shape = 'u32[144,128]{1,0:T(1,128)}', space=vmem, size = 0x12000, scoped, tag = 'internal scratch']
  %s0 = inlined_call_operand.vmem [shape: f32[2,3,128], index: 0, kind: input, shape index: {}]
  %s1 = inlined_call_operand.vmem [shape: f32[2,3,8], index: 1, kind: output, shape index: {0}]
  %s2 = inlined_call_operand.hbm [shape: f32[2,3,8,16], index: 2, kind: output, shape index: {1}]
  %3 = xla_tuple %s1, %s2
  %s4 = sld [smem:[#allocation0]]
  $region45: #{group_forward.1} parent=0
    _
  %s6 = ssub.s32 1, %s4
  %s7 = scalar_select 0, %s6, %s4
  $region1: #{group_forward.1} parent=0
    #allocation2 [shape = 'u8[24576]{0}', space=vmem, size = 0x6000, scoped, tag = 'output window, operand 1']
    #allocation3 [shape = 's32[2]{0}', space=sflag, size = 0x8, scoped, tag = 'scoped memory for group_forward.1']
    %8 = vsyncpa [#allocation3], 0
    %s9 = scalar_lea.sflag [#allocation3], 1
    %10 = vsyncpa %s9, 0
    loop: start=0, step=1, limit=4
    $region2: #{group_forward.1} parent=1 // loop_pre_header
      _
    $region3: #{group_forward.1} parent=1 // loop_header
      %s12 = sphi 0, %s16
      %p13 = scmp.ge.s32.totalorder %s12, 4
      %s22 = sphi 0, %s24
      %s25 = sphi 0, %s22
      %s26 = sphi 0, %s25
      %s42 = sphi 0, %s26
      %s48 = sphi 0, %s50
      %s51 = sphi 0, %s48
      %s52 = sphi 0, %s51
      %s68 = sphi 0, %s52
      %s74 = sphi 0, %s76
      %s77 = sphi 0, %s74
      %s78 = sphi 0, %s77
      %s94 = sphi 0, %s78
    $region4: #{group_forward.1} parent=1 // loop_header_branch
      %15 = sbr.rel (%p13) target = $region8
    $region5: #{group_forward.1} parent=1 // loop_body
      %s17 = ssub.s32 %s12, 1
      %s18 = ssub.s32 %s12, 2
      %s19 = sadd.s32 %s12, 1
      %s20 = ssub.s32 %s12, %s19
      %p21 = scmp.eq.s32.totalorder %s20, 0
      %s23 = sadd.s32 %s22, 1
      %s24 = scalar_select %p21, %s22, %s23
      %p27 = pneg %p21
      %p28 = scmp.eq.s32.totalorder %s12, 1
      %p29 = por %p27, %p28
      %p30 = scmp.ne.s32.totalorder %s22, %s25
      %p31 = scmp.eq.s32.totalorder %s12, 0
      %p32 = por %p30, %p31
      %p33 = scmp.ne.s32.totalorder %s22, %s25
      %p34 = scmp.eq.s32.totalorder %s17, 1
      %p35 = por %p33, %p34
      %p36 = scmp.ne.s32.totalorder %s25, %s26
      %p37 = scmp.eq.s32.totalorder %s17, 0
      %p38 = por %p36, %p37
      %p39 = scmp.ne.s32.totalorder %s25, %s26
      %p40 = scmp.eq.s32.totalorder %s18, 1
      %p41 = por %p39, %p40
      %p43 = scmp.ne.s32.totalorder %s26, %s42
      %p44 = scmp.eq.s32.totalorder %s18, 0
      %p45 = por %p43, %p44
      %s46 = ssub.s32 %s12, %s19
      %p47 = scmp.eq.s32.totalorder %s46, 0
      %s49 = sadd.s32 %s48, 1
      %s50 = scalar_select %p47, %s48, %s49
      %p53 = pneg %p47
      %p54 = scmp.eq.s32.totalorder %s12, 1
      %p55 = por %p53, %p54
      %p56 = scmp.ne.s32.totalorder %s48, %s51
      %p57 = scmp.eq.s32.totalorder %s12, 0
      %p58 = por %p56, %p57
      %p59 = scmp.ne.s32.totalorder %s48, %s51
      %p60 = scmp.eq.s32.totalorder %s17, 1
      %p61 = por %p59, %p60
      %p62 = scmp.ne.s32.totalorder %s51, %s52
      %p63 = scmp.eq.s32.totalorder %s17, 0
      %p64 = por %p62, %p63
      %p65 = scmp.ne.s32.totalorder %s51, %s52
      %p66 = scmp.eq.s32.totalorder %s18, 1
      %p67 = por %p65, %p66
      %p69 = scmp.ne.s32.totalorder %s52, %s68
      %p70 = scmp.eq.s32.totalorder %s18, 0
      %p71 = por %p69, %p70
      %s72 = ssub.s32 %s12, %s19
      %p73 = scmp.eq.s32.totalorder %s72, 0
      %s75 = sadd.s32 %s74, 1
      %s76 = scalar_select %p73, %s74, %s75
      %p79 = pneg %p73
      %p80 = scmp.eq.s32.totalorder %s12, 1
      %p81 = por %p79, %p80
      %p82 = scmp.ne.s32.totalorder %s74, %s77
      %p83 = scmp.eq.s32.totalorder %s12, 0
      %p84 = por %p82, %p83
      %p85 = scmp.ne.s32.totalorder %s74, %s77
      %p86 = scmp.eq.s32.totalorder %s17, 1
      %p87 = por %p85, %p86
      %p88 = scmp.ne.s32.totalorder %s77, %s78
      %p89 = scmp.eq.s32.totalorder %s17, 0
      %p90 = por %p88, %p89
      %p91 = scmp.ne.s32.totalorder %s77, %s78
      %p92 = scmp.eq.s32.totalorder %s18, 1
      %p93 = por %p91, %p92
      %p95 = scmp.ne.s32.totalorder %s78, %s94
      %p96 = scmp.eq.s32.totalorder %s18, 0
      %p97 = por %p95, %p96
      %p98 = scmp.le.s32.totalorder 1, %s12
      %p99 = scmp.lt.s32.totalorder %s12, 3
      %p100 = pnand %p98, %p99
      %p101 = pneg %p100
      // Predicated region
      $region9: #{group_forward.1} parent=5 // pred_check
        _
      $region10: #{group_forward.1} parent=5 // pred_check_branch
        %103 = sbr.rel (%p100) target = $region12
      $region11: #{group_forward.1} parent=5 // pred_region
        %s104 = ssub.s32 %s12, 1
      $region12: #{group_forward.1} parent=5 // pred_fallthru
        _
      %p105 = scmp.lt.s32.totalorder %s12, 2
      // Predicated region
      $region13: #{group_forward.1} parent=5 // pred_check
        %p106 = pneg %p105
      $region14: #{group_forward.1} parent=5 // pred_check_branch
        %108 = sbr.rel (%p106) target = $region16
      $region15: #{group_forward.1} parent=5 // pred_region
        // Predicated region
        $region17: #{group_forward.1} parent=15 // pred_check
          %p109 = pneg %p32
        $region18: #{group_forward.1} parent=15 // pred_check_branch
          %111 = sbr.rel (%p109) target = $region20
        $region19: #{group_forward.1} parent=15 // pred_region
          %p112 = scmp.lt.s32.totalorder %s12, 1
          %s113 = scalar_select %p112, %s12, 1
          %s114 = smul.addr %s113, 4
          %s115 = scalar_lea.vmem %s0, %s114
        $region20: #{group_forward.1} parent=15 // pred_fallthru
          _
      $region16: #{group_forward.1} parent=5 // pred_fallthru
        _
      %p116 = scmp.le.s32.totalorder 1, %s12
      %p117 = scmp.lt.s32.totalorder %s12, 3
      %p118 = pnand %p116, %p117
      %p119 = pneg %p118
      // Predicated region
      $region21: #{group_forward.1} parent=5 // pred_check
        _
      $region22: #{group_forward.1} parent=5 // pred_check_branch
        %121 = sbr.rel (%p118) target = $region24
      $region23: #{group_forward.1} parent=5 // pred_region
        %s122 = ssub.s32 %s12, 1
        %p123 = scmp.lt.s32.totalorder %s17, 1
        %s124 = scalar_select %p123, %s17, 1
        %s125 = smul.addr %s124, 4
        %s126 = scalar_lea.vmem %s0, %s125
        %p127 = pneg %p38
        %p128 = pneg %p35
        %p129 = pneg %p64
        %p130 = pneg %p61
        %p131 = scmp.lt.s32.totalorder %s17, 1
        %s132 = scalar_select %p131, %s17, 1
        %s133 = smul.addr %s132, 4
        %s134 = scalar_lea.vmem %s1, %s133
        %p135 = pneg %p90
        %p136 = pneg %p87
        %s137 = sand.u32 %s77, 1
        %s138 = scalar_lea.sflag [#allocation3], %s137
        %s139 = sand.u32 %s77, 1
        %s140 = smul.addr %s139, 24
        %s141 = scalar_lea.vmem [#allocation2], %s140
        %p142 = scmp.lt.s32.totalorder %s17, 1
        %s143 = scalar_select %p142, %s17, 1
        %s144 = smul.addr %s143, 4
        %s145 = scalar_lea.vmem %s0, %s144
        %p146 = scmp.lt.s32.totalorder %s17, 1
        %s147 = scalar_select %p146, %s17, 1
        %s148 = smul.addr %s147, 4
        %s149 = scalar_lea.vmem %s1, %s148
        %v150 = vld [vmem:[%s145] sm:$0x1]
        %v151 = vld [vmem:[%s145 + $0x1] sm:$0x1]
        %v152 = vld [vmem:[%s145 + $0x2] sm:$0x1]
        %v153 = vlaneseq
        %v154 = vand.u32 %v153, 127
        %vm155 = vcmp.eq.s32.totalorder %v154, 0
        %157 = vset.pattern.permute.xlu0 0
        %158 = vperm.xlu0 %157, %v150
        %v159 = vpop.permute.xlu0 %158
        %v161 = vsel %vm155, %v159, 0.0
        %163 = vset.pattern.permute.xlu0 0
        %164 = vperm.xlu0 %163, %v151
        %v165 = vpop.permute.xlu0 %164
        %v167 = vsel %vm155, %v165, 0.0
        %169 = vset.pattern.permute.xlu0 0
        %170 = vperm.xlu0 %169, %v152
        %v171 = vpop.permute.xlu0 %170
        %v173 = vsel %vm155, %v171, 0.0
        %v174 = vsub.f32 %v150, %v159
        %v175 = vsub.f32 %v151, %v165
        %v176 = vsub.f32 %v152, %v171
        %v177 = vmul.f32 %v174, %v174
        %v178 = vmul.f32 %v175, %v175
        %v179 = vadd.f32 %v177, %v178
        %v180 = vmul.f32 %v176, %v176
        %v181 = vadd.f32 %v179, %v180
        %v182 = vmin.f32 %v181, 1e+10
        %vm183 = vcmask 1040384
        %v184 = vsel %vm183, %v182, -inf
        %185 = vmax.xlane.f32.xlu0 %v184
        %v186 = vpop.xlane.xlu0 %185
        %vm187 = vcmp.ge.f32.partialorder %v182, %v186
        %v188 = vsel %vm187, %v154, 128
        %v189 = vsel %vm183, %v188, 2147483647
        %v190 = vand.u32 %v189, 65535
        %v191 = vshra.s32 %v189, 16
        %v192 = vcvt.s32.f32 %v190
        %v193 = vcvt.s32.f32 %v191
        %194 = vmin.xlane.f32.xlu0 %v193
        %v195 = vpop.xlane.xlu0 %194
        %vm196 = vcmp.eq.f32.partialorder %v193, %v195
        %v197 = vsel %vm196, %v192, inf
        %198 = vmin.xlane.f32.xlu0 %v197
        %v199 = vpop.xlane.xlu0 %198
        %v200 = vcvt.f32.s32 %v199
        %v201 = vcvt.f32.s32 %v195
        %v202 = vshll.u32 %v201, 16
        %v203 = vadd.s32 %v202, %v200
        %vm204 = vcmp.eq.s32.totalorder %v154, %v203
        %v205 = vsel %vm204, %v150, 0.0
        %v206 = vsel %vm183, %v205, 0.0
        %207 = vadd.xlane.f32.xlu0 %v206
        %v208 = vpop.xlane.xlu0 %207
        %v209 = vsel %vm204, %v151, 0.0
        %v210 = vsel %vm183, %v209, 0.0
        %211 = vadd.xlane.f32.xlu0 %v210
        %v212 = vpop.xlane.xlu0 %211
        %v213 = vsel %vm204, %v152, 0.0
        %v214 = vsel %vm183, %v213, 0.0
        %215 = vadd.xlane.f32.xlu0 %v214
        %v216 = vpop.xlane.xlu0 %215
        %vm217 = vcmp.eq.s32.totalorder %v154, 1
        %v218 = vsel %vm217, %v208, %v161
        %v219 = vsel %vm217, %v212, %v167
        %v220 = vsel %vm217, %v216, %v173
        %v221 = vsub.f32 %v150, %v208
        %v222 = vsub.f32 %v151, %v212
        %v223 = vsub.f32 %v152, %v216
        %v224 = vmul.f32 %v221, %v221
        %v225 = vmul.f32 %v222, %v222
        %v226 = vadd.f32 %v224, %v225
        %v227 = vmul.f32 %v223, %v223
        %v228 = vadd.f32 %v226, %v227
        %v229 = vmin.f32 %v182, %v228
        %v230 = vsel %vm183, %v229, -inf
        %231 = vmax.xlane.f32.xlu0 %v230
        %v232 = vpop.xlane.xlu0 %231
        %vm233 = vcmp.ge.f32.partialorder %v229, %v232
        %v234 = vsel %vm233, %v154, 128
        %v235 = vsel %vm183, %v234, 2147483647
        %v236 = vand.u32 %v235, 65535
        %v237 = vshra.s32 %v235, 16
        %v238 = vcvt.s32.f32 %v236
        %v239 = vcvt.s32.f32 %v237
        %240 = vmin.xlane.f32.xlu0 %v239
        %v241 = vpop.xlane.xlu0 %240
        %vm242 = vcmp.eq.f32.partialorder %v239, %v241
        %v243 = vsel %vm242, %v238, inf
        %244 = vmin.xlane.f32.xlu0 %v243
        %v245 = vpop.xlane.xlu0 %244
        %v246 = vcvt.f32.s32 %v245
        %v247 = vcvt.f32.s32 %v241
        %v248 = vshll.u32 %v247, 16
        %v249 = vadd.s32 %v248, %v246
        %vm250 = vcmp.eq.s32.totalorder %v154, %v249
        %v251 = vsel %vm250, %v150, 0.0
        %v252 = vsel %vm183, %v251, 0.0
        %253 = vadd.xlane.f32.xlu0 %v252
        %v254 = vpop.xlane.xlu0 %253
        %v255 = vsel %vm250, %v151, 0.0
        %v256 = vsel %vm183, %v255, 0.0
        %257 = vadd.xlane.f32.xlu0 %v256
        %v258 = vpop.xlane.xlu0 %257
        %v259 = vsel %vm250, %v152, 0.0
        %v260 = vsel %vm183, %v259, 0.0
        %261 = vadd.xlane.f32.xlu0 %v260
        %v262 = vpop.xlane.xlu0 %261
        %vm263 = vcmp.eq.s32.totalorder %v154, 2
        %v264 = vsel %vm263, %v254, %v218
        %v265 = vsel %vm263, %v258, %v219
        %v266 = vsel %vm263, %v262, %v220
        %v267 = vsub.f32 %v150, %v254
        %v268 = vsub.f32 %v151, %v258
        %v269 = vsub.f32 %v152, %v262
        %v270 = vmul.f32 %v267, %v267
        %v271 = vmul.f32 %v268, %v268
        %v272 = vadd.f32 %v270, %v271
        %v273 = vmul.f32 %v269, %v269
        %v274 = vadd.f32 %v272, %v273
        %v275 = vmin.f32 %v229, %v274
        %v276 = vsel %vm183, %v275, -inf
        %277 = vmax.xlane.f32.xlu0 %v276
        %v278 = vpop.xlane.xlu0 %277
        %vm279 = vcmp.ge.f32.partialorder %v275, %v278
        %v280 = vsel %vm279, %v154, 128
        %v281 = vsel %vm183, %v280, 2147483647
        %v282 = vand.u32 %v281, 65535
        %v283 = vshra.s32 %v281, 16
        %v284 = vcvt.s32.f32 %v282
        %v285 = vcvt.s32.f32 %v283
        %286 = vmin.xlane.f32.xlu0 %v285
        %v287 = vpop.xlane.xlu0 %286
        %vm288 = vcmp.eq.f32.partialorder %v285, %v287
        %v289 = vsel %vm288, %v284, inf
        %290 = vmin.xlane.f32.xlu0 %v289
        %v291 = vpop.xlane.xlu0 %290
        %v292 = vcvt.f32.s32 %v291
        %v293 = vcvt.f32.s32 %v287
        %v294 = vshll.u32 %v293, 16
        %v295 = vadd.s32 %v294, %v292
        %vm296 = vcmp.eq.s32.totalorder %v154, %v295
        %v297 = vsel %vm296, %v150, 0.0
        %v298 = vsel %vm183, %v297, 0.0
        %299 = vadd.xlane.f32.xlu0 %v298
        %v300 = vpop.xlane.xlu0 %299
        %v301 = vsel %vm296, %v151, 0.0
        %v302 = vsel %vm183, %v301, 0.0
        %303 = vadd.xlane.f32.xlu0 %v302
        %v304 = vpop.xlane.xlu0 %303
        %v305 = vsel %vm296, %v152, 0.0
        %v306 = vsel %vm183, %v305, 0.0
        %307 = vadd.xlane.f32.xlu0 %v306
        %v308 = vpop.xlane.xlu0 %307
        %vm309 = vcmp.eq.s32.totalorder %v154, 3
        %v310 = vsel %vm309, %v300, %v264
        %v311 = vsel %vm309, %v304, %v265
        %v312 = vsel %vm309, %v308, %v266
        %v313 = vsub.f32 %v150, %v300
        %v314 = vsub.f32 %v151, %v304
        %v315 = vsub.f32 %v152, %v308
        %v316 = vmul.f32 %v313, %v313
        %v317 = vmul.f32 %v314, %v314
        %v318 = vadd.f32 %v316, %v317
        %v319 = vmul.f32 %v315, %v315
        %v320 = vadd.f32 %v318, %v319
        %v321 = vmin.f32 %v275, %v320
        %v322 = vsel %vm183, %v321, -inf
        %323 = vmax.xlane.f32.xlu0 %v322
        %v324 = vpop.xlane.xlu0 %323
        %vm325 = vcmp.ge.f32.partialorder %v321, %v324
        %v326 = vsel %vm325, %v154, 128
        %v327 = vsel %vm183, %v326, 2147483647
        %v328 = vand.u32 %v327, 65535
        %v329 = vshra.s32 %v327, 16
        %v330 = vcvt.s32.f32 %v328
        %v331 = vcvt.s32.f32 %v329
        %332 = vmin.xlane.f32.xlu0 %v331
        %v333 = vpop.xlane.xlu0 %332
        %vm334 = vcmp.eq.f32.partialorder %v331, %v333
        %v335 = vsel %vm334, %v330, inf
        %336 = vmin.xlane.f32.xlu0 %v335
        %v337 = vpop.xlane.xlu0 %336
        %v338 = vcvt.f32.s32 %v337
        %v339 = vcvt.f32.s32 %v333
        %v340 = vshll.u32 %v339, 16
        %v341 = vadd.s32 %v340, %v338
        %vm342 = vcmp.eq.s32.totalorder %v154, %v341
        %v343 = vsel %vm342, %v150, 0.0
        %v344 = vsel %vm183, %v343, 0.0
        %345 = vadd.xlane.f32.xlu0 %v344
        %v346 = vpop.xlane.xlu0 %345
        %v347 = vsel %vm342, %v151, 0.0
        %v348 = vsel %vm183, %v347, 0.0
        %349 = vadd.xlane.f32.xlu0 %v348
        %v350 = vpop.xlane.xlu0 %349
        %v351 = vsel %vm342, %v152, 0.0
        %v352 = vsel %vm183, %v351, 0.0
        %353 = vadd.xlane.f32.xlu0 %v352
        %v354 = vpop.xlane.xlu0 %353
        %vm355 = vcmp.eq.s32.totalorder %v154, 4
        %v356 = vsel %vm355, %v346, %v310
        %v357 = vsel %vm355, %v350, %v311
        %v358 = vsel %vm355, %v354, %v312
        %v359 = vsub.f32 %v150, %v346
        %v360 = vsub.f32 %v151, %v350
        %v361 = vsub.f32 %v152, %v354
        %v362 = vmul.f32 %v359, %v359
        %v363 = vmul.f32 %v360, %v360
        %v364 = vadd.f32 %v362, %v363
        %v365 = vmul.f32 %v361, %v361
        %v366 = vadd.f32 %v364, %v365
        %v367 = vmin.f32 %v321, %v366
        %v368 = vsel %vm183, %v367, -inf
        %369 = vmax.xlane.f32.xlu0 %v368
        %v370 = vpop.xlane.xlu0 %369
        %vm371 = vcmp.ge.f32.partialorder %v367, %v370
        %v372 = vsel %vm371, %v154, 128
        %v373 = vsel %vm183, %v372, 2147483647
        %v374 = vand.u32 %v373, 65535
        %v375 = vshra.s32 %v373, 16
        %v376 = vcvt.s32.f32 %v374
        %v377 = vcvt.s32.f32 %v375
        %378 = vmin.xlane.f32.xlu0 %v377
        %v379 = vpop.xlane.xlu0 %378
        %vm380 = vcmp.eq.f32.partialorder %v377, %v379
        %v381 = vsel %vm380, %v376, inf
        %382 = vmin.xlane.f32.xlu0 %v381
        %v383 = vpop.xlane.xlu0 %382
        %v384 = vcvt.f32.s32 %v383
        %v385 = vcvt.f32.s32 %v379
        %v386 = vshll.u32 %v385, 16
        %v387 = vadd.s32 %v386, %v384
        %vm388 = vcmp.eq.s32.totalorder %v154, %v387
        %v389 = vsel %vm388, %v150, 0.0
        %v390 = vsel %vm183, %v389, 0.0
        %391 = vadd.xlane.f32.xlu0 %v390
        %v392 = vpop.xlane.xlu0 %391
        %v393 = vsel %vm388, %v151, 0.0
        %v394 = vsel %vm183, %v393, 0.0
        %395 = vadd.xlane.f32.xlu0 %v394
        %v396 = vpop.xlane.xlu0 %395
        %v397 = vsel %vm388, %v152, 0.0
        %v398 = vsel %vm183, %v397, 0.0
        %399 = vadd.xlane.f32.xlu0 %v398
        %v400 = vpop.xlane.xlu0 %399
        %vm401 = vcmp.eq.s32.totalorder %v154, 5
        %v402 = vsel %vm401, %v392, %v356
        %v403 = vsel %vm401, %v396, %v357
        %v404 = vsel %vm401, %v400, %v358
        %v405 = vsub.f32 %v150, %v392
        %v406 = vsub.f32 %v151, %v396
        %v407 = vsub.f32 %v152, %v400
        %v408 = vmul.f32 %v405, %v405
        %v409 = vmul.f32 %v406, %v406
        %v410 = vadd.f32 %v408, %v409
        %v411 = vmul.f32 %v407, %v407
        %v412 = vadd.f32 %v410, %v411
        %v413 = vmin.f32 %v367, %v412
        %v414 = vsel %vm183, %v413, -inf
        %415 = vmax.xlane.f32.xlu0 %v414
        %v416 = vpop.xlane.xlu0 %415
        %vm417 = vcmp.ge.f32.partialorder %v413, %v416
        %v418 = vsel %vm417, %v154, 128
        %v419 = vsel %vm183, %v418, 2147483647
        %v420 = vand.u32 %v419, 65535
        %v421 = vshra.s32 %v419, 16
        %v422 = vcvt.s32.f32 %v420
        %v423 = vcvt.s32.f32 %v421
        %424 = vmin.xlane.f32.xlu0 %v423
        %v425 = vpop.xlane.xlu0 %424
        %vm426 = vcmp.eq.f32.partialorder %v423, %v425
        %v427 = vsel %vm426, %v422, inf
        %428 = vmin.xlane.f32.xlu0 %v427
        %v429 = vpop.xlane.xlu0 %428
        %v430 = vcvt.f32.s32 %v429
        %v431 = vcvt.f32.s32 %v425
        %v432 = vshll.u32 %v431, 16
        %v433 = vadd.s32 %v432, %v430
        %vm434 = vcmp.eq.s32.totalorder %v154, %v433
        %v435 = vsel %vm434, %v150, 0.0
        %v436 = vsel %vm183, %v435, 0.0
        %437 = vadd.xlane.f32.xlu0 %v436
        %v438 = vpop.xlane.xlu0 %437
        %v439 = vsel %vm434, %v151, 0.0
        %v440 = vsel %vm183, %v439, 0.0
        %441 = vadd.xlane.f32.xlu0 %v440
        %v442 = vpop.xlane.xlu0 %441
        %v443 = vsel %vm434, %v152, 0.0
        %v444 = vsel %vm183, %v443, 0.0
        %445 = vadd.xlane.f32.xlu0 %v444
        %v446 = vpop.xlane.xlu0 %445
        %vm447 = vcmp.eq.s32.totalorder %v154, 6
        %v448 = vsel %vm447, %v438, %v402
        %v449 = vsel %vm447, %v442, %v403
        %v450 = vsel %vm447, %v446, %v404
        %v451 = vsub.f32 %v150, %v438
        %v452 = vsub.f32 %v151, %v442
        %v453 = vsub.f32 %v152, %v446
        %v454 = vmul.f32 %v451, %v451
        %v455 = vmul.f32 %v452, %v452
        %v456 = vadd.f32 %v454, %v455
        %v457 = vmul.f32 %v453, %v453
        %v458 = vadd.f32 %v456, %v457
        %v459 = vmin.f32 %v413, %v458
        %v460 = vsel %vm183, %v459, -inf
        %461 = vmax.xlane.f32.xlu0 %v460
        %v462 = vpop.xlane.xlu0 %461
        %vm463 = vcmp.ge.f32.partialorder %v459, %v462
        %v464 = vsel %vm463, %v154, 128
        %v465 = vsel %vm183, %v464, 2147483647
        %v466 = vand.u32 %v465, 65535
        %v467 = vshra.s32 %v465, 16
        %v468 = vcvt.s32.f32 %v466
        %v469 = vcvt.s32.f32 %v467
        %470 = vmin.xlane.f32.xlu0 %v469
        %v471 = vpop.xlane.xlu0 %470
        %vm472 = vcmp.eq.f32.partialorder %v469, %v471
        %v473 = vsel %vm472, %v468, inf
        %474 = vmin.xlane.f32.xlu0 %v473
        %v475 = vpop.xlane.xlu0 %474
        %v476 = vcvt.f32.s32 %v475
        %v477 = vcvt.f32.s32 %v471
        %v478 = vshll.u32 %v477, 16
        %v479 = vadd.s32 %v478, %v476
        %vm480 = vcmp.eq.s32.totalorder %v154, %v479
        %v481 = vsel %vm480, %v150, 0.0
        %v482 = vsel %vm183, %v481, 0.0
        %483 = vadd.xlane.f32.xlu0 %v482
        %v484 = vpop.xlane.xlu0 %483
        %v485 = vsel %vm480, %v151, 0.0
        %v486 = vsel %vm183, %v485, 0.0
        %487 = vadd.xlane.f32.xlu0 %v486
        %v488 = vpop.xlane.xlu0 %487
        %v489 = vsel %vm480, %v152, 0.0
        %v490 = vsel %vm183, %v489, 0.0
        %491 = vadd.xlane.f32.xlu0 %v490
        %v492 = vpop.xlane.xlu0 %491
        %vm493 = vcmp.eq.s32.totalorder %v154, 7
        %v494 = vsel %vm493, %v484, %v448
        %v495 = vsel %vm493, %v488, %v449
        %v496 = vsel %vm493, %v492, %v450
        %vm497 = vcmask 57344
        %498 = vst.msk [vmem:[%s149] sm:$0x1] %vm497, %v494
        %499 = vst.msk [vmem:[%s149 + $0x1] sm:$0x1] %vm497, %v495
        %500 = vst.msk [vmem:[%s149 + $0x2] sm:$0x1] %vm497, %v496
        %v501 = vlaneseq
        %v502 = vshrl.u32 %v501, 7
        %v503 = vsub.s32 0, %v502
        %v504 = vrot.slane %v494, %v503
        %506 = vbcast.lane.b32.xlu0 %v504, 256
        %v507 = vpop.permute.xlu0 %506
        %v508 = vlaneseq
        %v509 = vshrl.u32 %v508, 7
        %v510 = vsub.s32 0, %v509
        %v511 = vrot.slane %v495, %v510
        %513 = vbcast.lane.b32.xlu0 %v511, 256
        %v514 = vpop.permute.xlu0 %513
        %v515 = vlaneseq
        %v516 = vshrl.u32 %v515, 7
        %v517 = vsub.s32 0, %v516
        %v518 = vrot.slane %v496, %v517
        %520 = vbcast.lane.b32.xlu0 %v518, 256
        %v521 = vpop.permute.xlu0 %520
        %v522 = vlaneseq
        %v523 = vshrl.u32 %v522, 7
        %v524 = vsub.s32 0, %v523
        %v525 = vrot.slane %v150, %v524
        %v526 = vsub.f32 %v525, %v507
        %v527 = vlaneseq
        %v528 = vshrl.u32 %v527, 7
        %v529 = vsub.s32 0, %v528
        %v530 = vrot.slane %v151, %v529
        %v531 = vsub.f32 %v530, %v514
        %v532 = vlaneseq
        %v533 = vshrl.u32 %v532, 7
        %v534 = vsub.s32 0, %v533
        %v535 = vrot.slane %v152, %v534
        %v536 = vsub.f32 %v535, %v521
        %v537 = vmul.f32 %v526, %v526
        %v538 = vmul.f32 %v531, %v531
        %v539 = vadd.f32 %v537, %v538
        %v540 = vmul.f32 %v536, %v536
        %v541 = vadd.f32 %v539, %v540
        %542 = vmin.xlane.f32.xlu0 %v541
        %v543 = vpop.xlane.xlu0 %542
        %vm544 = vcmp.le.f32.partialorder %v541, %v543
        %v545 = vsel %vm544, %v154, 128
        %v546 = vand.u32 %v545, 65535
        %v547 = vshra.s32 %v545, 16
        %v548 = vcvt.s32.f32 %v546
        %v549 = vcvt.s32.f32 %v547
        %550 = vmin.xlane.f32.xlu0 %v549
        %v551 = vpop.xlane.xlu0 %550
        %vm552 = vcmp.eq.f32.partialorder %v549, %v551
        %v553 = vsel %vm552, %v548, inf
        %554 = vmin.xlane.f32.xlu0 %v553
        %v555 = vpop.xlane.xlu0 %554
        %v556 = vcvt.f32.s32 %v555
        %v557 = vcvt.f32.s32 %v551
        %v558 = vshll.u32 %v557, 16
        %v559 = vadd.s32 %v558, %v556
        %vm560 = vcmp.eq.s32.totalorder %v154, %v559
        %v561 = vsel %vm560, %v525, 0.0
        %562 = vadd.xlane.f32.xlu0 %v561
        %v563 = vpop.xlane.xlu0 %562
        %v564 = vsub.f32 %v563, %v507
        %v565 = vsel %vm560, %v530, 0.0
        %566 = vadd.xlane.f32.xlu0 %v565
        %v567 = vpop.xlane.xlu0 %566
        %v568 = vsub.f32 %v567, %v514
        %v569 = vsel %vm560, %v535, 0.0
        %570 = vadd.xlane.f32.xlu0 %v569
        %v571 = vpop.xlane.xlu0 %570
        %v572 = vsub.f32 %v571, %v521
        %v573 = vsel %vm155, 1, 0
        %vm574 = vcmp.eq.s32.totalorder %v573, 1
        %v575 = vsel %vm574, %v564, 0.0
        %v576 = vsel %vm574, %v568, 0.0
        %v577 = vsel %vm574, %v572, 0.0
        %v578 = vsel %vm560, 3e+38, %v541
        %579 = vmin.xlane.f32.xlu0 %v578
        %v580 = vpop.xlane.xlu0 %579
        %vm581 = vcmp.le.f32.partialorder %v578, %v580
        %v582 = vsel %vm581, %v154, 128
        %v583 = vand.u32 %v582, 65535
        %v584 = vshra.s32 %v582, 16
        %v585 = vcvt.s32.f32 %v583
        %v586 = vcvt.s32.f32 %v584
        %587 = vmin.xlane.f32.xlu0 %v586
        %v588 = vpop.xlane.xlu0 %587
        %vm589 = vcmp.eq.f32.partialorder %v586, %v588
        %v590 = vsel %vm589, %v585, inf
        %591 = vmin.xlane.f32.xlu0 %v590
        %v592 = vpop.xlane.xlu0 %591
        %v593 = vcvt.f32.s32 %v592
        %v594 = vcvt.f32.s32 %v588
        %v595 = vshll.u32 %v594, 16
        %v596 = vadd.s32 %v595, %v593
        %vm597 = vcmp.eq.s32.totalorder %v154, %v596
        %v598 = vsel %vm597, %v525, 0.0
        %599 = vadd.xlane.f32.xlu0 %v598
        %v600 = vpop.xlane.xlu0 %599
        %v601 = vsub.f32 %v600, %v507
        %v602 = vsel %vm597, %v530, 0.0
        %603 = vadd.xlane.f32.xlu0 %v602
        %v604 = vpop.xlane.xlu0 %603
        %v605 = vsub.f32 %v604, %v514
        %v606 = vsel %vm597, %v535, 0.0
        %607 = vadd.xlane.f32.xlu0 %v606
        %v608 = vpop.xlane.xlu0 %607
        %v609 = vsub.f32 %v608, %v521
        %v610 = vsel %vm217, 1, 0
        %vm611 = vcmp.eq.s32.totalorder %v610, 1
        %v612 = vsel %vm611, %v601, %v575
        %v613 = vsel %vm611, %v605, %v576
        %v614 = vsel %vm611, %v609, %v577
        %v615 = vsel %vm597, 3e+38, %v578
        %616 = vmin.xlane.f32.xlu0 %v615
        %v617 = vpop.xlane.xlu0 %616
        %vm618 = vcmp.le.f32.partialorder %v615, %v617
        %v619 = vsel %vm618, %v154, 128
        %v620 = vand.u32 %v619, 65535
        %v621 = vshra.s32 %v619, 16
        %v622 = vcvt.s32.f32 %v620
        %v623 = vcvt.s32.f32 %v621
        %624 = vmin.xlane.f32.xlu0 %v623
        %v625 = vpop.xlane.xlu0 %624
        %vm626 = vcmp.eq.f32.partialorder %v623, %v625
        %v627 = vsel %vm626, %v622, inf
        %628 = vmin.xlane.f32.xlu0 %v627
        %v629 = vpop.xlane.xlu0 %628
        %v630 = vcvt.f32.s32 %v629
        %v631 = vcvt.f32.s32 %v625
        %v632 = vshll.u32 %v631, 16
        %v633 = vadd.s32 %v632, %v630
        %vm634 = vcmp.eq.s32.totalorder %v154, %v633
        %v635 = vsel %vm634, %v525, 0.0
        %636 = vadd.xlane.f32.xlu0 %v635
        %v637 = vpop.xlane.xlu0 %636
        %v638 = vsub.f32 %v637, %v507
        %v639 = vsel %vm634, %v530, 0.0
        %640 = vadd.xlane.f32.xlu0 %v639
        %v641 = vpop.xlane.xlu0 %640
        %v642 = vsub.f32 %v641, %v514
        %v643 = vsel %vm634, %v535, 0.0
        %644 = vadd.xlane.f32.xlu0 %v643
        %v645 = vpop.xlane.xlu0 %644
        %v646 = vsub.f32 %v645, %v521
        %v647 = vsel %vm263, 1, 0
        %vm648 = vcmp.eq.s32.totalorder %v647, 1
        %v649 = vsel %vm648, %v638, %v612
        %v650 = vsel %vm648, %v642, %v613
        %v651 = vsel %vm648, %v646, %v614
        %v652 = vsel %vm634, 3e+38, %v615
        %653 = vmin.xlane.f32.xlu0 %v652
        %v654 = vpop.xlane.xlu0 %653
        %vm655 = vcmp.le.f32.partialorder %v652, %v654
        %v656 = vsel %vm655, %v154, 128
        %v657 = vand.u32 %v656, 65535
        %v658 = vshra.s32 %v656, 16
        %v659 = vcvt.s32.f32 %v657
        %v660 = vcvt.s32.f32 %v658
        %661 = vmin.xlane.f32.xlu0 %v660
        %v662 = vpop.xlane.xlu0 %661
        %vm663 = vcmp.eq.f32.partialorder %v660, %v662
        %v664 = vsel %vm663, %v659, inf
        %665 = vmin.xlane.f32.xlu0 %v664
        %v666 = vpop.xlane.xlu0 %665
        %v667 = vcvt.f32.s32 %v666
        %v668 = vcvt.f32.s32 %v662
        %v669 = vshll.u32 %v668, 16
        %v670 = vadd.s32 %v669, %v667
        %vm671 = vcmp.eq.s32.totalorder %v154, %v670
        %v672 = vsel %vm671, %v525, 0.0
        %673 = vadd.xlane.f32.xlu0 %v672
        %v674 = vpop.xlane.xlu0 %673
        %v675 = vsub.f32 %v674, %v507
        %v676 = vsel %vm671, %v530, 0.0
        %677 = vadd.xlane.f32.xlu0 %v676
        %v678 = vpop.xlane.xlu0 %677
        %v679 = vsub.f32 %v678, %v514
        %v680 = vsel %vm671, %v535, 0.0
        %681 = vadd.xlane.f32.xlu0 %v680
        %v682 = vpop.xlane.xlu0 %681
        %v683 = vsub.f32 %v682, %v521
        %v684 = vsel %vm309, 1, 0
        %vm685 = vcmp.eq.s32.totalorder %v684, 1
        %v686 = vsel %vm685, %v675, %v649
        %v687 = vsel %vm685, %v679, %v650
        %v688 = vsel %vm685, %v683, %v651
        %v689 = vsel %vm671, 3e+38, %v652
        %690 = vmin.xlane.f32.xlu0 %v689
        %v691 = vpop.xlane.xlu0 %690
        %vm692 = vcmp.le.f32.partialorder %v689, %v691
        %v693 = vsel %vm692, %v154, 128
        %v694 = vand.u32 %v693, 65535
        %v695 = vshra.s32 %v693, 16
        %v696 = vcvt.s32.f32 %v694
        %v697 = vcvt.s32.f32 %v695
        %698 = vmin.xlane.f32.xlu0 %v697
        %v699 = vpop.xlane.xlu0 %698
        %vm700 = vcmp.eq.f32.partialorder %v697, %v699
        %v701 = vsel %vm700, %v696, inf
        %702 = vmin.xlane.f32.xlu0 %v701
        %v703 = vpop.xlane.xlu0 %702
        %v704 = vcvt.f32.s32 %v703
        %v705 = vcvt.f32.s32 %v699
        %v706 = vshll.u32 %v705, 16
        %v707 = vadd.s32 %v706, %v704
        %vm708 = vcmp.eq.s32.totalorder %v154, %v707
        %v709 = vsel %vm708, %v525, 0.0
        %710 = vadd.xlane.f32.xlu0 %v709
        %v711 = vpop.xlane.xlu0 %710
        %v712 = vsub.f32 %v711, %v507
        %v713 = vsel %vm708, %v530, 0.0
        %714 = vadd.xlane.f32.xlu0 %v713
        %v715 = vpop.xlane.xlu0 %714
        %v716 = vsub.f32 %v715, %v514
        %v717 = vsel %vm708, %v535, 0.0
        %718 = vadd.xlane.f32.xlu0 %v717
        %v719 = vpop.xlane.xlu0 %718
        %v720 = vsub.f32 %v719, %v521
        %v721 = vsel %vm355, 1, 0
        %vm722 = vcmp.eq.s32.totalorder %v721, 1
        %v723 = vsel %vm722, %v712, %v686
        %v724 = vsel %vm722, %v716, %v687
        %v725 = vsel %vm722, %v720, %v688
        %v726 = vsel %vm708, 3e+38, %v689
        %727 = vmin.xlane.f32.xlu0 %v726
        %v728 = vpop.xlane.xlu0 %727
        %vm729 = vcmp.le.f32.partialorder %v726, %v728
        %v730 = vsel %vm729, %v154, 128
        %v731 = vand.u32 %v730, 65535
        %v732 = vshra.s32 %v730, 16
        %v733 = vcvt.s32.f32 %v731
        %v734 = vcvt.s32.f32 %v732
        %735 = vmin.xlane.f32.xlu0 %v734
        %v736 = vpop.xlane.xlu0 %735
        %vm737 = vcmp.eq.f32.partialorder %v734, %v736
        %v738 = vsel %vm737, %v733, inf
        %739 = vmin.xlane.f32.xlu0 %v738
        %v740 = vpop.xlane.xlu0 %739
        %v741 = vcvt.f32.s32 %v740
        %v742 = vcvt.f32.s32 %v736
        %v743 = vshll.u32 %v742, 16
        %v744 = vadd.s32 %v743, %v741
        %vm745 = vcmp.eq.s32.totalorder %v154, %v744
        %v746 = vsel %vm745, %v525, 0.0
        %747 = vadd.xlane.f32.xlu0 %v746
        %v748 = vpop.xlane.xlu0 %747
        %v749 = vsub.f32 %v748, %v507
        %v750 = vsel %vm745, %v530, 0.0
        %751 = vadd.xlane.f32.xlu0 %v750
        %v752 = vpop.xlane.xlu0 %751
        %v753 = vsub.f32 %v752, %v514
        %v754 = vsel %vm745, %v535, 0.0
        %755 = vadd.xlane.f32.xlu0 %v754
        %v756 = vpop.xlane.xlu0 %755
        %v757 = vsub.f32 %v756, %v521
        %v758 = vsel %vm401, 1, 0
        %vm759 = vcmp.eq.s32.totalorder %v758, 1
        %v760 = vsel %vm759, %v749, %v723
        %v761 = vsel %vm759, %v753, %v724
        %v762 = vsel %vm759, %v757, %v725
        %v763 = vsel %vm745, 3e+38, %v726
        %764 = vmin.xlane.f32.xlu0 %v763
        %v765 = vpop.xlane.xlu0 %764
        %vm766 = vcmp.le.f32.partialorder %v763, %v765
        %v767 = vsel %vm766, %v154, 128
        %v768 = vand.u32 %v767, 65535
        %v769 = vshra.s32 %v767, 16
        %v770 = vcvt.s32.f32 %v768
        %v771 = vcvt.s32.f32 %v769
        %772 = vmin.xlane.f32.xlu0 %v771
        %v773 = vpop.xlane.xlu0 %772
        %vm774 = vcmp.eq.f32.partialorder %v771, %v773
        %v775 = vsel %vm774, %v770, inf
        %776 = vmin.xlane.f32.xlu0 %v775
        %v777 = vpop.xlane.xlu0 %776
        %v778 = vcvt.f32.s32 %v777
        %v779 = vcvt.f32.s32 %v773
        %v780 = vshll.u32 %v779, 16
        %v781 = vadd.s32 %v780, %v778
        %vm782 = vcmp.eq.s32.totalorder %v154, %v781
        %v783 = vsel %vm782, %v525, 0.0
        %784 = vadd.xlane.f32.xlu0 %v783
        %v785 = vpop.xlane.xlu0 %784
        %v786 = vsub.f32 %v785, %v507
        %v787 = vsel %vm782, %v530, 0.0
        %788 = vadd.xlane.f32.xlu0 %v787
        %v789 = vpop.xlane.xlu0 %788
        %v790 = vsub.f32 %v789, %v514
        %v791 = vsel %vm782, %v535, 0.0
        %792 = vadd.xlane.f32.xlu0 %v791
        %v793 = vpop.xlane.xlu0 %792
        %v794 = vsub.f32 %v793, %v521
        %v795 = vsel %vm447, 1, 0
        %vm796 = vcmp.eq.s32.totalorder %v795, 1
        %v797 = vsel %vm796, %v786, %v760
        %v798 = vsel %vm796, %v790, %v761
        %v799 = vsel %vm796, %v794, %v762
        %v800 = vsel %vm782, 3e+38, %v763
        %801 = vmin.xlane.f32.xlu0 %v800
        %v802 = vpop.xlane.xlu0 %801
        %vm803 = vcmp.le.f32.partialorder %v800, %v802
        %v804 = vsel %vm803, %v154, 128
        %v805 = vand.u32 %v804, 65535
        %v806 = vshra.s32 %v804, 16
        %v807 = vcvt.s32.f32 %v805
        %v808 = vcvt.s32.f32 %v806
        %809 = vmin.xlane.f32.xlu0 %v808
        %v810 = vpop.xlane.xlu0 %809
        %vm811 = vcmp.eq.f32.partialorder %v808, %v810
        %v812 = vsel %vm811, %v807, inf
        %813 = vmin.xlane.f32.xlu0 %v812
        %v814 = vpop.xlane.xlu0 %813
        %v815 = vcvt.f32.s32 %v814
        %v816 = vcvt.f32.s32 %v810
        %v817 = vshll.u32 %v816, 16
        %v818 = vadd.s32 %v817, %v815
        %vm819 = vcmp.eq.s32.totalorder %v154, %v818
        %v820 = vsel %vm819, %v525, 0.0
        %821 = vadd.xlane.f32.xlu0 %v820
        %v822 = vpop.xlane.xlu0 %821
        %v823 = vsub.f32 %v822, %v507
        %v824 = vsel %vm819, %v530, 0.0
        %825 = vadd.xlane.f32.xlu0 %v824
        %v826 = vpop.xlane.xlu0 %825
        %v827 = vsub.f32 %v826, %v514
        %v828 = vsel %vm819, %v535, 0.0
        %829 = vadd.xlane.f32.xlu0 %v828
        %v830 = vpop.xlane.xlu0 %829
        %v831 = vsub.f32 %v830, %v521
        %v832 = vsel %vm493, 1, 0
        %vm833 = vcmp.eq.s32.totalorder %v832, 1
        %v834 = vsel %vm833, %v823, %v797
        %v835 = vsel %vm833, %v827, %v798
        %v836 = vsel %vm833, %v831, %v799
        %v837 = vsel %vm819, 3e+38, %v800
        %838 = vmin.xlane.f32.xlu0 %v837
        %v839 = vpop.xlane.xlu0 %838
        %vm840 = vcmp.le.f32.partialorder %v837, %v839
        %v841 = vsel %vm840, %v154, 128
        %v842 = vand.u32 %v841, 65535
        %v843 = vshra.s32 %v841, 16
        %v844 = vcvt.s32.f32 %v842
        %v845 = vcvt.s32.f32 %v843
        %846 = vmin.xlane.f32.xlu0 %v845
        %v847 = vpop.xlane.xlu0 %846
        %vm848 = vcmp.eq.f32.partialorder %v845, %v847
        %v849 = vsel %vm848, %v844, inf
        %850 = vmin.xlane.f32.xlu0 %v849
        %v851 = vpop.xlane.xlu0 %850
        %v852 = vcvt.f32.s32 %v851
        %v853 = vcvt.f32.s32 %v847
        %v854 = vshll.u32 %v853, 16
        %v855 = vadd.s32 %v854, %v852
        %vm856 = vcmp.eq.s32.totalorder %v154, %v855
        %v857 = vsel %vm856, %v525, 0.0
        %858 = vadd.xlane.f32.xlu0 %v857
        %v859 = vpop.xlane.xlu0 %858
        %v860 = vsub.f32 %v859, %v507
        %v861 = vsel %vm856, %v530, 0.0
        %862 = vadd.xlane.f32.xlu0 %v861
        %v863 = vpop.xlane.xlu0 %862
        %v864 = vsub.f32 %v863, %v514
        %v865 = vsel %vm856, %v535, 0.0
        %866 = vadd.xlane.f32.xlu0 %v865
        %v867 = vpop.xlane.xlu0 %866
        %v868 = vsub.f32 %v867, %v521
        %vm869 = vcmp.eq.s32.totalorder %v154, 8
        %v870 = vsel %vm869, 1, 0
        %vm871 = vcmp.eq.s32.totalorder %v870, 1
        %v872 = vsel %vm871, %v860, %v834
        %v873 = vsel %vm871, %v864, %v835
        %v874 = vsel %vm871, %v868, %v836
        %v875 = vsel %vm856, 3e+38, %v837
        %876 = vmin.xlane.f32.xlu0 %v875
        %v877 = vpop.xlane.xlu0 %876
        %vm878 = vcmp.le.f32.partialorder %v875, %v877
        %v879 = vsel %vm878, %v154, 128
        %v880 = vand.u32 %v879, 65535
        %v881 = vshra.s32 %v879, 16
        %v882 = vcvt.s32.f32 %v880
        %v883 = vcvt.s32.f32 %v881
        %884 = vmin.xlane.f32.xlu0 %v883
        %v885 = vpop.xlane.xlu0 %884
        %vm886 = vcmp.eq.f32.partialorder %v883, %v885
        %v887 = vsel %vm886, %v882, inf
        %888 = vmin.xlane.f32.xlu0 %v887
        %v889 = vpop.xlane.xlu0 %888
        %v890 = vcvt.f32.s32 %v889
        %v891 = vcvt.f32.s32 %v885
        %v892 = vshll.u32 %v891, 16
        %v893 = vadd.s32 %v892, %v890
        %vm894 = vcmp.eq.s32.totalorder %v154, %v893
        %v895 = vsel %vm894, %v525, 0.0
        %896 = vadd.xlane.f32.xlu0 %v895
        %v897 = vpop.xlane.xlu0 %896
        %v898 = vsub.f32 %v897, %v507
        %v899 = vsel %vm894, %v530, 0.0
        %900 = vadd.xlane.f32.xlu0 %v899
        %v901 = vpop.xlane.xlu0 %900
        %v902 = vsub.f32 %v901, %v514
        %v903 = vsel %vm894, %v535, 0.0
        %904 = vadd.xlane.f32.xlu0 %v903
        %v905 = vpop.xlane.xlu0 %904
        %v906 = vsub.f32 %v905, %v521
        %vm907 = vcmp.eq.s32.totalorder %v154, 9
        %v908 = vsel %vm907, 1, 0
        %vm909 = vcmp.eq.s32.totalorder %v908, 1
        %v910 = vsel %vm909, %v898, %v872
        %v911 = vsel %vm909, %v902, %v873
        %v912 = vsel %vm909, %v906, %v874
        %v913 = vsel %vm894, 3e+38, %v875
        %914 = vmin.xlane.f32.xlu0 %v913
        %v915 = vpop.xlane.xlu0 %914
        %vm916 = vcmp.le.f32.partialorder %v913, %v915
        %v917 = vsel %vm916, %v154, 128
        %v918 = vand.u32 %v917, 65535
        %v919 = vshra.s32 %v917, 16
        %v920 = vcvt.s32.f32 %v918
        %v921 = vcvt.s32.f32 %v919
        %922 = vmin.xlane.f32.xlu0 %v921
        %v923 = vpop.xlane.xlu0 %922
        %vm924 = vcmp.eq.f32.partialorder %v921, %v923
        %v925 = vsel %vm924, %v920, inf
        %926 = vmin.xlane.f32.xlu0 %v925
        %v927 = vpop.xlane.xlu0 %926
        %v928 = vcvt.f32.s32 %v927
        %v929 = vcvt.f32.s32 %v923
        %v930 = vshll.u32 %v929, 16
        %v931 = vadd.s32 %v930, %v928
        %vm932 = vcmp.eq.s32.totalorder %v154, %v931
        %v933 = vsel %vm932, %v525, 0.0
        %934 = vadd.xlane.f32.xlu0 %v933
        %v935 = vpop.xlane.xlu0 %934
        %v936 = vsub.f32 %v935, %v507
        %v937 = vsel %vm932, %v530, 0.0
        %938 = vadd.xlane.f32.xlu0 %v937
        %v939 = vpop.xlane.xlu0 %938
        %v940 = vsub.f32 %v939, %v514
        %v941 = vsel %vm932, %v535, 0.0
        %942 = vadd.xlane.f32.xlu0 %v941
        %v943 = vpop.xlane.xlu0 %942
        %v944 = vsub.f32 %v943, %v521
        %vm945 = vcmp.eq.s32.totalorder %v154, 10
        %v946 = vsel %vm945, 1, 0
        %vm947 = vcmp.eq.s32.totalorder %v946, 1
        %v948 = vsel %vm947, %v936, %v910
        %v949 = vsel %vm947, %v940, %v911
        %v950 = vsel %vm947, %v944, %v912
        %v951 = vsel %vm932, 3e+38, %v913
        %952 = vmin.xlane.f32.xlu0 %v951
        %v953 = vpop.xlane.xlu0 %952
        %vm954 = vcmp.le.f32.partialorder %v951, %v953
        %v955 = vsel %vm954, %v154, 128
        %v956 = vand.u32 %v955, 65535
        %v957 = vshra.s32 %v955, 16
        %v958 = vcvt.s32.f32 %v956
        %v959 = vcvt.s32.f32 %v957
        %960 = vmin.xlane.f32.xlu0 %v959
        %v961 = vpop.xlane.xlu0 %960
        %vm962 = vcmp.eq.f32.partialorder %v959, %v961
        %v963 = vsel %vm962, %v958, inf
        %964 = vmin.xlane.f32.xlu0 %v963
        %v965 = vpop.xlane.xlu0 %964
        %v966 = vcvt.f32.s32 %v965
        %v967 = vcvt.f32.s32 %v961
        %v968 = vshll.u32 %v967, 16
        %v969 = vadd.s32 %v968, %v966
        %vm970 = vcmp.eq.s32.totalorder %v154, %v969
        %v971 = vsel %vm970, %v525, 0.0
        %972 = vadd.xlane.f32.xlu0 %v971
        %v973 = vpop.xlane.xlu0 %972
        %v974 = vsub.f32 %v973, %v507
        %v975 = vsel %vm970, %v530, 0.0
        %976 = vadd.xlane.f32.xlu0 %v975
        %v977 = vpop.xlane.xlu0 %976
        %v978 = vsub.f32 %v977, %v514
        %v979 = vsel %vm970, %v535, 0.0
        %980 = vadd.xlane.f32.xlu0 %v979
        %v981 = vpop.xlane.xlu0 %980
        %v982 = vsub.f32 %v981, %v521
        %vm983 = vcmp.eq.s32.totalorder %v154, 11
        %v984 = vsel %vm983, 1, 0
        %vm985 = vcmp.eq.s32.totalorder %v984, 1
        %v986 = vsel %vm985, %v974, %v948
        %v987 = vsel %vm985, %v978, %v949
        %v988 = vsel %vm985, %v982, %v950
        %v989 = vsel %vm970, 3e+38, %v951
        %990 = vmin.xlane.f32.xlu0 %v989
        %v991 = vpop.xlane.xlu0 %990
        %vm992 = vcmp.le.f32.partialorder %v989, %v991
        %v993 = vsel %vm992, %v154, 128
        %v994 = vand.u32 %v993, 65535
        %v995 = vshra.s32 %v993, 16
        %v996 = vcvt.s32.f32 %v994
        %v997 = vcvt.s32.f32 %v995
        %998 = vmin.xlane.f32.xlu0 %v997
        %v999 = vpop.xlane.xlu0 %998
        %vm1000 = vcmp.eq.f32.partialorder %v997, %v999
        %v1001 = vsel %vm1000, %v996, inf
        %1002 = vmin.xlane.f32.xlu0 %v1001
        %v1003 = vpop.xlane.xlu0 %1002
        %v1004 = vcvt.f32.s32 %v1003
        %v1005 = vcvt.f32.s32 %v999
        %v1006 = vshll.u32 %v1005, 16
        %v1007 = vadd.s32 %v1006, %v1004
        %vm1008 = vcmp.eq.s32.totalorder %v154, %v1007
        %v1009 = vsel %vm1008, %v525, 0.0
        %1010 = vadd.xlane.f32.xlu0 %v1009
        %v1011 = vpop.xlane.xlu0 %1010
        %v1012 = vsub.f32 %v1011, %v507
        %v1013 = vsel %vm1008, %v530, 0.0
        %1014 = vadd.xlane.f32.xlu0 %v1013
        %v1015 = vpop.xlane.xlu0 %1014
        %v1016 = vsub.f32 %v1015, %v514
        %v1017 = vsel %vm1008, %v535, 0.0
        %1018 = vadd.xlane.f32.xlu0 %v1017
        %v1019 = vpop.xlane.xlu0 %1018
        %v1020 = vsub.f32 %v1019, %v521
        %vm1021 = vcmp.eq.s32.totalorder %v154, 12
        %v1022 = vsel %vm1021, 1, 0
        %vm1023 = vcmp.eq.s32.totalorder %v1022, 1
        %v1024 = vsel %vm1023, %v1012, %v986
        %v1025 = vsel %vm1023, %v1016, %v987
        %v1026 = vsel %vm1023, %v1020, %v988
        %v1027 = vsel %vm1008, 3e+38, %v989
        %1028 = vmin.xlane.f32.xlu0 %v1027
        %v1029 = vpop.xlane.xlu0 %1028
        %vm1030 = vcmp.le.f32.partialorder %v1027, %v1029
        %v1031 = vsel %vm1030, %v154, 128
        %v1032 = vand.u32 %v1031, 65535
        %v1033 = vshra.s32 %v1031, 16
        %v1034 = vcvt.s32.f32 %v1032
        %v1035 = vcvt.s32.f32 %v1033
        %1036 = vmin.xlane.f32.xlu0 %v1035
        %v1037 = vpop.xlane.xlu0 %1036
        %vm1038 = vcmp.eq.f32.partialorder %v1035, %v1037
        %v1039 = vsel %vm1038, %v1034, inf
        %1040 = vmin.xlane.f32.xlu0 %v1039
        %v1041 = vpop.xlane.xlu0 %1040
        %v1042 = vcvt.f32.s32 %v1041
        %v1043 = vcvt.f32.s32 %v1037
        %v1044 = vshll.u32 %v1043, 16
        %v1045 = vadd.s32 %v1044, %v1042
        %vm1046 = vcmp.eq.s32.totalorder %v154, %v1045
        %v1047 = vsel %vm1046, %v525, 0.0
        %1048 = vadd.xlane.f32.xlu0 %v1047
        %v1049 = vpop.xlane.xlu0 %1048
        %v1050 = vsub.f32 %v1049, %v507
        %v1051 = vsel %vm1046, %v530, 0.0
        %1052 = vadd.xlane.f32.xlu0 %v1051
        %v1053 = vpop.xlane.xlu0 %1052
        %v1054 = vsub.f32 %v1053, %v514
        %v1055 = vsel %vm1046, %v535, 0.0
        %1056 = vadd.xlane.f32.xlu0 %v1055
        %v1057 = vpop.xlane.xlu0 %1056
        %v1058 = vsub.f32 %v1057, %v521
        %vm1059 = vcmp.eq.s32.totalorder %v154, 13
        %v1060 = vsel %vm1059, 1, 0
        %vm1061 = vcmp.eq.s32.totalorder %v1060, 1
        %v1062 = vsel %vm1061, %v1050, %v1024
        %v1063 = vsel %vm1061, %v1054, %v1025
        %v1064 = vsel %vm1061, %v1058, %v1026
        %v1065 = vsel %vm1046, 3e+38, %v1027
        %1066 = vmin.xlane.f32.xlu0 %v1065
        %v1067 = vpop.xlane.xlu0 %1066
        %vm1068 = vcmp.le.f32.partialorder %v1065, %v1067
        %v1069 = vsel %vm1068, %v154, 128
        %v1070 = vand.u32 %v1069, 65535
        %v1071 = vshra.s32 %v1069, 16
        %v1072 = vcvt.s32.f32 %v1070
        %v1073 = vcvt.s32.f32 %v1071
        %1074 = vmin.xlane.f32.xlu0 %v1073
        %v1075 = vpop.xlane.xlu0 %1074
        %vm1076 = vcmp.eq.f32.partialorder %v1073, %v1075
        %v1077 = vsel %vm1076, %v1072, inf
        %1078 = vmin.xlane.f32.xlu0 %v1077
        %v1079 = vpop.xlane.xlu0 %1078
        %v1080 = vcvt.f32.s32 %v1079
        %v1081 = vcvt.f32.s32 %v1075
        %v1082 = vshll.u32 %v1081, 16
        %v1083 = vadd.s32 %v1082, %v1080
        %vm1084 = vcmp.eq.s32.totalorder %v154, %v1083
        %v1085 = vsel %vm1084, %v525, 0.0
        %1086 = vadd.xlane.f32.xlu0 %v1085
        %v1087 = vpop.xlane.xlu0 %1086
        %v1088 = vsub.f32 %v1087, %v507
        %v1089 = vsel %vm1084, %v530, 0.0
        %1090 = vadd.xlane.f32.xlu0 %v1089
        %v1091 = vpop.xlane.xlu0 %1090
        %v1092 = vsub.f32 %v1091, %v514
        %v1093 = vsel %vm1084, %v535, 0.0
        %1094 = vadd.xlane.f32.xlu0 %v1093
        %v1095 = vpop.xlane.xlu0 %1094
        %v1096 = vsub.f32 %v1095, %v521
        %vm1097 = vcmp.eq.s32.totalorder %v154, 14
        %v1098 = vsel %vm1097, 1, 0
        %vm1099 = vcmp.eq.s32.totalorder %v1098, 1
        %v1100 = vsel %vm1099, %v1088, %v1062
        %v1101 = vsel %vm1099, %v1092, %v1063
        %v1102 = vsel %vm1099, %v1096, %v1064
        %v1103 = vsel %vm1084, 3e+38, %v1065
        %1104 = vmin.xlane.f32.xlu0 %v1103
        %v1105 = vpop.xlane.xlu0 %1104
        %vm1106 = vcmp.le.f32.partialorder %v1103, %v1105
        %v1107 = vsel %vm1106, %v154, 128
        %v1108 = vand.u32 %v1107, 65535
        %v1109 = vshra.s32 %v1107, 16
        %v1110 = vcvt.s32.f32 %v1108
        %v1111 = vcvt.s32.f32 %v1109
        %1112 = vmin.xlane.f32.xlu0 %v1111
        %v1113 = vpop.xlane.xlu0 %1112
        %vm1114 = vcmp.eq.f32.partialorder %v1111, %v1113
        %v1115 = vsel %vm1114, %v1110, inf
        %1116 = vmin.xlane.f32.xlu0 %v1115
        %v1117 = vpop.xlane.xlu0 %1116
        %v1118 = vcvt.f32.s32 %v1117
        %v1119 = vcvt.f32.s32 %v1113
        %v1120 = vshll.u32 %v1119, 16
        %v1121 = vadd.s32 %v1120, %v1118
        %vm1122 = vcmp.eq.s32.totalorder %v154, %v1121
        %v1123 = vsel %vm1122, %v525, 0.0
        %1124 = vadd.xlane.f32.xlu0 %v1123
        %v1125 = vpop.xlane.xlu0 %1124
        %v1126 = vsub.f32 %v1125, %v507
        %v1127 = vsel %vm1122, %v530, 0.0
        %1128 = vadd.xlane.f32.xlu0 %v1127
        %v1129 = vpop.xlane.xlu0 %1128
        %v1130 = vsub.f32 %v1129, %v514
        %v1131 = vsel %vm1122, %v535, 0.0
        %1132 = vadd.xlane.f32.xlu0 %v1131
        %v1133 = vpop.xlane.xlu0 %1132
        %v1134 = vsub.f32 %v1133, %v521
        %vm1135 = vcmp.eq.s32.totalorder %v154, 15
        %v1136 = vsel %vm1135, 1, 0
        %vm1137 = vcmp.eq.s32.totalorder %v1136, 1
        %v1138 = vsel %vm1137, %v1126, %v1100
        %v1139 = vsel %vm1137, %v1130, %v1101
        %v1140 = vsel %vm1137, %v1134, %v1102
        %vm1141 = vcmask 130048
        %1142 = vst.msk [vmem:[%s141] sm:$0xff] %vm1141, %v1138
        %s1143 = scalar_lea.vmem %s141, 8 [#allocation2]
        %1144 = vst.msk [vmem:[%s1143] sm:$0xff] %vm1141, %v1139
        %s1145 = scalar_lea.vmem %s141, 16 [#allocation2]
        %1146 = vst.msk [vmem:[%s1145] sm:$0xff] %vm1141, %v1140
        %p1147 = scmp.lt.s32.totalorder %s17, 1
        %s1148 = scalar_select %p1147, %s17, 1
        %s1149 = smul.addr %s1148, 4
        %s1150 = scalar_lea.vmem %s1, %s1149
        %s1151 = sand.u32 %s77, 1
        %s1152 = scalar_lea.sflag [#allocation3], %s1151
        %s1153 = sand.u32 %s77, 1
        %s1154 = smul.addr %s1153, 24
        %s1155 = scalar_lea.vmem [#allocation2], %s1154
        // Predicated region
        $region25: #{group_forward.1} parent=23 // pred_check
          %p1156 = pneg %p61
        $region26: #{group_forward.1} parent=23 // pred_check_branch
          %1158 = sbr.rel (%p1156) target = $region28
        $region27: #{group_forward.1} parent=23 // pred_region
          _
        $region28: #{group_forward.1} parent=23 // pred_fallthru
          _
        // Predicated region
        $region29: #{group_forward.1} parent=23 // pred_check
          %p1159 = pneg %p87
        $region30: #{group_forward.1} parent=23 // pred_check_branch
          %1161 = sbr.rel (%p1159) target = $region32
        $region31: #{group_forward.1} parent=23 // pred_region
          %s1163 = ssub.s32 384, 384
          %1164 = vsyncadd %s1152, %s1163
          %s1165 = smul.addr %s17, 3
          %s1166 = smul.addr %s1165, 128
          %s1167 = scalar_lea.hbm %s2, %s1166
          %s1168 = sshll.u32 %s1155, 4
          %s1169 = int_to_ptr.vmem [resolvable:$true] %s1168
          %1174 = dma.vmem_to_hbm [thread:$0]  %s1169, 384, %s1167, %s1152, 128, 128, 8
        $region32: #{group_forward.1} parent=23 // pred_fallthru
          _
      $region24: #{group_forward.1} parent=5 // pred_fallthru
        _
      %p1175 = scmp.le.s32.totalorder 2, %s12
      // Predicated region
      $region33: #{group_forward.1} parent=5 // pred_check
        %p1176 = pneg %p1175
      $region34: #{group_forward.1} parent=5 // pred_check_branch
        %1178 = sbr.rel (%p1176) target = $region36
      $region35: #{group_forward.1} parent=5 // pred_region
        %s1179 = ssub.s32 %s12, 2
        // Predicated region
        $region37: #{group_forward.1} parent=35 // pred_check
          %p1180 = pneg %p67
        $region38: #{group_forward.1} parent=35 // pred_check_branch
          %1182 = sbr.rel (%p1180) target = $region40
        $region39: #{group_forward.1} parent=35 // pred_region
          %p1183 = scmp.lt.s32.totalorder %s18, 1
          %s1184 = scalar_select %p1183, %s18, 1
          %s1185 = smul.addr %s1184, 4
          %s1186 = scalar_lea.vmem %s1, %s1185
        $region40: #{group_forward.1} parent=35 // pred_fallthru
          _
        // Predicated region
        $region41: #{group_forward.1} parent=35 // pred_check
          %p1187 = pneg %p93
        $region42: #{group_forward.1} parent=35 // pred_check_branch
          %1189 = sbr.rel (%p1187) target = $region44
        $region43: #{group_forward.1} parent=35 // pred_region
          %s1190 = sand.u32 %s78, 1
          %s1191 = scalar_lea.sflag [#allocation3], %s1190
          %s1192 = sand.u32 %s78, 1
          %s1193 = smul.addr %s1192, 24
          %s1194 = scalar_lea.vmem [#allocation2], %s1193
          %1195 = dma.done %s1191, 384
        $region44: #{group_forward.1} parent=35 // pred_fallthru
          _
      $region36: #{group_forward.1} parent=5 // pred_fallthru
        _
    $region6: #{group_forward.1} parent=1 // loop_footer
      %s16 = sadd.s32 1, %s12
    $region7: #{group_forward.1} parent=1 // loop_footer_branch
      %11 = sbr.rel target = $region3
    $region8: #{group_forward.1} parent=1 // loop_exit
      _
    %1196 = vsyncpa [#allocation3], 1
    %s1197 = scalar_lea.sflag [#allocation3], 1
    %1198 = vsyncpa %s1197, 1

</llo_original>
